<compile_context>
chip_gen: v7x
topology: tpu7x:2x2x1
jax: 0.10.0
libtpu: 0.0.40
codegen_flags: <defaults>
</compile_context>

<pallas_src>
import functools

import jax
import jax.numpy as jnp
from jax import lax
from jax.experimental import pallas as pl
from jax.experimental.pallas import tpu as pltpu

# fuzzy operator ids
_OP_MIN, _OP_MAX, _OP_MEAN = 0, 1, 2

_LANE = 128     # feature (last-dim) padding
_SUBLANE = 8    # batch padding / batch tile
_TINY = 1e-30   # clamp for log(x): keeps 0**0 == 1 and 0**e ~ 0 (e > 0)


def _round_up(n, m):
    return ((n + m - 1) // m) * m


def _pick_fout_chunk(tb, fin_pad, fout_pad, vreg_budget_elems=32 * 1024):
    """Largest chunk of the Fout axis that keeps the (tb, chunk, fin_pad)
    intermediate within ~32 vregs and divides the padded Fout."""
    for cand in (128, 64, 32, 16, 8):
        if fout_pad % cand == 0 and tb * cand * fin_pad <= vreg_budget_elems:
            return cand
    return 8


def _make_fused_kernel(layer_cfgs):
    """layer_cfgs: tuple of (fin, fin_pad, fout_pad, tfout, op_id, relu)."""

    def kernel(x_ref, *refs):
        e_refs = refs[:-1]
        o_ref = refs[-1]

        a = x_ref[...]                                   # (TB, fin_pad[0]) f32
        tb = a.shape[0]

        for (fin, fin_pad, fout_pad, tfout, op_id, relu), e_ref in zip(
                layer_cfgs, e_refs):
            # Hoist the log out of the broadcasted power: x**e = exp(e*log x).
            lx = jnp.log(jnp.maximum(a, _TINY))          # (TB, fin_pad)
            lx3 = lx[:, None, :]                         # (TB, 1, fin_pad)

            # Mask for padded feature columns (hoisted out of the chunk loop).
            col_ok = (
                lax.broadcasted_iota(jnp.int32, (tb, tfout, fin_pad), 2) < fin)

            chunks = []
            for c0 in range(0, fout_pad, tfout):
                e_c = e_ref[c0:c0 + tfout, :]            # (tfout, fin_pad)
                t = e_c[None, :, :] * lx3                # (TB, tfout, fin_pad)
                if op_id == _OP_MIN:
                    # min commutes with exp -> exp only on the reduced result.
                    t = jnp.where(col_ok, t, jnp.inf)
                    r = jnp.exp(jnp.min(t, axis=-1))
                elif op_id == _OP_MAX:
                    t = jnp.where(col_ok, t, -jnp.inf)
                    r = jnp.exp(jnp.max(t, axis=-1))
                else:  # _OP_MEAN: per-element exp is unavoidable
                    p = jnp.where(col_ok, jnp.exp(t), 0.0)
                    r = jnp.sum(p, axis=-1) * (1.0 / float(fin))
                chunks.append(r)                         # (TB, tfout)

            a = chunks[0] if len(chunks) == 1 else jnp.concatenate(chunks, -1)
            if relu:
                a = jnp.maximum(a, 0.0)

        o_ref[...] = a.astype(o_ref.dtype)

    return kernel


def daae_forward(x, exponents, op_ids):
    """Fused forward pass: one pallas_call for the whole layer stack."""
    n_layers = len(exponents)
    assert len(op_ids) == n_layers
    B, fin0 = x.shape

    TB = _SUBLANE
    B_pad = _round_up(B, TB)

    # Per-layer static config (padded sizes, chunking, op, activation).
    layer_cfgs = []
    e_padded = []
    for i, e in enumerate(exponents):
        fout, fin = e.shape
        fin_pad = _round_up(fin, _LANE)
        fout_pad = _round_up(fout, _LANE)
        tfout = _pick_fout_chunk(TB, fin_pad, fout_pad)
        relu = i < n_layers - 1                  # ReLU on all but last layer
        layer_cfgs.append((fin, fin_pad, fout_pad, tfout, op_ids[i], relu))
        e_p = jnp.zeros((fout_pad, fin_pad), jnp.float32).at[:fout, :fin].set(
            e.astype(jnp.float32))
        e_padded.append(e_p)

    fin0_pad = layer_cfgs[0][1]
    flast_pad = layer_cfgs[-1][2]
    fout_last = exponents[-1].shape[0]

    x_p = jnp.zeros((B_pad, fin0_pad), jnp.float32).at[:B, :fin0].set(
        x.astype(jnp.float32))

    kernel = _make_fused_kernel(tuple(layer_cfgs))

    in_specs = [pl.BlockSpec((TB, fin0_pad), lambda b: (b, 0))]
    for (_, fin_pad, fout_pad, _, _, _) in layer_cfgs:
        in_specs.append(
            pl.BlockSpec((fout_pad, fin_pad), lambda b: (0, 0)))

    out = pl.pallas_call(
        kernel,
        out_shape=jax.ShapeDtypeStruct((B_pad, flast_pad), jnp.float32),
        grid=(B_pad // TB,),
        in_specs=in_specs,
        out_specs=pl.BlockSpec((TB, flast_pad), lambda b: (b, 0)),
        compiler_params=pltpu.CompilerParams(
            dimension_semantics=("parallel",)),
    )(x_p, *e_padded)

    return out[:B, :fout_last]


class DeepAggregateAutoEncoderPallas:
    """JAX/Pallas port of DeepAggregateAutoEncoder (forward only)."""

    def __init__(self, in_features, hidden_sizes, fuzzy_op_ids, key):
        layer_sizes = [in_features, *hidden_sizes, in_features]
        assert len(fuzzy_op_ids) == len(layer_sizes) - 1
        self.op_ids = list(fuzzy_op_ids)
        self.exponents = []
        for i in range(len(layer_sizes) - 1):
            key, sub = jax.random.split(key)
            # nn.init.uniform_ -> U[0, 1)
            e = jax.random.uniform(
                sub, (layer_sizes[i + 1], layer_sizes[i]), dtype=jnp.float32)
            self.exponents.append(e)

    def __call__(self, x):
        return daae_forward(x, self.exponents, self.op_ids)


def _reference_forward(x, exponents, op_ids):
    """Pure-JAX reference reproducing the PyTorch loops."""
    ops = {_OP_MIN: lambda p: jnp.min(p, axis=-1),
           _OP_MAX: lambda p: jnp.max(p, axis=-1),
           _OP_MEAN: lambda p: jnp.mean(p, axis=-1)}
    n_layers = len(exponents)
    for i, (e, op_id) in enumerate(zip(exponents, op_ids)):
        p = jnp.power(x[:, None, :], e[None, :, :])
        x = ops[op_id](p)
        if i < n_layers - 1:
            x = jnp.maximum(x, 0.0)
    return x


if __name__ == "__main__":
    key = jax.random.PRNGKey(0)
    k_in, k_params = jax.random.split(key)

    batch = 2
    in_features = 16
    hidden_sizes = [32, 8]
    # fuzzy operators per layer: min, max, mean (deterministic choice)
    fuzzy_op_ids = [_OP_MIN, _OP_MAX, _OP_MEAN]

    # positive inputs (fuzzy membership degrees); the log-domain rewrite
    # assumes x > 0 (x == 0 is clamped to a tiny epsilon, matching 0**0 == 1).
    x = jax.random.uniform(k_in, (batch, in_features), dtype=jnp.float32,
                           minval=0.05, maxval=1.0)

    model = DeepAggregateAutoEncoderPallas(
        in_features, hidden_sizes, fuzzy_op_ids, k_params)

    out = model(x)
    out = jax.block_until_ready(out)

    ref = _reference_forward(x, model.exponents, fuzzy_op_ids)
    assert out.shape == (batch, in_features)
    assert jnp.allclose(out, ref, rtol=1e-5, atol=1e-5), "mismatch vs reference"

    print("KERNEL_OK")
</pallas_src>

<mosaic_0001>
module attributes {stable_mosaic.version = 11 : i64} {
  func.func @kernel(%arg0: i32, %arg1: memref<8x128xf32, #tpu.memory_space<vmem>>, %arg2: memref<128x128xf32, #tpu.memory_space<vmem>>, %arg3: memref<128x128xf32, #tpu.memory_space<vmem>>, %arg4: memref<128x128xf32, #tpu.memory_space<vmem>>, %arg5: memref<8x128xf32, #tpu.memory_space<vmem>>) attributes {dimension_semantics = [#tpu.dimension_semantics<parallel>], iteration_bounds = array<i64: 1>, scalar_prefetch = 0 : i64, scratch_operands = 0 : i64, tpu.core_type = #tpu.core_type<tc>, window_params = [{transform_indices = @transform_0, window_bounds = array<i64: 8, 128>}, {pipeline_mode = #tpu.pipeline_mode<synchronous>, transform_indices = @transform_1, window_bounds = array<i64: 128, 128>}, {pipeline_mode = #tpu.pipeline_mode<synchronous>, transform_indices = @transform_2, window_bounds = array<i64: 128, 128>}, {pipeline_mode = #tpu.pipeline_mode<synchronous>, transform_indices = @transform_3, window_bounds = array<i64: 128, 128>}, {transform_indices = @transform_4, window_bounds = array<i64: 8, 128>}]} {
    %c0 = arith.constant 0 : index
    %c0_0 = arith.constant 0 : index
    %0 = vector.load %arg1[%c0, %c0_0] : memref<8x128xf32, #tpu.memory_space<vmem>>, vector<8x128xf32>
    %cst = arith.constant 1.000000e-30 : f32
    %1 = vector.broadcast %cst : f32 to vector<8x128xf32>
    %2 = arith.maximumf %0, %1 : vector<8x128xf32>
    %3 = math.log %2 : vector<8x128xf32>
    %4 = vector.shape_cast %3 : vector<8x128xf32> to vector<8x1x128xf32>
    %5 = tpu.iota {dimensions = array<i32: 2>} : vector<8x32x128xi32>
    %c16_i32 = arith.constant 16 : i32
    %6 = vector.broadcast %c16_i32 : i32 to vector<8x32x128xi32>
    %7 = arith.cmpi slt, %5, %6 : vector<8x32x128xi32>
    %c0_1 = arith.constant 0 : index
    %c0_2 = arith.constant 0 : index
    %8 = vector.load %arg2[%c0_1, %c0_2] : memref<128x128xf32, #tpu.memory_space<vmem>>, vector<32x128xf32>
    %9 = vector.shape_cast %8 : vector<32x128xf32> to vector<1x32x128xf32>
    %10 = vector.broadcast %9 : vector<1x32x128xf32> to vector<8x32x128xf32>
    %11 = vector.broadcast %4 : vector<8x1x128xf32> to vector<8x32x128xf32>
    %12 = arith.mulf %10, %11 : vector<8x32x128xf32>
    %cst_3 = arith.constant 0x7F800000 : f32
    %13 = vector.broadcast %cst_3 : f32 to vector<8x32x128xf32>
    %14 = arith.select %7, %12, %13 : vector<8x32x128xi1>, vector<8x32x128xf32>
    %cst_4 = arith.constant dense<0x7F800000> : vector<8x32xf32>
    %15 = vector.multi_reduction <minimumf>, %14, %cst_4 [2] : vector<8x32x128xf32> to vector<8x32xf32>
    %16 = math.exp %15 : vector<8x32xf32>
    %c32 = arith.constant 32 : index
    %c0_5 = arith.constant 0 : index
    %17 = vector.load %arg2[%c32, %c0_5] : memref<128x128xf32, #tpu.memory_space<vmem>>, vector<32x128xf32>
    %18 = vector.shape_cast %17 : vector<32x128xf32> to vector<1x32x128xf32>
    %19 = vector.broadcast %18 : vector<1x32x128xf32> to vector<8x32x128xf32>
    %20 = vector.broadcast %4 : vector<8x1x128xf32> to vector<8x32x128xf32>
    %21 = arith.mulf %19, %20 : vector<8x32x128xf32>
    %cst_6 = arith.constant 0x7F800000 : f32
    %22 = vector.broadcast %cst_6 : f32 to vector<8x32x128xf32>
    %23 = arith.select %7, %21, %22 : vector<8x32x128xi1>, vector<8x32x128xf32>
    %cst_7 = arith.constant dense<0x7F800000> : vector<8x32xf32>
    %24 = vector.multi_reduction <minimumf>, %23, %cst_7 [2] : vector<8x32x128xf32> to vector<8x32xf32>
    %25 = math.exp %24 : vector<8x32xf32>
    %c64 = arith.constant 64 : index
    %c0_8 = arith.constant 0 : index
    %26 = vector.load %arg2[%c64, %c0_8] : memref<128x128xf32, #tpu.memory_space<vmem>>, vector<32x128xf32>
    %27 = vector.shape_cast %26 : vector<32x128xf32> to vector<1x32x128xf32>
    %28 = vector.broadcast %27 : vector<1x32x128xf32> to vector<8x32x128xf32>
    %29 = vector.broadcast %4 : vector<8x1x128xf32> to vector<8x32x128xf32>
    %30 = arith.mulf %28, %29 : vector<8x32x128xf32>
    %cst_9 = arith.constant 0x7F800000 : f32
    %31 = vector.broadcast %cst_9 : f32 to vector<8x32x128xf32>
    %32 = arith.select %7, %30, %31 : vector<8x32x128xi1>, vector<8x32x128xf32>
    %cst_10 = arith.constant dense<0x7F800000> : vector<8x32xf32>
    %33 = vector.multi_reduction <minimumf>, %32, %cst_10 [2] : vector<8x32x128xf32> to vector<8x32xf32>
    %34 = math.exp %33 : vector<8x32xf32>
    %c96 = arith.constant 96 : index
    %c0_11 = arith.constant 0 : index
    %35 = vector.load %arg2[%c96, %c0_11] : memref<128x128xf32, #tpu.memory_space<vmem>>, vector<32x128xf32>
    %36 = vector.shape_cast %35 : vector<32x128xf32> to vector<1x32x128xf32>
    %37 = vector.broadcast %36 : vector<1x32x128xf32> to vector<8x32x128xf32>
    %38 = vector.broadcast %4 : vector<8x1x128xf32> to vector<8x32x128xf32>
    %39 = arith.mulf %37, %38 : vector<8x32x128xf32>
    %cst_12 = arith.constant 0x7F800000 : f32
    %40 = vector.broadcast %cst_12 : f32 to vector<8x32x128xf32>
    %41 = arith.select %7, %39, %40 : vector<8x32x128xi1>, vector<8x32x128xf32>
    %cst_13 = arith.constant dense<0x7F800000> : vector<8x32xf32>
    %42 = vector.multi_reduction <minimumf>, %41, %cst_13 [2] : vector<8x32x128xf32> to vector<8x32xf32>
    %43 = math.exp %42 : vector<8x32xf32>
    %44 = tpu.concatenate %16, %25, %34, %43 in 1 : vector<8x32xf32>, vector<8x32xf32>, vector<8x32xf32>, vector<8x32xf32> -> vector<8x128xf32>
    %cst_14 = arith.constant 0.000000e+00 : f32
    %45 = vector.broadcast %cst_14 : f32 to vector<8x128xf32>
    %46 = arith.maximumf %44, %45 : vector<8x128xf32>
    %cst_15 = arith.constant 1.000000e-30 : f32
    %47 = vector.broadcast %cst_15 : f32 to vector<8x128xf32>
    %48 = arith.maximumf %46, %47 : vector<8x128xf32>
    %49 = math.log %48 : vector<8x128xf32>
    %50 = vector.shape_cast %49 : vector<8x128xf32> to vector<8x1x128xf32>
    %51 = tpu.iota {dimensions = array<i32: 2>} : vector<8x32x128xi32>
    %c32_i32 = arith.constant 32 : i32
    %52 = vector.broadcast %c32_i32 : i32 to vector<8x32x128xi32>
    %53 = arith.cmpi slt, %51, %52 : vector<8x32x128xi32>
    %c0_16 = arith.constant 0 : index
    %c0_17 = arith.constant 0 : index
    %54 = vector.load %arg3[%c0_16, %c0_17] : memref<128x128xf32, #tpu.memory_space<vmem>>, vector<32x128xf32>
    %55 = vector.shape_cast %54 : vector<32x128xf32> to vector<1x32x128xf32>
    %56 = vector.broadcast %55 : vector<1x32x128xf32> to vector<8x32x128xf32>
    %57 = vector.broadcast %50 : vector<8x1x128xf32> to vector<8x32x128xf32>
    %58 = arith.mulf %56, %57 : vector<8x32x128xf32>
    %cst_18 = arith.constant 0xFF800000 : f32
    %59 = vector.broadcast %cst_18 : f32 to vector<8x32x128xf32>
    %60 = arith.select %53, %58, %59 : vector<8x32x128xi1>, vector<8x32x128xf32>
    %cst_19 = arith.constant dense<0xFF800000> : vector<8x32xf32>
    %61 = vector.multi_reduction <maximumf>, %60, %cst_19 [2] : vector<8x32x128xf32> to vector<8x32xf32>
    %62 = math.exp %61 : vector<8x32xf32>
    %c32_20 = arith.constant 32 : index
    %c0_21 = arith.constant 0 : index
    %63 = vector.load %arg3[%c32_20, %c0_21] : memref<128x128xf32, #tpu.memory_space<vmem>>, vector<32x128xf32>
    %64 = vector.shape_cast %63 : vector<32x128xf32> to vector<1x32x128xf32>
    %65 = vector.broadcast %64 : vector<1x32x128xf32> to vector<8x32x128xf32>
    %66 = vector.broadcast %50 : vector<8x1x128xf32> to vector<8x32x128xf32>
    %67 = arith.mulf %65, %66 : vector<8x32x128xf32>
    %cst_22 = arith.constant 0xFF800000 : f32
    %68 = vector.broadcast %cst_22 : f32 to vector<8x32x128xf32>
    %69 = arith.select %53, %67, %68 : vector<8x32x128xi1>, vector<8x32x128xf32>
    %cst_23 = arith.constant dense<0xFF800000> : vector<8x32xf32>
    %70 = vector.multi_reduction <maximumf>, %69, %cst_23 [2] : vector<8x32x128xf32> to vector<8x32xf32>
    %71 = math.exp %70 : vector<8x32xf32>
    %c64_24 = arith.constant 64 : index
    %c0_25 = arith.constant 0 : index
    %72 = vector.load %arg3[%c64_24, %c0_25] : memref<128x128xf32, #tpu.memory_space<vmem>>, vector<32x128xf32>
    %73 = vector.shape_cast %72 : vector<32x128xf32> to vector<1x32x128xf32>
    %74 = vector.broadcast %73 : vector<1x32x128xf32> to vector<8x32x128xf32>
    %75 = vector.broadcast %50 : vector<8x1x128xf32> to vector<8x32x128xf32>
    %76 = arith.mulf %74, %75 : vector<8x32x128xf32>
    %cst_26 = arith.constant 0xFF800000 : f32
    %77 = vector.broadcast %cst_26 : f32 to vector<8x32x128xf32>
    %78 = arith.select %53, %76, %77 : vector<8x32x128xi1>, vector<8x32x128xf32>
    %cst_27 = arith.constant dense<0xFF800000> : vector<8x32xf32>
    %79 = vector.multi_reduction <maximumf>, %78, %cst_27 [2] : vector<8x32x128xf32> to vector<8x32xf32>
    %80 = math.exp %79 : vector<8x32xf32>
    %c96_28 = arith.constant 96 : index
    %c0_29 = arith.constant 0 : index
    %81 = vector.load %arg3[%c96_28, %c0_29] : memref<128x128xf32, #tpu.memory_space<vmem>>, vector<32x128xf32>
    %82 = vector.shape_cast %81 : vector<32x128xf32> to vector<1x32x128xf32>
    %83 = vector.broadcast %82 : vector<1x32x128xf32> to vector<8x32x128xf32>
    %84 = vector.broadcast %50 : vector<8x1x128xf32> to vector<8x32x128xf32>
    %85 = arith.mulf %83, %84 : vector<8x32x128xf32>
    %cst_30 = arith.constant 0xFF800000 : f32
    %86 = vector.broadcast %cst_30 : f32 to vector<8x32x128xf32>
    %87 = arith.select %53, %85, %86 : vector<8x32x128xi1>, vector<8x32x128xf32>
    %cst_31 = arith.constant dense<0xFF800000> : vector<8x32xf32>
    %88 = vector.multi_reduction <maximumf>, %87, %cst_31 [2] : vector<8x32x128xf32> to vector<8x32xf32>
    %89 = math.exp %88 : vector<8x32xf32>
    %90 = tpu.concatenate %62, %71, %80, %89 in 1 : vector<8x32xf32>, vector<8x32xf32>, vector<8x32xf32>, vector<8x32xf32> -> vector<8x128xf32>
    %cst_32 = arith.constant 0.000000e+00 : f32
    %91 = vector.broadcast %cst_32 : f32 to vector<8x128xf32>
    %92 = arith.maximumf %90, %91 : vector<8x128xf32>
    %cst_33 = arith.constant 1.000000e-30 : f32
    %93 = vector.broadcast %cst_33 : f32 to vector<8x128xf32>
    %94 = arith.maximumf %92, %93 : vector<8x128xf32>
    %95 = math.log %94 : vector<8x128xf32>
    %96 = vector.shape_cast %95 : vector<8x128xf32> to vector<8x1x128xf32>
    %97 = tpu.iota {dimensions = array<i32: 2>} : vector<8x32x128xi32>
    %c8_i32 = arith.constant 8 : i32
    %98 = vector.broadcast %c8_i32 : i32 to vector<8x32x128xi32>
    %99 = arith.cmpi slt, %97, %98 : vector<8x32x128xi32>
    %c0_34 = arith.constant 0 : index
    %c0_35 = arith.constant 0 : index
    %100 = vector.load %arg4[%c0_34, %c0_35] : memref<128x128xf32, #tpu.memory_space<vmem>>, vector<32x128xf32>
    %101 = vector.shape_cast %100 : vector<32x128xf32> to vector<1x32x128xf32>
    %102 = vector.broadcast %101 : vector<1x32x128xf32> to vector<8x32x128xf32>
    %103 = vector.broadcast %96 : vector<8x1x128xf32> to vector<8x32x128xf32>
    %104 = arith.mulf %102, %103 : vector<8x32x128xf32>
    %105 = math.exp %104 : vector<8x32x128xf32>
    %cst_36 = arith.constant 0.000000e+00 : f32
    %106 = vector.broadcast %cst_36 : f32 to vector<8x32x128xf32>
    %107 = arith.select %99, %105, %106 : vector<8x32x128xi1>, vector<8x32x128xf32>
    %cst_37 = arith.constant dense<0.000000e+00> : vector<8x32xf32>
    %108 = vector.multi_reduction <add>, %107, %cst_37 [2] : vector<8x32x128xf32> to vector<8x32xf32>
    %cst_38 = arith.constant 1.250000e-01 : f32
    %109 = vector.broadcast %cst_38 : f32 to vector<8x32xf32>
    %110 = arith.mulf %108, %109 : vector<8x32xf32>
    %c32_39 = arith.constant 32 : index
    %c0_40 = arith.constant 0 : index
    %111 = vector.load %arg4[%c32_39, %c0_40] : memref<128x128xf32, #tpu.memory_space<vmem>>, vector<32x128xf32>
    %112 = vector.shape_cast %111 : vector<32x128xf32> to vector<1x32x128xf32>
    %113 = vector.broadcast %112 : vector<1x32x128xf32> to vector<8x32x128xf32>
    %114 = vector.broadcast %96 : vector<8x1x128xf32> to vector<8x32x128xf32>
    %115 = arith.mulf %113, %114 : vector<8x32x128xf32>
    %116 = math.exp %115 : vector<8x32x128xf32>
    %cst_41 = arith.constant 0.000000e+00 : f32
    %117 = vector.broadcast %cst_41 : f32 to vector<8x32x128xf32>
    %118 = arith.select %99, %116, %117 : vector<8x32x128xi1>, vector<8x32x128xf32>
    %cst_42 = arith.constant dense<0.000000e+00> : vector<8x32xf32>
    %119 = vector.multi_reduction <add>, %118, %cst_42 [2] : vector<8x32x128xf32> to vector<8x32xf32>
    %cst_43 = arith.constant 1.250000e-01 : f32
    %120 = vector.broadcast %cst_43 : f32 to vector<8x32xf32>
    %121 = arith.mulf %119, %120 : vector<8x32xf32>
    %c64_44 = arith.constant 64 : index
    %c0_45 = arith.constant 0 : index
    %122 = vector.load %arg4[%c64_44, %c0_45] : memref<128x128xf32, #tpu.memory_space<vmem>>, vector<32x128xf32>
    %123 = vector.shape_cast %122 : vector<32x128xf32> to vector<1x32x128xf32>
    %124 = vector.broadcast %123 : vector<1x32x128xf32> to vector<8x32x128xf32>
    %125 = vector.broadcast %96 : vector<8x1x128xf32> to vector<8x32x128xf32>
    %126 = arith.mulf %124, %125 : vector<8x32x128xf32>
    %127 = math.exp %126 : vector<8x32x128xf32>
    %cst_46 = arith.constant 0.000000e+00 : f32
    %128 = vector.broadcast %cst_46 : f32 to vector<8x32x128xf32>
    %129 = arith.select %99, %127, %128 : vector<8x32x128xi1>, vector<8x32x128xf32>
    %cst_47 = arith.constant dense<0.000000e+00> : vector<8x32xf32>
    %130 = vector.multi_reduction <add>, %129, %cst_47 [2] : vector<8x32x128xf32> to vector<8x32xf32>
    %cst_48 = arith.constant 1.250000e-01 : f32
    %131 = vector.broadcast %cst_48 : f32 to vector<8x32xf32>
    %132 = arith.mulf %130, %131 : vector<8x32xf32>
    %c96_49 = arith.constant 96 : index
    %c0_50 = arith.constant 0 : index
    %133 = vector.load %arg4[%c96_49, %c0_50] : memref<128x128xf32, #tpu.memory_space<vmem>>, vector<32x128xf32>
    %134 = vector.shape_cast %133 : vector<32x128xf32> to vector<1x32x128xf32>
    %135 = vector.broadcast %134 : vector<1x32x128xf32> to vector<8x32x128xf32>
    %136 = vector.broadcast %96 : vector<8x1x128xf32> to vector<8x32x128xf32>
    %137 = arith.mulf %135, %136 : vector<8x32x128xf32>
    %138 = math.exp %137 : vector<8x32x128xf32>
    %cst_51 = arith.constant 0.000000e+00 : f32
    %139 = vector.broadcast %cst_51 : f32 to vector<8x32x128xf32>
    %140 = arith.select %99, %138, %139 : vector<8x32x128xi1>, vector<8x32x128xf32>
    %cst_52 = arith.constant dense<0.000000e+00> : vector<8x32xf32>
    %141 = vector.multi_reduction <add>, %140, %cst_52 [2] : vector<8x32x128xf32> to vector<8x32xf32>
    %cst_53 = arith.constant 1.250000e-01 : f32
    %142 = vector.broadcast %cst_53 : f32 to vector<8x32xf32>
    %143 = arith.mulf %141, %142 : vector<8x32xf32>
    %144 = tpu.concatenate %110, %121, %132, %143 in 1 : vector<8x32xf32>, vector<8x32xf32>, vector<8x32xf32>, vector<8x32xf32> -> vector<8x128xf32>
    %c0_54 = arith.constant 0 : index
    %c0_55 = arith.constant 0 : index
    %145 = vector.load %arg5[%c0_54, %c0_55] : memref<8x128xf32, #tpu.memory_space<vmem>>, vector<8x128xf32>
    tpu.vector_store %arg5[%c0_54, %c0_55], %144 {strides = array<i32>} : memref<8x128xf32, #tpu.memory_space<vmem>>, vector<8x128xf32>,
    return
  }
  func.func @transform_0(%arg0: i32) -> (i32, i32) {
    %c0_i32 = arith.constant 0 : i32
    %c0_i32_0 = arith.constant 0 : i32
    return %arg0, %c0_i32 : i32, i32
  }
  func.func @transform_1(%arg0: i32) -> (i32, i32) {
    %c0_i32 = arith.constant 0 : i32
    %c0_i32_0 = arith.constant 0 : i32
    %c0_i32_1 = arith.constant 0 : i32
    return %c0_i32, %c0_i32_0 : i32, i32
  }
  func.func @transform_2(%arg0: i32) -> (i32, i32) {
    %c0_i32 = arith.constant 0 : i32
    %c0_i32_0 = arith.constant 0 : i32
    %c0_i32_1 = arith.constant 0 : i32
    return %c0_i32, %c0_i32_0 : i32, i32
  }
  func.func @transform_3(%arg0: i32) -> (i32, i32) {
    %c0_i32 = arith.constant 0 : i32
    %c0_i32_0 = arith.constant 0 : i32
    %c0_i32_1 = arith.constant 0 : i32
    return %c0_i32, %c0_i32_0 : i32, i32
  }
  func.func @transform_4(%arg0: i32) -> (i32, i32) {
    %c0_i32 = arith.constant 0 : i32
    %c0_i32_0 = arith.constant 0 : i32
    return %arg0, %c0_i32 : i32, i32
  }
}

</mosaic_0001>

<llo_original>
// kernel: tpu_custom_call.1
$region0: #{tpu_custom_call.1}
  #allocation0 [shape = 'u32[]', space=smem, size = 0x4, offset = 0x4, fixed_abs, tag = 'smem constant byte address 0x4 - core index']
  #allocation1 [shape = 'u32[144,128]{1,0:T(1,128)}', space=vmem, size = 0x12000, scoped, tag = 'internal scratch']
  %s0 = inlined_call_operand.hbm [shape: f32[8,128], index: 0, kind: input, shape index: {}]
  %s1 = inlined_call_operand.hbm [shape: f32[128,128], index: 1, kind: input, shape index: {}]
  %s2 = inlined_call_operand.hbm [shape: f32[128,128], index: 2, kind: input, shape index: {}]
  %s3 = inlined_call_operand.hbm [shape: f32[128,128], index: 3, kind: input, shape index: {}]
  %s4 = inlined_call_operand.hbm [shape: f32[8,128], index: 4, kind: output, shape index: {}]
  %s5 = sld [smem:[#allocation0]]
  $region42: #{tpu_custom_call.1} parent=0
    _
  %s7 = ssub.s32 1, %s5
  %s8 = scalar_select 0, %s7, %s5
  $region1: #{tpu_custom_call.1} parent=0
    #allocation2 [shape = 'u8[4096]{0}', space=vmem, size = 0x1000, scoped, tag = 'input window, operand 0, single buffered']
    #allocation3 [shape = 's32[1]{0}', space=sflag, size = 0x4, scoped, tag = 'scoped memory for tpu_custom_call.1']
    #allocation4 [shape = 's32[1]{0}', space=sflag, size = 0x4, scoped, tag = 'scoped memory for tpu_custom_call.1']
    #allocation5 [shape = 'u8[65536]{0}', space=vmem, size = 0x10000, scoped, tag = 'input window, operand 1, single buffered']
    #allocation6 [shape = 's32[1]{0}', space=sflag, size = 0x4, scoped, tag = 'scoped memory for tpu_custom_call.1']
    #allocation7 [shape = 'u8[65536]{0}', space=vmem, size = 0x10000, scoped, tag = 'input window, operand 2, single buffered']
    #allocation8 [shape = 'u8[65536]{0}', space=vmem, size = 0x10000, scoped, tag = 'input window, operand 3, single buffered']
    #allocation9 [shape = 's32[1]{0}', space=sflag, size = 0x4, scoped, tag = 'scoped memory for tpu_custom_call.1']
    #allocation10 [shape = 'u8[4096]{0}', space=vmem, size = 0x1000, scoped, tag = 'output window, operand 0, single buffered']
    %9 = vsyncpa [#allocation3], 0
    %10 = vsyncpa [#allocation6], 0
    %11 = vsyncpa [#allocation9], 0
    %12 = vsyncpa [#allocation4], 0
    // Predicated region
    $region2: #{tpu_custom_call.1} parent=1 // pred_check
      _
    $region3: #{tpu_custom_call.1} parent=1 // pred_check_branch
      %14 = sbr.rel (0) target = $region5
    $region4: #{tpu_custom_call.1} parent=1 // pred_region
      %s16 = ssub.s32 128, 128
      %17 = vsyncadd [#allocation3], %s16
      %s19 = sshll.u32 [#allocation2], 4
      %s20 = int_to_ptr.vmem [resolvable:$true] %s19
      %22 = dma.hbm_to_vmem [thread:$0]  %s0, 128, %s20, [#allocation3]
    $region5: #{tpu_custom_call.1} parent=1 // pred_fallthru
      _
    // Predicated region
    $region6: #{tpu_custom_call.1} parent=1 // pred_check
      _
    $region7: #{tpu_custom_call.1} parent=1 // pred_check_branch
      %24 = sbr.rel (0) target = $region9
    $region8: #{tpu_custom_call.1} parent=1 // pred_region
      %s26 = ssub.s32 2048, 2048
      %27 = vsyncadd [#allocation6], %s26
      %s28 = sshll.u32 [#allocation5], 4
      %s29 = int_to_ptr.vmem [resolvable:$true] %s28
      %34 = dma.hbm_to_vmem [thread:$0]  %s1, 2048, %s29, [#allocation6], 128, 128, 8
    $region9: #{tpu_custom_call.1} parent=1 // pred_fallthru
      _
    // Predicated region
    $region10: #{tpu_custom_call.1} parent=1 // pred_check
      _
    $region11: #{tpu_custom_call.1} parent=1 // pred_check_branch
      %36 = sbr.rel (0) target = $region13
    $region12: #{tpu_custom_call.1} parent=1 // pred_region
      %s38 = ssub.s32 2048, 2048
      %39 = vsyncadd [#allocation6], %s38
      %s40 = sshll.u32 [#allocation7], 4
      %s41 = int_to_ptr.vmem [resolvable:$true] %s40
      %46 = dma.hbm_to_vmem [thread:$0]  %s2, 2048, %s41, [#allocation6], 128, 128, 8
    $region13: #{tpu_custom_call.1} parent=1 // pred_fallthru
      _
    // Predicated region
    $region14: #{tpu_custom_call.1} parent=1 // pred_check
      _
    $region15: #{tpu_custom_call.1} parent=1 // pred_check_branch
      %48 = sbr.rel (0) target = $region17
    $region16: #{tpu_custom_call.1} parent=1 // pred_region
      %s50 = ssub.s32 2048, 2048
      %51 = vsyncadd [#allocation9], %s50
      %s52 = sshll.u32 [#allocation8], 4
      %s53 = int_to_ptr.vmem [resolvable:$true] %s52
      %58 = dma.hbm_to_vmem [thread:$0]  %s3, 2048, %s53, [#allocation9], 128, 128, 8
    $region17: #{tpu_custom_call.1} parent=1 // pred_fallthru
      _
    // Predicated region
    $region18: #{tpu_custom_call.1} parent=1 // pred_check
      _
    $region19: #{tpu_custom_call.1} parent=1 // pred_check_branch
      %60 = sbr.rel (0) target = $region21
    $region20: #{tpu_custom_call.1} parent=1 // pred_region
      %61 = dma.done [#allocation3], 128
    $region21: #{tpu_custom_call.1} parent=1 // pred_fallthru
      _
    // Predicated region
    $region22: #{tpu_custom_call.1} parent=1 // pred_check
      _
    $region23: #{tpu_custom_call.1} parent=1 // pred_check_branch
      %63 = sbr.rel (0) target = $region25
    $region24: #{tpu_custom_call.1} parent=1 // pred_region
      %64 = dma.done [#allocation6], 2048
    $region25: #{tpu_custom_call.1} parent=1 // pred_fallthru
      _
    // Predicated region
    $region26: #{tpu_custom_call.1} parent=1 // pred_check
      _
    $region27: #{tpu_custom_call.1} parent=1 // pred_check_branch
      %66 = sbr.rel (0) target = $region29
    $region28: #{tpu_custom_call.1} parent=1 // pred_region
      %67 = dma.done [#allocation6], 2048
    $region29: #{tpu_custom_call.1} parent=1 // pred_fallthru
      _
    // Predicated region
    $region30: #{tpu_custom_call.1} parent=1 // pred_check
      _
    $region31: #{tpu_custom_call.1} parent=1 // pred_check_branch
      %69 = sbr.rel (0) target = $region33
    $region32: #{tpu_custom_call.1} parent=1 // pred_region
      %70 = dma.done [#allocation9], 2048
    $region33: #{tpu_custom_call.1} parent=1 // pred_fallthru
      _
    %v71 = vld [vmem:[#allocation2] sm:$0xff]
    %v72 = vmax.f32 %v71, 1e-30
    %v73 = vlog2.pop %v72
    %v74 = vmul.f32 %v73, 0.6931472
    %v76 = vcombine.high %v74, %v74
    %v78 = vunpack.c.l.s4 1966171168
    %v79 = vunpack.c.0.s8 %v78
    %v80 = vlaneseq
    %v81 = vshrl.u32 %v80, 7
    %v82 = vsub.s32 %v79, %v81
    %v83 = vrot.slane %v74, %v82
    %v85 = vunpack.c.l.s4 1966171168
    %v86 = vunpack.c.0.s8 %v85
    %v87 = vlaneseq
    %v88 = vshrl.u32 %v87, 7
    %v89 = vsub.s32 %v86, %v88
    %v90 = vrot.slane %v76, %v89
    %v91 = vcombine.high %v83, %v83
    %v92 = vcombine.high %v90, %v90
    %v94 = vunpack.c.l.s4 1966171168
    %v95 = vunpack.c.0.s8 %v94
    %v96 = vlaneseq
    %v97 = vshrl.u32 %v96, 7
    %v98 = vsub.s32 %v95, %v97
    %v99 = vrot.slane %v83, %v98
    %v101 = vunpack.c.l.s4 1966171168
    %v102 = vunpack.c.0.s8 %v101
    %v103 = vlaneseq
    %v104 = vshrl.u32 %v103, 7
    %v105 = vsub.s32 %v102, %v104
    %v106 = vrot.slane %v90, %v105
    %v108 = vunpack.c.l.s4 1966171168
    %v109 = vunpack.c.0.s8 %v108
    %v110 = vlaneseq
    %v111 = vshrl.u32 %v110, 7
    %v112 = vsub.s32 %v109, %v111
    %v113 = vrot.slane %v91, %v112
    %v115 = vunpack.c.l.s4 1966171168
    %v116 = vunpack.c.0.s8 %v115
    %v117 = vlaneseq
    %v118 = vshrl.u32 %v117, 7
    %v119 = vsub.s32 %v116, %v118
    %v120 = vrot.slane %v92, %v119
    %v121 = vcombine.high %v99, %v99
    %v122 = vcombine.high %v106, %v106
    %v123 = vcombine.high %v113, %v113
    %v124 = vcombine.high %v120, %v120
    %v125 = vlaneseq
    %v126 = vand.u32 %v125, 127
    %vm127 = vcmp.lt.s32.totalorder %v126, 16
    %v128 = vld [vmem:[#allocation5] sm:$0xff]
    %v129 = vld [vmem:[#allocation5 + $0x8] sm:$0xff]
    %v130 = vld [vmem:[#allocation5 + $0x10] sm:$0xff]
    %v131 = vld [vmem:[#allocation5 + $0x18] sm:$0xff]
    %v132 = vlaneseq
    %v133 = vshrl.u32 %v132, 7
    %v134 = vsub.s32 0, %v133
    %v135 = vrot.slane %v99, %v134
    %v136 = vlaneseq
    %v137 = vshrl.u32 %v136, 7
    %v138 = vsub.s32 0, %v137
    %v139 = vrot.slane %v113, %v138
    %v140 = vlaneseq
    %v141 = vshrl.u32 %v140, 7
    %v142 = vsub.s32 0, %v141
    %v143 = vrot.slane %v121, %v142
    %v144 = vlaneseq
    %v145 = vshrl.u32 %v144, 7
    %v146 = vsub.s32 0, %v145
    %v147 = vrot.slane %v123, %v146
    %v148 = vlaneseq
    %v149 = vshrl.u32 %v148, 7
    %v150 = vsub.s32 0, %v149
    %v151 = vrot.slane %v106, %v150
    %v152 = vlaneseq
    %v153 = vshrl.u32 %v152, 7
    %v154 = vsub.s32 0, %v153
    %v155 = vrot.slane %v120, %v154
    %v156 = vlaneseq
    %v157 = vshrl.u32 %v156, 7
    %v158 = vsub.s32 0, %v157
    %v159 = vrot.slane %v122, %v158
    %v160 = vlaneseq
    %v161 = vshrl.u32 %v160, 7
    %v162 = vsub.s32 0, %v161
    %v163 = vrot.slane %v124, %v162
    %v172 = vmul.f32 %v128, %v135
    %v173 = vmul.f32 %v129, %v135
    %v174 = vmul.f32 %v130, %v135
    %v175 = vmul.f32 %v131, %v135
    %v176 = vmul.f32 %v128, %v139
    %v177 = vmul.f32 %v129, %v139
    %v178 = vmul.f32 %v130, %v139
    %v179 = vmul.f32 %v131, %v139
    %v180 = vmul.f32 %v128, %v143
    %v181 = vmul.f32 %v129, %v143
    %v182 = vmul.f32 %v130, %v143
    %v183 = vmul.f32 %v131, %v143
    %v184 = vmul.f32 %v128, %v147
    %v185 = vmul.f32 %v129, %v147
    %v186 = vmul.f32 %v130, %v147
    %v187 = vmul.f32 %v131, %v147
    %v188 = vmul.f32 %v128, %v151
    %v189 = vmul.f32 %v129, %v151
    %v190 = vmul.f32 %v130, %v151
    %v191 = vmul.f32 %v131, %v151
    %v192 = vmul.f32 %v128, %v155
    %v193 = vmul.f32 %v129, %v155
    %v194 = vmul.f32 %v130, %v155
    %v195 = vmul.f32 %v131, %v155
    %v196 = vmul.f32 %v128, %v159
    %v197 = vmul.f32 %v129, %v159
    %v198 = vmul.f32 %v130, %v159
    %v199 = vmul.f32 %v131, %v159
    %v200 = vmul.f32 %v128, %v163
    %v201 = vmul.f32 %v129, %v163
    %v202 = vmul.f32 %v130, %v163
    %v203 = vmul.f32 %v131, %v163
    %v204 = vsel %vm127, %v172, inf
    %v205 = vsel %vm127, %v173, inf
    %v206 = vsel %vm127, %v174, inf
    %v207 = vsel %vm127, %v175, inf
    %v208 = vsel %vm127, %v176, inf
    %v209 = vsel %vm127, %v177, inf
    %v210 = vsel %vm127, %v178, inf
    %v211 = vsel %vm127, %v179, inf
    %v212 = vsel %vm127, %v180, inf
    %v213 = vsel %vm127, %v181, inf
    %v214 = vsel %vm127, %v182, inf
    %v215 = vsel %vm127, %v183, inf
    %v216 = vsel %vm127, %v184, inf
    %v217 = vsel %vm127, %v185, inf
    %v218 = vsel %vm127, %v186, inf
    %v219 = vsel %vm127, %v187, inf
    %v220 = vsel %vm127, %v188, inf
    %v221 = vsel %vm127, %v189, inf
    %v222 = vsel %vm127, %v190, inf
    %v223 = vsel %vm127, %v191, inf
    %v224 = vsel %vm127, %v192, inf
    %v225 = vsel %vm127, %v193, inf
    %v226 = vsel %vm127, %v194, inf
    %v227 = vsel %vm127, %v195, inf
    %v228 = vsel %vm127, %v196, inf
    %v229 = vsel %vm127, %v197, inf
    %v230 = vsel %vm127, %v198, inf
    %v231 = vsel %vm127, %v199, inf
    %v232 = vsel %vm127, %v200, inf
    %v233 = vsel %vm127, %v201, inf
    %v234 = vsel %vm127, %v202, inf
    %v235 = vsel %vm127, %v203, inf
    %236 = vmin.xlane.f32.xlu0 %v204
    %v237 = vpop.xlane.xlu0 %236
    %238 = vmin.xlane.f32.xlu0 %v205
    %v239 = vpop.xlane.xlu0 %238
    %240 = vmin.xlane.f32.xlu0 %v206
    %v241 = vpop.xlane.xlu0 %240
    %242 = vmin.xlane.f32.xlu0 %v207
    %v243 = vpop.xlane.xlu0 %242
    %244 = vmin.xlane.f32.xlu0 %v208
    %v245 = vpop.xlane.xlu0 %244
    %246 = vmin.xlane.f32.xlu0 %v209
    %v247 = vpop.xlane.xlu0 %246
    %248 = vmin.xlane.f32.xlu0 %v210
    %v249 = vpop.xlane.xlu0 %248
    %250 = vmin.xlane.f32.xlu0 %v211
    %v251 = vpop.xlane.xlu0 %250
    %252 = vmin.xlane.f32.xlu0 %v212
    %v253 = vpop.xlane.xlu0 %252
    %254 = vmin.xlane.f32.xlu0 %v213
    %v255 = vpop.xlane.xlu0 %254
    %256 = vmin.xlane.f32.xlu0 %v214
    %v257 = vpop.xlane.xlu0 %256
    %258 = vmin.xlane.f32.xlu0 %v215
    %v259 = vpop.xlane.xlu0 %258
    %260 = vmin.xlane.f32.xlu0 %v216
    %v261 = vpop.xlane.xlu0 %260
    %262 = vmin.xlane.f32.xlu0 %v217
    %v263 = vpop.xlane.xlu0 %262
    %264 = vmin.xlane.f32.xlu0 %v218
    %v265 = vpop.xlane.xlu0 %264
    %266 = vmin.xlane.f32.xlu0 %v219
    %v267 = vpop.xlane.xlu0 %266
    %268 = vmin.xlane.f32.xlu0 %v220
    %v269 = vpop.xlane.xlu0 %268
    %270 = vmin.xlane.f32.xlu0 %v221
    %v271 = vpop.xlane.xlu0 %270
    %272 = vmin.xlane.f32.xlu0 %v222
    %v273 = vpop.xlane.xlu0 %272
    %274 = vmin.xlane.f32.xlu0 %v223
    %v275 = vpop.xlane.xlu0 %274
    %276 = vmin.xlane.f32.xlu0 %v224
    %v277 = vpop.xlane.xlu0 %276
    %278 = vmin.xlane.f32.xlu0 %v225
    %v279 = vpop.xlane.xlu0 %278
    %280 = vmin.xlane.f32.xlu0 %v226
    %v281 = vpop.xlane.xlu0 %280
    %282 = vmin.xlane.f32.xlu0 %v227
    %v283 = vpop.xlane.xlu0 %282
    %284 = vmin.xlane.f32.xlu0 %v228
    %v285 = vpop.xlane.xlu0 %284
    %286 = vmin.xlane.f32.xlu0 %v229
    %v287 = vpop.xlane.xlu0 %286
    %288 = vmin.xlane.f32.xlu0 %v230
    %v289 = vpop.xlane.xlu0 %288
    %290 = vmin.xlane.f32.xlu0 %v231
    %v291 = vpop.xlane.xlu0 %290
    %292 = vmin.xlane.f32.xlu0 %v232
    %v293 = vpop.xlane.xlu0 %292
    %294 = vmin.xlane.f32.xlu0 %v233
    %v295 = vpop.xlane.xlu0 %294
    %296 = vmin.xlane.f32.xlu0 %v234
    %v297 = vpop.xlane.xlu0 %296
    %298 = vmin.xlane.f32.xlu0 %v235
    %v299 = vpop.xlane.xlu0 %298
    %v300 = vmul.f32 %v237, 1.442695
    %v301 = vpow.pop %v300
    %v302 = vmul.f32 %v239, 1.442695
    %v303 = vpow.pop %v302
    %v304 = vmul.f32 %v241, 1.442695
    %v305 = vpow.pop %v304
    %v306 = vmul.f32 %v243, 1.442695
    %v307 = vpow.pop %v306
    %v308 = vmul.f32 %v245, 1.442695
    %v309 = vpow.pop %v308
    %v310 = vmul.f32 %v247, 1.442695
    %v311 = vpow.pop %v310
    %v312 = vmul.f32 %v249, 1.442695
    %v313 = vpow.pop %v312
    %v314 = vmul.f32 %v251, 1.442695
    %v315 = vpow.pop %v314
    %v316 = vmul.f32 %v253, 1.442695
    %v317 = vpow.pop %v316
    %v318 = vmul.f32 %v255, 1.442695
    %v319 = vpow.pop %v318
    %v320 = vmul.f32 %v257, 1.442695
    %v321 = vpow.pop %v320
    %v322 = vmul.f32 %v259, 1.442695
    %v323 = vpow.pop %v322
    %v324 = vmul.f32 %v261, 1.442695
    %v325 = vpow.pop %v324
    %v326 = vmul.f32 %v263, 1.442695
    %v327 = vpow.pop %v326
    %v328 = vmul.f32 %v265, 1.442695
    %v329 = vpow.pop %v328
    %v330 = vmul.f32 %v267, 1.442695
    %v331 = vpow.pop %v330
    %v332 = vmul.f32 %v269, 1.442695
    %v333 = vpow.pop %v332
    %v334 = vmul.f32 %v271, 1.442695
    %v335 = vpow.pop %v334
    %v336 = vmul.f32 %v273, 1.442695
    %v337 = vpow.pop %v336
    %v338 = vmul.f32 %v275, 1.442695
    %v339 = vpow.pop %v338
    %v340 = vmul.f32 %v277, 1.442695
    %v341 = vpow.pop %v340
    %v342 = vmul.f32 %v279, 1.442695
    %v343 = vpow.pop %v342
    %v344 = vmul.f32 %v281, 1.442695
    %v345 = vpow.pop %v344
    %v346 = vmul.f32 %v283, 1.442695
    %v347 = vpow.pop %v346
    %v348 = vmul.f32 %v285, 1.442695
    %v349 = vpow.pop %v348
    %v350 = vmul.f32 %v287, 1.442695
    %v351 = vpow.pop %v350
    %v352 = vmul.f32 %v289, 1.442695
    %v353 = vpow.pop %v352
    %v354 = vmul.f32 %v291, 1.442695
    %v355 = vpow.pop %v354
    %v356 = vmul.f32 %v293, 1.442695
    %v357 = vpow.pop %v356
    %v358 = vmul.f32 %v295, 1.442695
    %v359 = vpow.pop %v358
    %v360 = vmul.f32 %v297, 1.442695
    %v361 = vpow.pop %v360
    %v362 = vmul.f32 %v299, 1.442695
    %v363 = vpow.pop %v362
    %v364 = vld [vmem:[#allocation5 + $0x20] sm:$0xff]
    %v365 = vld [vmem:[#allocation5 + $0x28] sm:$0xff]
    %v366 = vld [vmem:[#allocation5 + $0x30] sm:$0xff]
    %v367 = vld [vmem:[#allocation5 + $0x38] sm:$0xff]
    %v368 = vmul.f32 %v364, %v135
    %v369 = vmul.f32 %v365, %v135
    %v370 = vmul.f32 %v366, %v135
    %v371 = vmul.f32 %v367, %v135
    %v372 = vmul.f32 %v364, %v139
    %v373 = vmul.f32 %v365, %v139
    %v374 = vmul.f32 %v366, %v139
    %v375 = vmul.f32 %v367, %v139
    %v376 = vmul.f32 %v364, %v143
    %v377 = vmul.f32 %v365, %v143
    %v378 = vmul.f32 %v366, %v143
    %v379 = vmul.f32 %v367, %v143
    %v380 = vmul.f32 %v364, %v147
    %v381 = vmul.f32 %v365, %v147
    %v382 = vmul.f32 %v366, %v147
    %v383 = vmul.f32 %v367, %v147
    %v384 = vmul.f32 %v364, %v151
    %v385 = vmul.f32 %v365, %v151
    %v386 = vmul.f32 %v366, %v151
    %v387 = vmul.f32 %v367, %v151
    %v388 = vmul.f32 %v364, %v155
    %v389 = vmul.f32 %v365, %v155
    %v390 = vmul.f32 %v366, %v155
    %v391 = vmul.f32 %v367, %v155
    %v392 = vmul.f32 %v364, %v159
    %v393 = vmul.f32 %v365, %v159
    %v394 = vmul.f32 %v366, %v159
    %v395 = vmul.f32 %v367, %v159
    %v396 = vmul.f32 %v364, %v163
    %v397 = vmul.f32 %v365, %v163
    %v398 = vmul.f32 %v366, %v163
    %v399 = vmul.f32 %v367, %v163
    %v400 = vsel %vm127, %v368, inf
    %v401 = vsel %vm127, %v369, inf
    %v402 = vsel %vm127, %v370, inf
    %v403 = vsel %vm127, %v371, inf
    %v404 = vsel %vm127, %v372, inf
    %v405 = vsel %vm127, %v373, inf
    %v406 = vsel %vm127, %v374, inf
    %v407 = vsel %vm127, %v375, inf
    %v408 = vsel %vm127, %v376, inf
    %v409 = vsel %vm127, %v377, inf
    %v410 = vsel %vm127, %v378, inf
    %v411 = vsel %vm127, %v379, inf
    %v412 = vsel %vm127, %v380, inf
    %v413 = vsel %vm127, %v381, inf
    %v414 = vsel %vm127, %v382, inf
    %v415 = vsel %vm127, %v383, inf
    %v416 = vsel %vm127, %v384, inf
    %v417 = vsel %vm127, %v385, inf
    %v418 = vsel %vm127, %v386, inf
    %v419 = vsel %vm127, %v387, inf
    %v420 = vsel %vm127, %v388, inf
    %v421 = vsel %vm127, %v389, inf
    %v422 = vsel %vm127, %v390, inf
    %v423 = vsel %vm127, %v391, inf
    %v424 = vsel %vm127, %v392, inf
    %v425 = vsel %vm127, %v393, inf
    %v426 = vsel %vm127, %v394, inf
    %v427 = vsel %vm127, %v395, inf
    %v428 = vsel %vm127, %v396, inf
    %v429 = vsel %vm127, %v397, inf
    %v430 = vsel %vm127, %v398, inf
    %v431 = vsel %vm127, %v399, inf
    %432 = vmin.xlane.f32.xlu0 %v400
    %v433 = vpop.xlane.xlu0 %432
    %434 = vmin.xlane.f32.xlu0 %v401
    %v435 = vpop.xlane.xlu0 %434
    %436 = vmin.xlane.f32.xlu0 %v402
    %v437 = vpop.xlane.xlu0 %436
    %438 = vmin.xlane.f32.xlu0 %v403
    %v439 = vpop.xlane.xlu0 %438
    %440 = vmin.xlane.f32.xlu0 %v404
    %v441 = vpop.xlane.xlu0 %440
    %442 = vmin.xlane.f32.xlu0 %v405
    %v443 = vpop.xlane.xlu0 %442
    %444 = vmin.xlane.f32.xlu0 %v406
    %v445 = vpop.xlane.xlu0 %444
    %446 = vmin.xlane.f32.xlu0 %v407
    %v447 = vpop.xlane.xlu0 %446
    %448 = vmin.xlane.f32.xlu0 %v408
    %v449 = vpop.xlane.xlu0 %448
    %450 = vmin.xlane.f32.xlu0 %v409
    %v451 = vpop.xlane.xlu0 %450
    %452 = vmin.xlane.f32.xlu0 %v410
    %v453 = vpop.xlane.xlu0 %452
    %454 = vmin.xlane.f32.xlu0 %v411
    %v455 = vpop.xlane.xlu0 %454
    %456 = vmin.xlane.f32.xlu0 %v412
    %v457 = vpop.xlane.xlu0 %456
    %458 = vmin.xlane.f32.xlu0 %v413
    %v459 = vpop.xlane.xlu0 %458
    %460 = vmin.xlane.f32.xlu0 %v414
    %v461 = vpop.xlane.xlu0 %460
    %462 = vmin.xlane.f32.xlu0 %v415
    %v463 = vpop.xlane.xlu0 %462
    %464 = vmin.xlane.f32.xlu0 %v416
    %v465 = vpop.xlane.xlu0 %464
    %466 = vmin.xlane.f32.xlu0 %v417
    %v467 = vpop.xlane.xlu0 %466
    %468 = vmin.xlane.f32.xlu0 %v418
    %v469 = vpop.xlane.xlu0 %468
    %470 = vmin.xlane.f32.xlu0 %v419
    %v471 = vpop.xlane.xlu0 %470
    %472 = vmin.xlane.f32.xlu0 %v420
    %v473 = vpop.xlane.xlu0 %472
    %474 = vmin.xlane.f32.xlu0 %v421
    %v475 = vpop.xlane.xlu0 %474
    %476 = vmin.xlane.f32.xlu0 %v422
    %v477 = vpop.xlane.xlu0 %476
    %478 = vmin.xlane.f32.xlu0 %v423
    %v479 = vpop.xlane.xlu0 %478
    %480 = vmin.xlane.f32.xlu0 %v424
    %v481 = vpop.xlane.xlu0 %480
    %482 = vmin.xlane.f32.xlu0 %v425
    %v483 = vpop.xlane.xlu0 %482
    %484 = vmin.xlane.f32.xlu0 %v426
    %v485 = vpop.xlane.xlu0 %484
    %486 = vmin.xlane.f32.xlu0 %v427
    %v487 = vpop.xlane.xlu0 %486
    %488 = vmin.xlane.f32.xlu0 %v428
    %v489 = vpop.xlane.xlu0 %488
    %490 = vmin.xlane.f32.xlu0 %v429
    %v491 = vpop.xlane.xlu0 %490
    %492 = vmin.xlane.f32.xlu0 %v430
    %v493 = vpop.xlane.xlu0 %492
    %494 = vmin.xlane.f32.xlu0 %v431
    %v495 = vpop.xlane.xlu0 %494
    %v496 = vmul.f32 %v433, 1.442695
    %v497 = vpow.pop %v496
    %v498 = vmul.f32 %v435, 1.442695
    %v499 = vpow.pop %v498
    %v500 = vmul.f32 %v437, 1.442695
    %v501 = vpow.pop %v500
    %v502 = vmul.f32 %v439, 1.442695
    %v503 = vpow.pop %v502
    %v504 = vmul.f32 %v441, 1.442695
    %v505 = vpow.pop %v504
    %v506 = vmul.f32 %v443, 1.442695
    %v507 = vpow.pop %v506
    %v508 = vmul.f32 %v445, 1.442695
    %v509 = vpow.pop %v508
    %v510 = vmul.f32 %v447, 1.442695
    %v511 = vpow.pop %v510
    %v512 = vmul.f32 %v449, 1.442695
    %v513 = vpow.pop %v512
    %v514 = vmul.f32 %v451, 1.442695
    %v515 = vpow.pop %v514
    %v516 = vmul.f32 %v453, 1.442695
    %v517 = vpow.pop %v516
    %v518 = vmul.f32 %v455, 1.442695
    %v519 = vpow.pop %v518
    %v520 = vmul.f32 %v457, 1.442695
    %v521 = vpow.pop %v520
    %v522 = vmul.f32 %v459, 1.442695
    %v523 = vpow.pop %v522
    %v524 = vmul.f32 %v461, 1.442695
    %v525 = vpow.pop %v524
    %v526 = vmul.f32 %v463, 1.442695
    %v527 = vpow.pop %v526
    %v528 = vmul.f32 %v465, 1.442695
    %v529 = vpow.pop %v528
    %v530 = vmul.f32 %v467, 1.442695
    %v531 = vpow.pop %v530
    %v532 = vmul.f32 %v469, 1.442695
    %v533 = vpow.pop %v532
    %v534 = vmul.f32 %v471, 1.442695
    %v535 = vpow.pop %v534
    %v536 = vmul.f32 %v473, 1.442695
    %v537 = vpow.pop %v536
    %v538 = vmul.f32 %v475, 1.442695
    %v539 = vpow.pop %v538
    %v540 = vmul.f32 %v477, 1.442695
    %v541 = vpow.pop %v540
    %v542 = vmul.f32 %v479, 1.442695
    %v543 = vpow.pop %v542
    %v544 = vmul.f32 %v481, 1.442695
    %v545 = vpow.pop %v544
    %v546 = vmul.f32 %v483, 1.442695
    %v547 = vpow.pop %v546
    %v548 = vmul.f32 %v485, 1.442695
    %v549 = vpow.pop %v548
    %v550 = vmul.f32 %v487, 1.442695
    %v551 = vpow.pop %v550
    %v552 = vmul.f32 %v489, 1.442695
    %v553 = vpow.pop %v552
    %v554 = vmul.f32 %v491, 1.442695
    %v555 = vpow.pop %v554
    %v556 = vmul.f32 %v493, 1.442695
    %v557 = vpow.pop %v556
    %v558 = vmul.f32 %v495, 1.442695
    %v559 = vpow.pop %v558
    %v560 = vld [vmem:[#allocation5 + $0x40] sm:$0xff]
    %v561 = vld [vmem:[#allocation5 + $0x48] sm:$0xff]
    %v562 = vld [vmem:[#allocation5 + $0x50] sm:$0xff]
    %v563 = vld [vmem:[#allocation5 + $0x58] sm:$0xff]
    %v564 = vmul.f32 %v560, %v135
    %v565 = vmul.f32 %v561, %v135
    %v566 = vmul.f32 %v562, %v135
    %v567 = vmul.f32 %v563, %v135
    %v568 = vmul.f32 %v560, %v139
    %v569 = vmul.f32 %v561, %v139
    %v570 = vmul.f32 %v562, %v139
    %v571 = vmul.f32 %v563, %v139
    %v572 = vmul.f32 %v560, %v143
    %v573 = vmul.f32 %v561, %v143
    %v574 = vmul.f32 %v562, %v143
    %v575 = vmul.f32 %v563, %v143
    %v576 = vmul.f32 %v560, %v147
    %v577 = vmul.f32 %v561, %v147
    %v578 = vmul.f32 %v562, %v147
    %v579 = vmul.f32 %v563, %v147
    %v580 = vmul.f32 %v560, %v151
    %v581 = vmul.f32 %v561, %v151
    %v582 = vmul.f32 %v562, %v151
    %v583 = vmul.f32 %v563, %v151
    %v584 = vmul.f32 %v560, %v155
    %v585 = vmul.f32 %v561, %v155
    %v586 = vmul.f32 %v562, %v155
    %v587 = vmul.f32 %v563, %v155
    %v588 = vmul.f32 %v560, %v159
    %v589 = vmul.f32 %v561, %v159
    %v590 = vmul.f32 %v562, %v159
    %v591 = vmul.f32 %v563, %v159
    %v592 = vmul.f32 %v560, %v163
    %v593 = vmul.f32 %v561, %v163
    %v594 = vmul.f32 %v562, %v163
    %v595 = vmul.f32 %v563, %v163
    %v596 = vsel %vm127, %v564, inf
    %v597 = vsel %vm127, %v565, inf
    %v598 = vsel %vm127, %v566, inf
    %v599 = vsel %vm127, %v567, inf
    %v600 = vsel %vm127, %v568, inf
    %v601 = vsel %vm127, %v569, inf
    %v602 = vsel %vm127, %v570, inf
    %v603 = vsel %vm127, %v571, inf
    %v604 = vsel %vm127, %v572, inf
    %v605 = vsel %vm127, %v573, inf
    %v606 = vsel %vm127, %v574, inf
    %v607 = vsel %vm127, %v575, inf
    %v608 = vsel %vm127, %v576, inf
    %v609 = vsel %vm127, %v577, inf
    %v610 = vsel %vm127, %v578, inf
    %v611 = vsel %vm127, %v579, inf
    %v612 = vsel %vm127, %v580, inf
    %v613 = vsel %vm127, %v581, inf
    %v614 = vsel %vm127, %v582, inf
    %v615 = vsel %vm127, %v583, inf
    %v616 = vsel %vm127, %v584, inf
    %v617 = vsel %vm127, %v585, inf
    %v618 = vsel %vm127, %v586, inf
    %v619 = vsel %vm127, %v587, inf
    %v620 = vsel %vm127, %v588, inf
    %v621 = vsel %vm127, %v589, inf
    %v622 = vsel %vm127, %v590, inf
    %v623 = vsel %vm127, %v591, inf
    %v624 = vsel %vm127, %v592, inf
    %v625 = vsel %vm127, %v593, inf
    %v626 = vsel %vm127, %v594, inf
    %v627 = vsel %vm127, %v595, inf
    %628 = vmin.xlane.f32.xlu0 %v596
    %v629 = vpop.xlane.xlu0 %628
    %630 = vmin.xlane.f32.xlu0 %v597
    %v631 = vpop.xlane.xlu0 %630
    %632 = vmin.xlane.f32.xlu0 %v598
    %v633 = vpop.xlane.xlu0 %632
    %634 = vmin.xlane.f32.xlu0 %v599
    %v635 = vpop.xlane.xlu0 %634
    %636 = vmin.xlane.f32.xlu0 %v600
    %v637 = vpop.xlane.xlu0 %636
    %638 = vmin.xlane.f32.xlu0 %v601
    %v639 = vpop.xlane.xlu0 %638
    %640 = vmin.xlane.f32.xlu0 %v602
    %v641 = vpop.xlane.xlu0 %640
    %642 = vmin.xlane.f32.xlu0 %v603
    %v643 = vpop.xlane.xlu0 %642
    %644 = vmin.xlane.f32.xlu0 %v604
    %v645 = vpop.xlane.xlu0 %644
    %646 = vmin.xlane.f32.xlu0 %v605
    %v647 = vpop.xlane.xlu0 %646
    %648 = vmin.xlane.f32.xlu0 %v606
    %v649 = vpop.xlane.xlu0 %648
    %650 = vmin.xlane.f32.xlu0 %v607
    %v651 = vpop.xlane.xlu0 %650
    %652 = vmin.xlane.f32.xlu0 %v608
    %v653 = vpop.xlane.xlu0 %652
    %654 = vmin.xlane.f32.xlu0 %v609
    %v655 = vpop.xlane.xlu0 %654
    %656 = vmin.xlane.f32.xlu0 %v610
    %v657 = vpop.xlane.xlu0 %656
    %658 = vmin.xlane.f32.xlu0 %v611
    %v659 = vpop.xlane.xlu0 %658
    %660 = vmin.xlane.f32.xlu0 %v612
    %v661 = vpop.xlane.xlu0 %660
    %662 = vmin.xlane.f32.xlu0 %v613
    %v663 = vpop.xlane.xlu0 %662
    %664 = vmin.xlane.f32.xlu0 %v614
    %v665 = vpop.xlane.xlu0 %664
    %666 = vmin.xlane.f32.xlu0 %v615
    %v667 = vpop.xlane.xlu0 %666
    %668 = vmin.xlane.f32.xlu0 %v616
    %v669 = vpop.xlane.xlu0 %668
    %670 = vmin.xlane.f32.xlu0 %v617
    %v671 = vpop.xlane.xlu0 %670
    %672 = vmin.xlane.f32.xlu0 %v618
    %v673 = vpop.xlane.xlu0 %672
    %674 = vmin.xlane.f32.xlu0 %v619
    %v675 = vpop.xlane.xlu0 %674
    %676 = vmin.xlane.f32.xlu0 %v620
    %v677 = vpop.xlane.xlu0 %676
    %678 = vmin.xlane.f32.xlu0 %v621
    %v679 = vpop.xlane.xlu0 %678
    %680 = vmin.xlane.f32.xlu0 %v622
    %v681 = vpop.xlane.xlu0 %680
    %682 = vmin.xlane.f32.xlu0 %v623
    %v683 = vpop.xlane.xlu0 %682
    %684 = vmin.xlane.f32.xlu0 %v624
    %v685 = vpop.xlane.xlu0 %684
    %686 = vmin.xlane.f32.xlu0 %v625
    %v687 = vpop.xlane.xlu0 %686
    %688 = vmin.xlane.f32.xlu0 %v626
    %v689 = vpop.xlane.xlu0 %688
    %690 = vmin.xlane.f32.xlu0 %v627
    %v691 = vpop.xlane.xlu0 %690
    %v692 = vmul.f32 %v629, 1.442695
    %v693 = vpow.pop %v692
    %v694 = vmul.f32 %v631, 1.442695
    %v695 = vpow.pop %v694
    %v696 = vmul.f32 %v633, 1.442695
    %v697 = vpow.pop %v696
    %v698 = vmul.f32 %v635, 1.442695
    %v699 = vpow.pop %v698
    %v700 = vmul.f32 %v637, 1.442695
    %v701 = vpow.pop %v700
    %v702 = vmul.f32 %v639, 1.442695
    %v703 = vpow.pop %v702
    %v704 = vmul.f32 %v641, 1.442695
    %v705 = vpow.pop %v704
    %v706 = vmul.f32 %v643, 1.442695
    %v707 = vpow.pop %v706
    %v708 = vmul.f32 %v645, 1.442695
    %v709 = vpow.pop %v708
    %v710 = vmul.f32 %v647, 1.442695
    %v711 = vpow.pop %v710
    %v712 = vmul.f32 %v649, 1.442695
    %v713 = vpow.pop %v712
    %v714 = vmul.f32 %v651, 1.442695
    %v715 = vpow.pop %v714
    %v716 = vmul.f32 %v653, 1.442695
    %v717 = vpow.pop %v716
    %v718 = vmul.f32 %v655, 1.442695
    %v719 = vpow.pop %v718
    %v720 = vmul.f32 %v657, 1.442695
    %v721 = vpow.pop %v720
    %v722 = vmul.f32 %v659, 1.442695
    %v723 = vpow.pop %v722
    %v724 = vmul.f32 %v661, 1.442695
    %v725 = vpow.pop %v724
    %v726 = vmul.f32 %v663, 1.442695
    %v727 = vpow.pop %v726
    %v728 = vmul.f32 %v665, 1.442695
    %v729 = vpow.pop %v728
    %v730 = vmul.f32 %v667, 1.442695
    %v731 = vpow.pop %v730
    %v732 = vmul.f32 %v669, 1.442695
    %v733 = vpow.pop %v732
    %v734 = vmul.f32 %v671, 1.442695
    %v735 = vpow.pop %v734
    %v736 = vmul.f32 %v673, 1.442695
    %v737 = vpow.pop %v736
    %v738 = vmul.f32 %v675, 1.442695
    %v739 = vpow.pop %v738
    %v740 = vmul.f32 %v677, 1.442695
    %v741 = vpow.pop %v740
    %v742 = vmul.f32 %v679, 1.442695
    %v743 = vpow.pop %v742
    %v744 = vmul.f32 %v681, 1.442695
    %v745 = vpow.pop %v744
    %v746 = vmul.f32 %v683, 1.442695
    %v747 = vpow.pop %v746
    %v748 = vmul.f32 %v685, 1.442695
    %v749 = vpow.pop %v748
    %v750 = vmul.f32 %v687, 1.442695
    %v751 = vpow.pop %v750
    %v752 = vmul.f32 %v689, 1.442695
    %v753 = vpow.pop %v752
    %v754 = vmul.f32 %v691, 1.442695
    %v755 = vpow.pop %v754
    %v756 = vld [vmem:[#allocation5 + $0x60] sm:$0xff]
    %v757 = vld [vmem:[#allocation5 + $0x68] sm:$0xff]
    %v758 = vld [vmem:[#allocation5 + $0x70] sm:$0xff]
    %v759 = vld [vmem:[#allocation5 + $0x78] sm:$0xff]
    %v760 = vmul.f32 %v756, %v135
    %v761 = vmul.f32 %v757, %v135
    %v762 = vmul.f32 %v758, %v135
    %v763 = vmul.f32 %v759, %v135
    %v764 = vmul.f32 %v756, %v139
    %v765 = vmul.f32 %v757, %v139
    %v766 = vmul.f32 %v758, %v139
    %v767 = vmul.f32 %v759, %v139
    %v768 = vmul.f32 %v756, %v143
    %v769 = vmul.f32 %v757, %v143
    %v770 = vmul.f32 %v758, %v143
    %v771 = vmul.f32 %v759, %v143
    %v772 = vmul.f32 %v756, %v147
    %v773 = vmul.f32 %v757, %v147
    %v774 = vmul.f32 %v758, %v147
    %v775 = vmul.f32 %v759, %v147
    %v776 = vmul.f32 %v756, %v151
    %v777 = vmul.f32 %v757, %v151
    %v778 = vmul.f32 %v758, %v151
    %v779 = vmul.f32 %v759, %v151
    %v780 = vmul.f32 %v756, %v155
    %v781 = vmul.f32 %v757, %v155
    %v782 = vmul.f32 %v758, %v155
    %v783 = vmul.f32 %v759, %v155
    %v784 = vmul.f32 %v756, %v159
    %v785 = vmul.f32 %v757, %v159
    %v786 = vmul.f32 %v758, %v159
    %v787 = vmul.f32 %v759, %v159
    %v788 = vmul.f32 %v756, %v163
    %v789 = vmul.f32 %v757, %v163
    %v790 = vmul.f32 %v758, %v163
    %v791 = vmul.f32 %v759, %v163
    %v792 = vsel %vm127, %v760, inf
    %v793 = vsel %vm127, %v761, inf
    %v794 = vsel %vm127, %v762, inf
    %v795 = vsel %vm127, %v763, inf
    %v796 = vsel %vm127, %v764, inf
    %v797 = vsel %vm127, %v765, inf
    %v798 = vsel %vm127, %v766, inf
    %v799 = vsel %vm127, %v767, inf
    %v800 = vsel %vm127, %v768, inf
    %v801 = vsel %vm127, %v769, inf
    %v802 = vsel %vm127, %v770, inf
    %v803 = vsel %vm127, %v771, inf
    %v804 = vsel %vm127, %v772, inf
    %v805 = vsel %vm127, %v773, inf
    %v806 = vsel %vm127, %v774, inf
    %v807 = vsel %vm127, %v775, inf
    %v808 = vsel %vm127, %v776, inf
    %v809 = vsel %vm127, %v777, inf
    %v810 = vsel %vm127, %v778, inf
    %v811 = vsel %vm127, %v779, inf
    %v812 = vsel %vm127, %v780, inf
    %v813 = vsel %vm127, %v781, inf
    %v814 = vsel %vm127, %v782, inf
    %v815 = vsel %vm127, %v783, inf
    %v816 = vsel %vm127, %v784, inf
    %v817 = vsel %vm127, %v785, inf
    %v818 = vsel %vm127, %v786, inf
    %v819 = vsel %vm127, %v787, inf
    %v820 = vsel %vm127, %v788, inf
    %v821 = vsel %vm127, %v789, inf
    %v822 = vsel %vm127, %v790, inf
    %v823 = vsel %vm127, %v791, inf
    %824 = vmin.xlane.f32.xlu0 %v792
    %v825 = vpop.xlane.xlu0 %824
    %826 = vmin.xlane.f32.xlu0 %v793
    %v827 = vpop.xlane.xlu0 %826
    %828 = vmin.xlane.f32.xlu0 %v794
    %v829 = vpop.xlane.xlu0 %828
    %830 = vmin.xlane.f32.xlu0 %v795
    %v831 = vpop.xlane.xlu0 %830
    %832 = vmin.xlane.f32.xlu0 %v796
    %v833 = vpop.xlane.xlu0 %832
    %834 = vmin.xlane.f32.xlu0 %v797
    %v835 = vpop.xlane.xlu0 %834
    %836 = vmin.xlane.f32.xlu0 %v798
    %v837 = vpop.xlane.xlu0 %836
    %838 = vmin.xlane.f32.xlu0 %v799
    %v839 = vpop.xlane.xlu0 %838
    %840 = vmin.xlane.f32.xlu0 %v800
    %v841 = vpop.xlane.xlu0 %840
    %842 = vmin.xlane.f32.xlu0 %v801
    %v843 = vpop.xlane.xlu0 %842
    %844 = vmin.xlane.f32.xlu0 %v802
    %v845 = vpop.xlane.xlu0 %844
    %846 = vmin.xlane.f32.xlu0 %v803
    %v847 = vpop.xlane.xlu0 %846
    %848 = vmin.xlane.f32.xlu0 %v804
    %v849 = vpop.xlane.xlu0 %848
    %850 = vmin.xlane.f32.xlu0 %v805
    %v851 = vpop.xlane.xlu0 %850
    %852 = vmin.xlane.f32.xlu0 %v806
    %v853 = vpop.xlane.xlu0 %852
    %854 = vmin.xlane.f32.xlu0 %v807
    %v855 = vpop.xlane.xlu0 %854
    %856 = vmin.xlane.f32.xlu0 %v808
    %v857 = vpop.xlane.xlu0 %856
    %858 = vmin.xlane.f32.xlu0 %v809
    %v859 = vpop.xlane.xlu0 %858
    %860 = vmin.xlane.f32.xlu0 %v810
    %v861 = vpop.xlane.xlu0 %860
    %862 = vmin.xlane.f32.xlu0 %v811
    %v863 = vpop.xlane.xlu0 %862
    %864 = vmin.xlane.f32.xlu0 %v812
    %v865 = vpop.xlane.xlu0 %864
    %866 = vmin.xlane.f32.xlu0 %v813
    %v867 = vpop.xlane.xlu0 %866
    %868 = vmin.xlane.f32.xlu0 %v814
    %v869 = vpop.xlane.xlu0 %868
    %870 = vmin.xlane.f32.xlu0 %v815
    %v871 = vpop.xlane.xlu0 %870
    %872 = vmin.xlane.f32.xlu0 %v816
    %v873 = vpop.xlane.xlu0 %872
    %874 = vmin.xlane.f32.xlu0 %v817
    %v875 = vpop.xlane.xlu0 %874
    %876 = vmin.xlane.f32.xlu0 %v818
    %v877 = vpop.xlane.xlu0 %876
    %878 = vmin.xlane.f32.xlu0 %v819
    %v879 = vpop.xlane.xlu0 %878
    %880 = vmin.xlane.f32.xlu0 %v820
    %v881 = vpop.xlane.xlu0 %880
    %882 = vmin.xlane.f32.xlu0 %v821
    %v883 = vpop.xlane.xlu0 %882
    %884 = vmin.xlane.f32.xlu0 %v822
    %v885 = vpop.xlane.xlu0 %884
    %886 = vmin.xlane.f32.xlu0 %v823
    %v887 = vpop.xlane.xlu0 %886
    %v888 = vmul.f32 %v825, 1.442695
    %v889 = vpow.pop %v888
    %v890 = vmul.f32 %v827, 1.442695
    %v891 = vpow.pop %v890
    %v892 = vmul.f32 %v829, 1.442695
    %v893 = vpow.pop %v892
    %v894 = vmul.f32 %v831, 1.442695
    %v895 = vpow.pop %v894
    %v896 = vmul.f32 %v833, 1.442695
    %v897 = vpow.pop %v896
    %v898 = vmul.f32 %v835, 1.442695
    %v899 = vpow.pop %v898
    %v900 = vmul.f32 %v837, 1.442695
    %v901 = vpow.pop %v900
    %v902 = vmul.f32 %v839, 1.442695
    %v903 = vpow.pop %v902
    %v904 = vmul.f32 %v841, 1.442695
    %v905 = vpow.pop %v904
    %v906 = vmul.f32 %v843, 1.442695
    %v907 = vpow.pop %v906
    %v908 = vmul.f32 %v845, 1.442695
    %v909 = vpow.pop %v908
    %v910 = vmul.f32 %v847, 1.442695
    %v911 = vpow.pop %v910
    %v912 = vmul.f32 %v849, 1.442695
    %v913 = vpow.pop %v912
    %v914 = vmul.f32 %v851, 1.442695
    %v915 = vpow.pop %v914
    %v916 = vmul.f32 %v853, 1.442695
    %v917 = vpow.pop %v916
    %v918 = vmul.f32 %v855, 1.442695
    %v919 = vpow.pop %v918
    %v920 = vmul.f32 %v857, 1.442695
    %v921 = vpow.pop %v920
    %v922 = vmul.f32 %v859, 1.442695
    %v923 = vpow.pop %v922
    %v924 = vmul.f32 %v861, 1.442695
    %v925 = vpow.pop %v924
    %v926 = vmul.f32 %v863, 1.442695
    %v927 = vpow.pop %v926
    %v928 = vmul.f32 %v865, 1.442695
    %v929 = vpow.pop %v928
    %v930 = vmul.f32 %v867, 1.442695
    %v931 = vpow.pop %v930
    %v932 = vmul.f32 %v869, 1.442695
    %v933 = vpow.pop %v932
    %v934 = vmul.f32 %v871, 1.442695
    %v935 = vpow.pop %v934
    %v936 = vmul.f32 %v873, 1.442695
    %v937 = vpow.pop %v936
    %v938 = vmul.f32 %v875, 1.442695
    %v939 = vpow.pop %v938
    %v940 = vmul.f32 %v877, 1.442695
    %v941 = vpow.pop %v940
    %v942 = vmul.f32 %v879, 1.442695
    %v943 = vpow.pop %v942
    %v944 = vmul.f32 %v881, 1.442695
    %v945 = vpow.pop %v944
    %v946 = vmul.f32 %v883, 1.442695
    %v947 = vpow.pop %v946
    %v948 = vmul.f32 %v885, 1.442695
    %v949 = vpow.pop %v948
    %v950 = vmul.f32 %v887, 1.442695
    %v951 = vpow.pop %v950
    %v984 = vlaneseq
    %v985 = vshrl.u32 %v984, 7
    %v986 = vsub.s32 %v126, %v985
    %v987 = vrot.slane %v301, %v986
    %v988 = vadd.s32 %v126, 4294967288
    %v989 = vlaneseq
    %v990 = vshrl.u32 %v989, 7
    %v991 = vsub.s32 %v988, %v990
    %v992 = vrot.slane %v303, %v991
    %vm993 = vcmask 130112
    %v994 = vsel %vm993, %v992, %v987
    %v995 = vadd.s32 %v126, 4294967280
    %v996 = vlaneseq
    %v997 = vshrl.u32 %v996, 7
    %v998 = vsub.s32 %v995, %v997
    %v999 = vrot.slane %v305, %v998
    %vm1000 = vcmask 195712
    %v1001 = vsel %vm1000, %v999, %v994
    %v1002 = vadd.s32 %v126, 4294967272
    %v1003 = vlaneseq
    %v1004 = vshrl.u32 %v1003, 7
    %v1005 = vsub.s32 %v1002, %v1004
    %v1006 = vrot.slane %v307, %v1005
    %vm1007 = vcmask 261312
    %v1008 = vsel %vm1007, %v1006, %v1001
    %v1009 = vlaneseq
    %v1010 = vshrl.u32 %v1009, 7
    %v1011 = vsub.s32 %v126, %v1010
    %v1012 = vrot.slane %v309, %v1011
    %v1013 = vlaneseq
    %v1014 = vshrl.u32 %v1013, 7
    %v1015 = vsub.s32 %v988, %v1014
    %v1016 = vrot.slane %v311, %v1015
    %v1017 = vsel %vm993, %v1016, %v1012
    %v1018 = vlaneseq
    %v1019 = vshrl.u32 %v1018, 7
    %v1020 = vsub.s32 %v995, %v1019
    %v1021 = vrot.slane %v313, %v1020
    %v1022 = vsel %vm1000, %v1021, %v1017
    %v1023 = vlaneseq
    %v1024 = vshrl.u32 %v1023, 7
    %v1025 = vsub.s32 %v1002, %v1024
    %v1026 = vrot.slane %v315, %v1025
    %v1027 = vsel %vm1007, %v1026, %v1022
    %v1028 = vlaneseq
    %v1029 = vshrl.u32 %v1028, 7
    %v1030 = vsub.s32 %v126, %v1029
    %v1031 = vrot.slane %v317, %v1030
    %v1032 = vlaneseq
    %v1033 = vshrl.u32 %v1032, 7
    %v1034 = vsub.s32 %v988, %v1033
    %v1035 = vrot.slane %v319, %v1034
    %v1036 = vsel %vm993, %v1035, %v1031
    %v1037 = vlaneseq
    %v1038 = vshrl.u32 %v1037, 7
    %v1039 = vsub.s32 %v995, %v1038
    %v1040 = vrot.slane %v321, %v1039
    %v1041 = vsel %vm1000, %v1040, %v1036
    %v1042 = vlaneseq
    %v1043 = vshrl.u32 %v1042, 7
    %v1044 = vsub.s32 %v1002, %v1043
    %v1045 = vrot.slane %v323, %v1044
    %v1046 = vsel %vm1007, %v1045, %v1041
    %v1047 = vlaneseq
    %v1048 = vshrl.u32 %v1047, 7
    %v1049 = vsub.s32 %v126, %v1048
    %v1050 = vrot.slane %v325, %v1049
    %v1051 = vlaneseq
    %v1052 = vshrl.u32 %v1051, 7
    %v1053 = vsub.s32 %v988, %v1052
    %v1054 = vrot.slane %v327, %v1053
    %v1055 = vsel %vm993, %v1054, %v1050
    %v1056 = vlaneseq
    %v1057 = vshrl.u32 %v1056, 7
    %v1058 = vsub.s32 %v995, %v1057
    %v1059 = vrot.slane %v329, %v1058
    %v1060 = vsel %vm1000, %v1059, %v1055
    %v1061 = vlaneseq
    %v1062 = vshrl.u32 %v1061, 7
    %v1063 = vsub.s32 %v1002, %v1062
    %v1064 = vrot.slane %v331, %v1063
    %v1065 = vsel %vm1007, %v1064, %v1060
    %v1066 = vlaneseq
    %v1067 = vshrl.u32 %v1066, 7
    %v1068 = vsub.s32 %v126, %v1067
    %v1069 = vrot.slane %v333, %v1068
    %v1070 = vlaneseq
    %v1071 = vshrl.u32 %v1070, 7
    %v1072 = vsub.s32 %v988, %v1071
    %v1073 = vrot.slane %v335, %v1072
    %v1074 = vsel %vm993, %v1073, %v1069
    %v1075 = vlaneseq
    %v1076 = vshrl.u32 %v1075, 7
    %v1077 = vsub.s32 %v995, %v1076
    %v1078 = vrot.slane %v337, %v1077
    %v1079 = vsel %vm1000, %v1078, %v1074
    %v1080 = vlaneseq
    %v1081 = vshrl.u32 %v1080, 7
    %v1082 = vsub.s32 %v1002, %v1081
    %v1083 = vrot.slane %v339, %v1082
    %v1084 = vsel %vm1007, %v1083, %v1079
    %v1085 = vlaneseq
    %v1086 = vshrl.u32 %v1085, 7
    %v1087 = vsub.s32 %v126, %v1086
    %v1088 = vrot.slane %v341, %v1087
    %v1089 = vlaneseq
    %v1090 = vshrl.u32 %v1089, 7
    %v1091 = vsub.s32 %v988, %v1090
    %v1092 = vrot.slane %v343, %v1091
    %v1093 = vsel %vm993, %v1092, %v1088
    %v1094 = vlaneseq
    %v1095 = vshrl.u32 %v1094, 7
    %v1096 = vsub.s32 %v995, %v1095
    %v1097 = vrot.slane %v345, %v1096
    %v1098 = vsel %vm1000, %v1097, %v1093
    %v1099 = vlaneseq
    %v1100 = vshrl.u32 %v1099, 7
    %v1101 = vsub.s32 %v1002, %v1100
    %v1102 = vrot.slane %v347, %v1101
    %v1103 = vsel %vm1007, %v1102, %v1098
    %v1104 = vlaneseq
    %v1105 = vshrl.u32 %v1104, 7
    %v1106 = vsub.s32 %v126, %v1105
    %v1107 = vrot.slane %v349, %v1106
    %v1108 = vlaneseq
    %v1109 = vshrl.u32 %v1108, 7
    %v1110 = vsub.s32 %v988, %v1109
    %v1111 = vrot.slane %v351, %v1110
    %v1112 = vsel %vm993, %v1111, %v1107
    %v1113 = vlaneseq
    %v1114 = vshrl.u32 %v1113, 7
    %v1115 = vsub.s32 %v995, %v1114
    %v1116 = vrot.slane %v353, %v1115
    %v1117 = vsel %vm1000, %v1116, %v1112
    %v1118 = vlaneseq
    %v1119 = vshrl.u32 %v1118, 7
    %v1120 = vsub.s32 %v1002, %v1119
    %v1121 = vrot.slane %v355, %v1120
    %v1122 = vsel %vm1007, %v1121, %v1117
    %v1123 = vlaneseq
    %v1124 = vshrl.u32 %v1123, 7
    %v1125 = vsub.s32 %v126, %v1124
    %v1126 = vrot.slane %v357, %v1125
    %v1127 = vlaneseq
    %v1128 = vshrl.u32 %v1127, 7
    %v1129 = vsub.s32 %v988, %v1128
    %v1130 = vrot.slane %v359, %v1129
    %v1131 = vsel %vm993, %v1130, %v1126
    %v1132 = vlaneseq
    %v1133 = vshrl.u32 %v1132, 7
    %v1134 = vsub.s32 %v995, %v1133
    %v1135 = vrot.slane %v361, %v1134
    %v1136 = vsel %vm1000, %v1135, %v1131
    %v1137 = vlaneseq
    %v1138 = vshrl.u32 %v1137, 7
    %v1139 = vsub.s32 %v1002, %v1138
    %v1140 = vrot.slane %v363, %v1139
    %v1141 = vsel %vm1007, %v1140, %v1136
    %vm1142 = vcmask 1041409
    %v1143 = vsel %vm1142, %v1027, %v1008
    %vm1144 = vcmask 1042434
    %v1145 = vsel %vm1144, %v1046, %v1143
    %vm1146 = vcmask 1043459
    %v1147 = vsel %vm1146, %v1065, %v1145
    %vm1148 = vcmask 1044484
    %v1149 = vsel %vm1148, %v1084, %v1147
    %vm1150 = vcmask 1045509
    %v1151 = vsel %vm1150, %v1103, %v1149
    %vm1152 = vcmask 1046534
    %v1153 = vsel %vm1152, %v1122, %v1151
    %vm1154 = vcmask 1047559
    %v1155 = vsel %vm1154, %v1141, %v1153
    %v1189 = vadd.s32 %v126, 4294967264
    %v1190 = vlaneseq
    %v1191 = vshrl.u32 %v1190, 7
    %v1192 = vsub.s32 %v1189, %v1191
    %v1193 = vrot.slane %v497, %v1192
    %v1194 = vadd.s32 %v126, 4294967256
    %v1195 = vlaneseq
    %v1196 = vshrl.u32 %v1195, 7
    %v1197 = vsub.s32 %v1194, %v1196
    %v1198 = vrot.slane %v499, %v1197
    %vm1199 = vcmask 392512
    %v1200 = vsel %vm1199, %v1198, %v1193
    %v1201 = vadd.s32 %v126, 4294967248
    %v1202 = vlaneseq
    %v1203 = vshrl.u32 %v1202, 7
    %v1204 = vsub.s32 %v1201, %v1203
    %v1205 = vrot.slane %v501, %v1204
    %vm1206 = vcmask 458112
    %v1207 = vsel %vm1206, %v1205, %v1200
    %v1208 = vadd.s32 %v126, 4294967240
    %v1209 = vlaneseq
    %v1210 = vshrl.u32 %v1209, 7
    %v1211 = vsub.s32 %v1208, %v1210
    %v1212 = vrot.slane %v503, %v1211
    %vm1213 = vcmask 523712
    %v1214 = vsel %vm1213, %v1212, %v1207
    %v1215 = vlaneseq
    %v1216 = vshrl.u32 %v1215, 7
    %v1217 = vsub.s32 %v1189, %v1216
    %v1218 = vrot.slane %v505, %v1217
    %v1219 = vlaneseq
    %v1220 = vshrl.u32 %v1219, 7
    %v1221 = vsub.s32 %v1194, %v1220
    %v1222 = vrot.slane %v507, %v1221
    %v1223 = vsel %vm1199, %v1222, %v1218
    %v1224 = vlaneseq
    %v1225 = vshrl.u32 %v1224, 7
    %v1226 = vsub.s32 %v1201, %v1225
    %v1227 = vrot.slane %v509, %v1226
    %v1228 = vsel %vm1206, %v1227, %v1223
    %v1229 = vlaneseq
    %v1230 = vshrl.u32 %v1229, 7
    %v1231 = vsub.s32 %v1208, %v1230
    %v1232 = vrot.slane %v511, %v1231
    %v1233 = vsel %vm1213, %v1232, %v1228
    %v1234 = vlaneseq
    %v1235 = vshrl.u32 %v1234, 7
    %v1236 = vsub.s32 %v1189, %v1235
    %v1237 = vrot.slane %v513, %v1236
    %v1238 = vlaneseq
    %v1239 = vshrl.u32 %v1238, 7
    %v1240 = vsub.s32 %v1194, %v1239
    %v1241 = vrot.slane %v515, %v1240
    %v1242 = vsel %vm1199, %v1241, %v1237
    %v1243 = vlaneseq
    %v1244 = vshrl.u32 %v1243, 7
    %v1245 = vsub.s32 %v1201, %v1244
    %v1246 = vrot.slane %v517, %v1245
    %v1247 = vsel %vm1206, %v1246, %v1242
    %v1248 = vlaneseq
    %v1249 = vshrl.u32 %v1248, 7
    %v1250 = vsub.s32 %v1208, %v1249
    %v1251 = vrot.slane %v519, %v1250
    %v1252 = vsel %vm1213, %v1251, %v1247
    %v1253 = vlaneseq
    %v1254 = vshrl.u32 %v1253, 7
    %v1255 = vsub.s32 %v1189, %v1254
    %v1256 = vrot.slane %v521, %v1255
    %v1257 = vlaneseq
    %v1258 = vshrl.u32 %v1257, 7
    %v1259 = vsub.s32 %v1194, %v1258
    %v1260 = vrot.slane %v523, %v1259
    %v1261 = vsel %vm1199, %v1260, %v1256
    %v1262 = vlaneseq
    %v1263 = vshrl.u32 %v1262, 7
    %v1264 = vsub.s32 %v1201, %v1263
    %v1265 = vrot.slane %v525, %v1264
    %v1266 = vsel %vm1206, %v1265, %v1261
    %v1267 = vlaneseq
    %v1268 = vshrl.u32 %v1267, 7
    %v1269 = vsub.s32 %v1208, %v1268
    %v1270 = vrot.slane %v527, %v1269
    %v1271 = vsel %vm1213, %v1270, %v1266
    %v1272 = vlaneseq
    %v1273 = vshrl.u32 %v1272, 7
    %v1274 = vsub.s32 %v1189, %v1273
    %v1275 = vrot.slane %v529, %v1274
    %v1276 = vlaneseq
    %v1277 = vshrl.u32 %v1276, 7
    %v1278 = vsub.s32 %v1194, %v1277
    %v1279 = vrot.slane %v531, %v1278
    %v1280 = vsel %vm1199, %v1279, %v1275
    %v1281 = vlaneseq
    %v1282 = vshrl.u32 %v1281, 7
    %v1283 = vsub.s32 %v1201, %v1282
    %v1284 = vrot.slane %v533, %v1283
    %v1285 = vsel %vm1206, %v1284, %v1280
    %v1286 = vlaneseq
    %v1287 = vshrl.u32 %v1286, 7
    %v1288 = vsub.s32 %v1208, %v1287
    %v1289 = vrot.slane %v535, %v1288
    %v1290 = vsel %vm1213, %v1289, %v1285
    %v1291 = vlaneseq
    %v1292 = vshrl.u32 %v1291, 7
    %v1293 = vsub.s32 %v1189, %v1292
    %v1294 = vrot.slane %v537, %v1293
    %v1295 = vlaneseq
    %v1296 = vshrl.u32 %v1295, 7
    %v1297 = vsub.s32 %v1194, %v1296
    %v1298 = vrot.slane %v539, %v1297
    %v1299 = vsel %vm1199, %v1298, %v1294
    %v1300 = vlaneseq
    %v1301 = vshrl.u32 %v1300, 7
    %v1302 = vsub.s32 %v1201, %v1301
    %v1303 = vrot.slane %v541, %v1302
    %v1304 = vsel %vm1206, %v1303, %v1299
    %v1305 = vlaneseq
    %v1306 = vshrl.u32 %v1305, 7
    %v1307 = vsub.s32 %v1208, %v1306
    %v1308 = vrot.slane %v543, %v1307
    %v1309 = vsel %vm1213, %v1308, %v1304
    %v1310 = vlaneseq
    %v1311 = vshrl.u32 %v1310, 7
    %v1312 = vsub.s32 %v1189, %v1311
    %v1313 = vrot.slane %v545, %v1312
    %v1314 = vlaneseq
    %v1315 = vshrl.u32 %v1314, 7
    %v1316 = vsub.s32 %v1194, %v1315
    %v1317 = vrot.slane %v547, %v1316
    %v1318 = vsel %vm1199, %v1317, %v1313
    %v1319 = vlaneseq
    %v1320 = vshrl.u32 %v1319, 7
    %v1321 = vsub.s32 %v1201, %v1320
    %v1322 = vrot.slane %v549, %v1321
    %v1323 = vsel %vm1206, %v1322, %v1318
    %v1324 = vlaneseq
    %v1325 = vshrl.u32 %v1324, 7
    %v1326 = vsub.s32 %v1208, %v1325
    %v1327 = vrot.slane %v551, %v1326
    %v1328 = vsel %vm1213, %v1327, %v1323
    %v1329 = vlaneseq
    %v1330 = vshrl.u32 %v1329, 7
    %v1331 = vsub.s32 %v1189, %v1330
    %v1332 = vrot.slane %v553, %v1331
    %v1333 = vlaneseq
    %v1334 = vshrl.u32 %v1333, 7
    %v1335 = vsub.s32 %v1194, %v1334
    %v1336 = vrot.slane %v555, %v1335
    %v1337 = vsel %vm1199, %v1336, %v1332
    %v1338 = vlaneseq
    %v1339 = vshrl.u32 %v1338, 7
    %v1340 = vsub.s32 %v1201, %v1339
    %v1341 = vrot.slane %v557, %v1340
    %v1342 = vsel %vm1206, %v1341, %v1337
    %v1343 = vlaneseq
    %v1344 = vshrl.u32 %v1343, 7
    %v1345 = vsub.s32 %v1208, %v1344
    %v1346 = vrot.slane %v559, %v1345
    %v1347 = vsel %vm1213, %v1346, %v1342
    %v1348 = vsel %vm1142, %v1233, %v1214
    %v1349 = vsel %vm1144, %v1252, %v1348
    %v1350 = vsel %vm1146, %v1271, %v1349
    %v1351 = vsel %vm1148, %v1290, %v1350
    %v1352 = vsel %vm1150, %v1309, %v1351
    %v1353 = vsel %vm1152, %v1328, %v1352
    %v1354 = vsel %vm1154, %v1347, %v1353
    %v1388 = vadd.s32 %v126, 4294967232
    %v1389 = vlaneseq
    %v1390 = vshrl.u32 %v1389, 7
    %v1391 = vsub.s32 %v1388, %v1390
    %v1392 = vrot.slane %v693, %v1391
    %v1393 = vadd.s32 %v126, 4294967224
    %v1394 = vlaneseq
    %v1395 = vshrl.u32 %v1394, 7
    %v1396 = vsub.s32 %v1393, %v1395
    %v1397 = vrot.slane %v695, %v1396
    %vm1398 = vcmask 654912
    %v1399 = vsel %vm1398, %v1397, %v1392
    %v1400 = vadd.s32 %v126, 4294967216
    %v1401 = vlaneseq
    %v1402 = vshrl.u32 %v1401, 7
    %v1403 = vsub.s32 %v1400, %v1402
    %v1404 = vrot.slane %v697, %v1403
    %vm1405 = vcmask 720512
    %v1406 = vsel %vm1405, %v1404, %v1399
    %v1407 = vadd.s32 %v126, 4294967208
    %v1408 = vlaneseq
    %v1409 = vshrl.u32 %v1408, 7
    %v1410 = vsub.s32 %v1407, %v1409
    %v1411 = vrot.slane %v699, %v1410
    %vm1412 = vcmask 786112
    %v1413 = vsel %vm1412, %v1411, %v1406
    %v1414 = vlaneseq
    %v1415 = vshrl.u32 %v1414, 7
    %v1416 = vsub.s32 %v1388, %v1415
    %v1417 = vrot.slane %v701, %v1416
    %v1418 = vlaneseq
    %v1419 = vshrl.u32 %v1418, 7
    %v1420 = vsub.s32 %v1393, %v1419
    %v1421 = vrot.slane %v703, %v1420
    %v1422 = vsel %vm1398, %v1421, %v1417
    %v1423 = vlaneseq
    %v1424 = vshrl.u32 %v1423, 7
    %v1425 = vsub.s32 %v1400, %v1424
    %v1426 = vrot.slane %v705, %v1425
    %v1427 = vsel %vm1405, %v1426, %v1422
    %v1428 = vlaneseq
    %v1429 = vshrl.u32 %v1428, 7
    %v1430 = vsub.s32 %v1407, %v1429
    %v1431 = vrot.slane %v707, %v1430
    %v1432 = vsel %vm1412, %v1431, %v1427
    %v1433 = vlaneseq
    %v1434 = vshrl.u32 %v1433, 7
    %v1435 = vsub.s32 %v1388, %v1434
    %v1436 = vrot.slane %v709, %v1435
    %v1437 = vlaneseq
    %v1438 = vshrl.u32 %v1437, 7
    %v1439 = vsub.s32 %v1393, %v1438
    %v1440 = vrot.slane %v711, %v1439
    %v1441 = vsel %vm1398, %v1440, %v1436
    %v1442 = vlaneseq
    %v1443 = vshrl.u32 %v1442, 7
    %v1444 = vsub.s32 %v1400, %v1443
    %v1445 = vrot.slane %v713, %v1444
    %v1446 = vsel %vm1405, %v1445, %v1441
    %v1447 = vlaneseq
    %v1448 = vshrl.u32 %v1447, 7
    %v1449 = vsub.s32 %v1407, %v1448
    %v1450 = vrot.slane %v715, %v1449
    %v1451 = vsel %vm1412, %v1450, %v1446
    %v1452 = vlaneseq
    %v1453 = vshrl.u32 %v1452, 7
    %v1454 = vsub.s32 %v1388, %v1453
    %v1455 = vrot.slane %v717, %v1454
    %v1456 = vlaneseq
    %v1457 = vshrl.u32 %v1456, 7
    %v1458 = vsub.s32 %v1393, %v1457
    %v1459 = vrot.slane %v719, %v1458
    %v1460 = vsel %vm1398, %v1459, %v1455
    %v1461 = vlaneseq
    %v1462 = vshrl.u32 %v1461, 7
    %v1463 = vsub.s32 %v1400, %v1462
    %v1464 = vrot.slane %v721, %v1463
    %v1465 = vsel %vm1405, %v1464, %v1460
    %v1466 = vlaneseq
    %v1467 = vshrl.u32 %v1466, 7
    %v1468 = vsub.s32 %v1407, %v1467
    %v1469 = vrot.slane %v723, %v1468
    %v1470 = vsel %vm1412, %v1469, %v1465
    %v1471 = vlaneseq
    %v1472 = vshrl.u32 %v1471, 7
    %v1473 = vsub.s32 %v1388, %v1472
    %v1474 = vrot.slane %v725, %v1473
    %v1475 = vlaneseq
    %v1476 = vshrl.u32 %v1475, 7
    %v1477 = vsub.s32 %v1393, %v1476
    %v1478 = vrot.slane %v727, %v1477
    %v1479 = vsel %vm1398, %v1478, %v1474
    %v1480 = vlaneseq
    %v1481 = vshrl.u32 %v1480, 7
    %v1482 = vsub.s32 %v1400, %v1481
    %v1483 = vrot.slane %v729, %v1482
    %v1484 = vsel %vm1405, %v1483, %v1479
    %v1485 = vlaneseq
    %v1486 = vshrl.u32 %v1485, 7
    %v1487 = vsub.s32 %v1407, %v1486
    %v1488 = vrot.slane %v731, %v1487
    %v1489 = vsel %vm1412, %v1488, %v1484
    %v1490 = vlaneseq
    %v1491 = vshrl.u32 %v1490, 7
    %v1492 = vsub.s32 %v1388, %v1491
    %v1493 = vrot.slane %v733, %v1492
    %v1494 = vlaneseq
    %v1495 = vshrl.u32 %v1494, 7
    %v1496 = vsub.s32 %v1393, %v1495
    %v1497 = vrot.slane %v735, %v1496
    %v1498 = vsel %vm1398, %v1497, %v1493
    %v1499 = vlaneseq
    %v1500 = vshrl.u32 %v1499, 7
    %v1501 = vsub.s32 %v1400, %v1500
    %v1502 = vrot.slane %v737, %v1501
    %v1503 = vsel %vm1405, %v1502, %v1498
    %v1504 = vlaneseq
    %v1505 = vshrl.u32 %v1504, 7
    %v1506 = vsub.s32 %v1407, %v1505
    %v1507 = vrot.slane %v739, %v1506
    %v1508 = vsel %vm1412, %v1507, %v1503
    %v1509 = vlaneseq
    %v1510 = vshrl.u32 %v1509, 7
    %v1511 = vsub.s32 %v1388, %v1510
    %v1512 = vrot.slane %v741, %v1511
    %v1513 = vlaneseq
    %v1514 = vshrl.u32 %v1513, 7
    %v1515 = vsub.s32 %v1393, %v1514
    %v1516 = vrot.slane %v743, %v1515
    %v1517 = vsel %vm1398, %v1516, %v1512
    %v1518 = vlaneseq
    %v1519 = vshrl.u32 %v1518, 7
    %v1520 = vsub.s32 %v1400, %v1519
    %v1521 = vrot.slane %v745, %v1520
    %v1522 = vsel %vm1405, %v1521, %v1517
    %v1523 = vlaneseq
    %v1524 = vshrl.u32 %v1523, 7
    %v1525 = vsub.s32 %v1407, %v1524
    %v1526 = vrot.slane %v747, %v1525
    %v1527 = vsel %vm1412, %v1526, %v1522
    %v1528 = vlaneseq
    %v1529 = vshrl.u32 %v1528, 7
    %v1530 = vsub.s32 %v1388, %v1529
    %v1531 = vrot.slane %v749, %v1530
    %v1532 = vlaneseq
    %v1533 = vshrl.u32 %v1532, 7
    %v1534 = vsub.s32 %v1393, %v1533
    %v1535 = vrot.slane %v751, %v1534
    %v1536 = vsel %vm1398, %v1535, %v1531
    %v1537 = vlaneseq
    %v1538 = vshrl.u32 %v1537, 7
    %v1539 = vsub.s32 %v1400, %v1538
    %v1540 = vrot.slane %v753, %v1539
    %v1541 = vsel %vm1405, %v1540, %v1536
    %v1542 = vlaneseq
    %v1543 = vshrl.u32 %v1542, 7
    %v1544 = vsub.s32 %v1407, %v1543
    %v1545 = vrot.slane %v755, %v1544
    %v1546 = vsel %vm1412, %v1545, %v1541
    %v1547 = vsel %vm1142, %v1432, %v1413
    %v1548 = vsel %vm1144, %v1451, %v1547
    %v1549 = vsel %vm1146, %v1470, %v1548
    %v1550 = vsel %vm1148, %v1489, %v1549
    %v1551 = vsel %vm1150, %v1508, %v1550
    %v1552 = vsel %vm1152, %v1527, %v1551
    %v1553 = vsel %vm1154, %v1546, %v1552
    %v1587 = vadd.s32 %v126, 4294967200
    %v1588 = vlaneseq
    %v1589 = vshrl.u32 %v1588, 7
    %v1590 = vsub.s32 %v1587, %v1589
    %v1591 = vrot.slane %v889, %v1590
    %v1592 = vadd.s32 %v126, 4294967192
    %v1593 = vlaneseq
    %v1594 = vshrl.u32 %v1593, 7
    %v1595 = vsub.s32 %v1592, %v1594
    %v1596 = vrot.slane %v891, %v1595
    %vm1597 = vcmask 917312
    %v1598 = vsel %vm1597, %v1596, %v1591
    %v1599 = vadd.s32 %v126, 4294967184
    %v1600 = vlaneseq
    %v1601 = vshrl.u32 %v1600, 7
    %v1602 = vsub.s32 %v1599, %v1601
    %v1603 = vrot.slane %v893, %v1602
    %vm1604 = vcmask 982912
    %v1605 = vsel %vm1604, %v1603, %v1598
    %v1606 = vadd.s32 %v126, 4294967176
    %v1607 = vlaneseq
    %v1608 = vshrl.u32 %v1607, 7
    %v1609 = vsub.s32 %v1606, %v1608
    %v1610 = vrot.slane %v895, %v1609
    %vm1611 = vcmask 1048512
    %v1612 = vsel %vm1611, %v1610, %v1605
    %v1613 = vlaneseq
    %v1614 = vshrl.u32 %v1613, 7
    %v1615 = vsub.s32 %v1587, %v1614
    %v1616 = vrot.slane %v897, %v1615
    %v1617 = vlaneseq
    %v1618 = vshrl.u32 %v1617, 7
    %v1619 = vsub.s32 %v1592, %v1618
    %v1620 = vrot.slane %v899, %v1619
    %v1621 = vsel %vm1597, %v1620, %v1616
    %v1622 = vlaneseq
    %v1623 = vshrl.u32 %v1622, 7
    %v1624 = vsub.s32 %v1599, %v1623
    %v1625 = vrot.slane %v901, %v1624
    %v1626 = vsel %vm1604, %v1625, %v1621
    %v1627 = vlaneseq
    %v1628 = vshrl.u32 %v1627, 7
    %v1629 = vsub.s32 %v1606, %v1628
    %v1630 = vrot.slane %v903, %v1629
    %v1631 = vsel %vm1611, %v1630, %v1626
    %v1632 = vlaneseq
    %v1633 = vshrl.u32 %v1632, 7
    %v1634 = vsub.s32 %v1587, %v1633
    %v1635 = vrot.slane %v905, %v1634
    %v1636 = vlaneseq
    %v1637 = vshrl.u32 %v1636, 7
    %v1638 = vsub.s32 %v1592, %v1637
    %v1639 = vrot.slane %v907, %v1638
    %v1640 = vsel %vm1597, %v1639, %v1635
    %v1641 = vlaneseq
    %v1642 = vshrl.u32 %v1641, 7
    %v1643 = vsub.s32 %v1599, %v1642
    %v1644 = vrot.slane %v909, %v1643
    %v1645 = vsel %vm1604, %v1644, %v1640
    %v1646 = vlaneseq
    %v1647 = vshrl.u32 %v1646, 7
    %v1648 = vsub.s32 %v1606, %v1647
    %v1649 = vrot.slane %v911, %v1648
    %v1650 = vsel %vm1611, %v1649, %v1645
    %v1651 = vlaneseq
    %v1652 = vshrl.u32 %v1651, 7
    %v1653 = vsub.s32 %v1587, %v1652
    %v1654 = vrot.slane %v913, %v1653
    %v1655 = vlaneseq
    %v1656 = vshrl.u32 %v1655, 7
    %v1657 = vsub.s32 %v1592, %v1656
    %v1658 = vrot.slane %v915, %v1657
    %v1659 = vsel %vm1597, %v1658, %v1654
    %v1660 = vlaneseq
    %v1661 = vshrl.u32 %v1660, 7
    %v1662 = vsub.s32 %v1599, %v1661
    %v1663 = vrot.slane %v917, %v1662
    %v1664 = vsel %vm1604, %v1663, %v1659
    %v1665 = vlaneseq
    %v1666 = vshrl.u32 %v1665, 7
    %v1667 = vsub.s32 %v1606, %v1666
    %v1668 = vrot.slane %v919, %v1667
    %v1669 = vsel %vm1611, %v1668, %v1664
    %v1670 = vlaneseq
    %v1671 = vshrl.u32 %v1670, 7
    %v1672 = vsub.s32 %v1587, %v1671
    %v1673 = vrot.slane %v921, %v1672
    %v1674 = vlaneseq
    %v1675 = vshrl.u32 %v1674, 7
    %v1676 = vsub.s32 %v1592, %v1675
    %v1677 = vrot.slane %v923, %v1676
    %v1678 = vsel %vm1597, %v1677, %v1673
    %v1679 = vlaneseq
    %v1680 = vshrl.u32 %v1679, 7
    %v1681 = vsub.s32 %v1599, %v1680
    %v1682 = vrot.slane %v925, %v1681
    %v1683 = vsel %vm1604, %v1682, %v1678
    %v1684 = vlaneseq
    %v1685 = vshrl.u32 %v1684, 7
    %v1686 = vsub.s32 %v1606, %v1685
    %v1687 = vrot.slane %v927, %v1686
    %v1688 = vsel %vm1611, %v1687, %v1683
    %v1689 = vlaneseq
    %v1690 = vshrl.u32 %v1689, 7
    %v1691 = vsub.s32 %v1587, %v1690
    %v1692 = vrot.slane %v929, %v1691
    %v1693 = vlaneseq
    %v1694 = vshrl.u32 %v1693, 7
    %v1695 = vsub.s32 %v1592, %v1694
    %v1696 = vrot.slane %v931, %v1695
    %v1697 = vsel %vm1597, %v1696, %v1692
    %v1698 = vlaneseq
    %v1699 = vshrl.u32 %v1698, 7
    %v1700 = vsub.s32 %v1599, %v1699
    %v1701 = vrot.slane %v933, %v1700
    %v1702 = vsel %vm1604, %v1701, %v1697
    %v1703 = vlaneseq
    %v1704 = vshrl.u32 %v1703, 7
    %v1705 = vsub.s32 %v1606, %v1704
    %v1706 = vrot.slane %v935, %v1705
    %v1707 = vsel %vm1611, %v1706, %v1702
    %v1708 = vlaneseq
    %v1709 = vshrl.u32 %v1708, 7
    %v1710 = vsub.s32 %v1587, %v1709
    %v1711 = vrot.slane %v937, %v1710
    %v1712 = vlaneseq
    %v1713 = vshrl.u32 %v1712, 7
    %v1714 = vsub.s32 %v1592, %v1713
    %v1715 = vrot.slane %v939, %v1714
    %v1716 = vsel %vm1597, %v1715, %v1711
    %v1717 = vlaneseq
    %v1718 = vshrl.u32 %v1717, 7
    %v1719 = vsub.s32 %v1599, %v1718
    %v1720 = vrot.slane %v941, %v1719
    %v1721 = vsel %vm1604, %v1720, %v1716
    %v1722 = vlaneseq
    %v1723 = vshrl.u32 %v1722, 7
    %v1724 = vsub.s32 %v1606, %v1723
    %v1725 = vrot.slane %v943, %v1724
    %v1726 = vsel %vm1611, %v1725, %v1721
    %v1727 = vlaneseq
    %v1728 = vshrl.u32 %v1727, 7
    %v1729 = vsub.s32 %v1587, %v1728
    %v1730 = vrot.slane %v945, %v1729
    %v1731 = vlaneseq
    %v1732 = vshrl.u32 %v1731, 7
    %v1733 = vsub.s32 %v1592, %v1732
    %v1734 = vrot.slane %v947, %v1733
    %v1735 = vsel %vm1597, %v1734, %v1730
    %v1736 = vlaneseq
    %v1737 = vshrl.u32 %v1736, 7
    %v1738 = vsub.s32 %v1599, %v1737
    %v1739 = vrot.slane %v949, %v1738
    %v1740 = vsel %vm1604, %v1739, %v1735
    %v1741 = vlaneseq
    %v1742 = vshrl.u32 %v1741, 7
    %v1743 = vsub.s32 %v1606, %v1742
    %v1744 = vrot.slane %v951, %v1743
    %v1745 = vsel %vm1611, %v1744, %v1740
    %v1746 = vsel %vm1142, %v1631, %v1612
    %v1747 = vsel %vm1144, %v1650, %v1746
    %v1748 = vsel %vm1146, %v1669, %v1747
    %v1749 = vsel %vm1148, %v1688, %v1748
    %v1750 = vsel %vm1150, %v1707, %v1749
    %v1751 = vsel %vm1152, %v1726, %v1750
    %v1752 = vsel %vm1154, %v1745, %v1751
    %vm1754 = vcmask 261120
    %v1755 = vsel %vm1754, %v1155, %v1354
    %vm1756 = vcmask 523264
    %v1757 = vsel %vm1756, %v1755, %v1553
    %vm1758 = vcmask 785408
    %v1759 = vsel %vm1758, %v1757, %v1752
    %v1760 = vmax.f32 %v1759, 0.0
    %v1761 = vmax.f32 %v1760, 1e-30
    %v1762 = vlog2.pop %v1761
    %v1763 = vmul.f32 %v1762, 0.6931472
    %v1765 = vcombine.high %v1763, %v1763
    %v1767 = vunpack.c.l.s4 1966171168
    %v1768 = vunpack.c.0.s8 %v1767
    %v1769 = vlaneseq
    %v1770 = vshrl.u32 %v1769, 7
    %v1771 = vsub.s32 %v1768, %v1770
    %v1772 = vrot.slane %v1763, %v1771
    %v1774 = vunpack.c.l.s4 1966171168
    %v1775 = vunpack.c.0.s8 %v1774
    %v1776 = vlaneseq
    %v1777 = vshrl.u32 %v1776, 7
    %v1778 = vsub.s32 %v1775, %v1777
    %v1779 = vrot.slane %v1765, %v1778
    %v1780 = vcombine.high %v1772, %v1772
    %v1781 = vcombine.high %v1779, %v1779
    %v1783 = vunpack.c.l.s4 1966171168
    %v1784 = vunpack.c.0.s8 %v1783
    %v1785 = vlaneseq
    %v1786 = vshrl.u32 %v1785, 7
    %v1787 = vsub.s32 %v1784, %v1786
    %v1788 = vrot.slane %v1772, %v1787
    %v1790 = vunpack.c.l.s4 1966171168
    %v1791 = vunpack.c.0.s8 %v1790
    %v1792 = vlaneseq
    %v1793 = vshrl.u32 %v1792, 7
    %v1794 = vsub.s32 %v1791, %v1793
    %v1795 = vrot.slane %v1779, %v1794
    %v1797 = vunpack.c.l.s4 1966171168
    %v1798 = vunpack.c.0.s8 %v1797
    %v1799 = vlaneseq
    %v1800 = vshrl.u32 %v1799, 7
    %v1801 = vsub.s32 %v1798, %v1800
    %v1802 = vrot.slane %v1780, %v1801
    %v1804 = vunpack.c.l.s4 1966171168
    %v1805 = vunpack.c.0.s8 %v1804
    %v1806 = vlaneseq
    %v1807 = vshrl.u32 %v1806, 7
    %v1808 = vsub.s32 %v1805, %v1807
    %v1809 = vrot.slane %v1781, %v1808
    %v1810 = vcombine.high %v1788, %v1788
    %v1811 = vcombine.high %v1795, %v1795
    %v1812 = vcombine.high %v1802, %v1802
    %v1813 = vcombine.high %v1809, %v1809
    %vm1814 = vcmp.lt.s32.totalorder %v126, 32
    %v1815 = vld [vmem:[#allocation7] sm:$0xff]
    %v1816 = vld [vmem:[#allocation7 + $0x8] sm:$0xff]
    %v1817 = vld [vmem:[#allocation7 + $0x10] sm:$0xff]
    %v1818 = vld [vmem:[#allocation7 + $0x18] sm:$0xff]
    %v1819 = vlaneseq
    %v1820 = vshrl.u32 %v1819, 7
    %v1821 = vsub.s32 0, %v1820
    %v1822 = vrot.slane %v1788, %v1821
    %v1823 = vlaneseq
    %v1824 = vshrl.u32 %v1823, 7
    %v1825 = vsub.s32 0, %v1824
    %v1826 = vrot.slane %v1802, %v1825
    %v1827 = vlaneseq
    %v1828 = vshrl.u32 %v1827, 7
    %v1829 = vsub.s32 0, %v1828
    %v1830 = vrot.slane %v1810, %v1829
    %v1831 = vlaneseq
    %v1832 = vshrl.u32 %v1831, 7
    %v1833 = vsub.s32 0, %v1832
    %v1834 = vrot.slane %v1812, %v1833
    %v1835 = vlaneseq
    %v1836 = vshrl.u32 %v1835, 7
    %v1837 = vsub.s32 0, %v1836
    %v1838 = vrot.slane %v1795, %v1837
    %v1839 = vlaneseq
    %v1840 = vshrl.u32 %v1839, 7
    %v1841 = vsub.s32 0, %v1840
    %v1842 = vrot.slane %v1809, %v1841
    %v1843 = vlaneseq
    %v1844 = vshrl.u32 %v1843, 7
    %v1845 = vsub.s32 0, %v1844
    %v1846 = vrot.slane %v1811, %v1845
    %v1847 = vlaneseq
    %v1848 = vshrl.u32 %v1847, 7
    %v1849 = vsub.s32 0, %v1848
    %v1850 = vrot.slane %v1813, %v1849
    %v1859 = vmul.f32 %v1815, %v1822
    %v1860 = vmul.f32 %v1816, %v1822
    %v1861 = vmul.f32 %v1817, %v1822
    %v1862 = vmul.f32 %v1818, %v1822
    %v1863 = vmul.f32 %v1815, %v1826
    %v1864 = vmul.f32 %v1816, %v1826
    %v1865 = vmul.f32 %v1817, %v1826
    %v1866 = vmul.f32 %v1818, %v1826
    %v1867 = vmul.f32 %v1815, %v1830
    %v1868 = vmul.f32 %v1816, %v1830
    %v1869 = vmul.f32 %v1817, %v1830
    %v1870 = vmul.f32 %v1818, %v1830
    %v1871 = vmul.f32 %v1815, %v1834
    %v1872 = vmul.f32 %v1816, %v1834
    %v1873 = vmul.f32 %v1817, %v1834
    %v1874 = vmul.f32 %v1818, %v1834
    %v1875 = vmul.f32 %v1815, %v1838
    %v1876 = vmul.f32 %v1816, %v1838
    %v1877 = vmul.f32 %v1817, %v1838
    %v1878 = vmul.f32 %v1818, %v1838
    %v1879 = vmul.f32 %v1815, %v1842
    %v1880 = vmul.f32 %v1816, %v1842
    %v1881 = vmul.f32 %v1817, %v1842
    %v1882 = vmul.f32 %v1818, %v1842
    %v1883 = vmul.f32 %v1815, %v1846
    %v1884 = vmul.f32 %v1816, %v1846
    %v1885 = vmul.f32 %v1817, %v1846
    %v1886 = vmul.f32 %v1818, %v1846
    %v1887 = vmul.f32 %v1815, %v1850
    %v1888 = vmul.f32 %v1816, %v1850
    %v1889 = vmul.f32 %v1817, %v1850
    %v1890 = vmul.f32 %v1818, %v1850
    %v1891 = vsel %vm1814, %v1859, -inf
    %v1892 = vsel %vm1814, %v1860, -inf
    %v1893 = vsel %vm1814, %v1861, -inf
    %v1894 = vsel %vm1814, %v1862, -inf
    %v1895 = vsel %vm1814, %v1863, -inf
    %v1896 = vsel %vm1814, %v1864, -inf
    %v1897 = vsel %vm1814, %v1865, -inf
    %v1898 = vsel %vm1814, %v1866, -inf
    %v1899 = vsel %vm1814, %v1867, -inf
    %v1900 = vsel %vm1814, %v1868, -inf
    %v1901 = vsel %vm1814, %v1869, -inf
    %v1902 = vsel %vm1814, %v1870, -inf
    %v1903 = vsel %vm1814, %v1871, -inf
    %v1904 = vsel %vm1814, %v1872, -inf
    %v1905 = vsel %vm1814, %v1873, -inf
    %v1906 = vsel %vm1814, %v1874, -inf
    %v1907 = vsel %vm1814, %v1875, -inf
    %v1908 = vsel %vm1814, %v1876, -inf
    %v1909 = vsel %vm1814, %v1877, -inf
    %v1910 = vsel %vm1814, %v1878, -inf
    %v1911 = vsel %vm1814, %v1879, -inf
    %v1912 = vsel %vm1814, %v1880, -inf
    %v1913 = vsel %vm1814, %v1881, -inf
    %v1914 = vsel %vm1814, %v1882, -inf
    %v1915 = vsel %vm1814, %v1883, -inf
    %v1916 = vsel %vm1814, %v1884, -inf
    %v1917 = vsel %vm1814, %v1885, -inf
    %v1918 = vsel %vm1814, %v1886, -inf
    %v1919 = vsel %vm1814, %v1887, -inf
    %v1920 = vsel %vm1814, %v1888, -inf
    %v1921 = vsel %vm1814, %v1889, -inf
    %v1922 = vsel %vm1814, %v1890, -inf
    %1923 = vmax.xlane.f32.xlu0 %v1891
    %v1924 = vpop.xlane.xlu0 %1923
    %1925 = vmax.xlane.f32.xlu0 %v1892
    %v1926 = vpop.xlane.xlu0 %1925
    %1927 = vmax.xlane.f32.xlu0 %v1893
    %v1928 = vpop.xlane.xlu0 %1927
    %1929 = vmax.xlane.f32.xlu0 %v1894
    %v1930 = vpop.xlane.xlu0 %1929
    %1931 = vmax.xlane.f32.xlu0 %v1895
    %v1932 = vpop.xlane.xlu0 %1931
    %1933 = vmax.xlane.f32.xlu0 %v1896
    %v1934 = vpop.xlane.xlu0 %1933
    %1935 = vmax.xlane.f32.xlu0 %v1897
    %v1936 = vpop.xlane.xlu0 %1935
    %1937 = vmax.xlane.f32.xlu0 %v1898
    %v1938 = vpop.xlane.xlu0 %1937
    %1939 = vmax.xlane.f32.xlu0 %v1899
    %v1940 = vpop.xlane.xlu0 %1939
    %1941 = vmax.xlane.f32.xlu0 %v1900
    %v1942 = vpop.xlane.xlu0 %1941
    %1943 = vmax.xlane.f32.xlu0 %v1901
    %v1944 = vpop.xlane.xlu0 %1943
    %1945 = vmax.xlane.f32.xlu0 %v1902
    %v1946 = vpop.xlane.xlu0 %1945
    %1947 = vmax.xlane.f32.xlu0 %v1903
    %v1948 = vpop.xlane.xlu0 %1947
    %1949 = vmax.xlane.f32.xlu0 %v1904
    %v1950 = vpop.xlane.xlu0 %1949
    %1951 = vmax.xlane.f32.xlu0 %v1905
    %v1952 = vpop.xlane.xlu0 %1951
    %1953 = vmax.xlane.f32.xlu0 %v1906
    %v1954 = vpop.xlane.xlu0 %1953
    %1955 = vmax.xlane.f32.xlu0 %v1907
    %v1956 = vpop.xlane.xlu0 %1955
    %1957 = vmax.xlane.f32.xlu0 %v1908
    %v1958 = vpop.xlane.xlu0 %1957
    %1959 = vmax.xlane.f32.xlu0 %v1909
    %v1960 = vpop.xlane.xlu0 %1959
    %1961 = vmax.xlane.f32.xlu0 %v1910
    %v1962 = vpop.xlane.xlu0 %1961
    %1963 = vmax.xlane.f32.xlu0 %v1911
    %v1964 = vpop.xlane.xlu0 %1963
    %1965 = vmax.xlane.f32.xlu0 %v1912
    %v1966 = vpop.xlane.xlu0 %1965
    %1967 = vmax.xlane.f32.xlu0 %v1913
    %v1968 = vpop.xlane.xlu0 %1967
    %1969 = vmax.xlane.f32.xlu0 %v1914
    %v1970 = vpop.xlane.xlu0 %1969
    %1971 = vmax.xlane.f32.xlu0 %v1915
    %v1972 = vpop.xlane.xlu0 %1971
    %1973 = vmax.xlane.f32.xlu0 %v1916
    %v1974 = vpop.xlane.xlu0 %1973
    %1975 = vmax.xlane.f32.xlu0 %v1917
    %v1976 = vpop.xlane.xlu0 %1975
    %1977 = vmax.xlane.f32.xlu0 %v1918
    %v1978 = vpop.xlane.xlu0 %1977
    %1979 = vmax.xlane.f32.xlu0 %v1919
    %v1980 = vpop.xlane.xlu0 %1979
    %1981 = vmax.xlane.f32.xlu0 %v1920
    %v1982 = vpop.xlane.xlu0 %1981
    %1983 = vmax.xlane.f32.xlu0 %v1921
    %v1984 = vpop.xlane.xlu0 %1983
    %1985 = vmax.xlane.f32.xlu0 %v1922
    %v1986 = vpop.xlane.xlu0 %1985
    %v1987 = vmul.f32 %v1924, 1.442695
    %v1988 = vpow.pop %v1987
    %v1989 = vmul.f32 %v1926, 1.442695
    %v1990 = vpow.pop %v1989
    %v1991 = vmul.f32 %v1928, 1.442695
    %v1992 = vpow.pop %v1991
    %v1993 = vmul.f32 %v1930, 1.442695
    %v1994 = vpow.pop %v1993
    %v1995 = vmul.f32 %v1932, 1.442695
    %v1996 = vpow.pop %v1995
    %v1997 = vmul.f32 %v1934, 1.442695
    %v1998 = vpow.pop %v1997
    %v1999 = vmul.f32 %v1936, 1.442695
    %v2000 = vpow.pop %v1999
    %v2001 = vmul.f32 %v1938, 1.442695
    %v2002 = vpow.pop %v2001
    %v2003 = vmul.f32 %v1940, 1.442695
    %v2004 = vpow.pop %v2003
    %v2005 = vmul.f32 %v1942, 1.442695
    %v2006 = vpow.pop %v2005
    %v2007 = vmul.f32 %v1944, 1.442695
    %v2008 = vpow.pop %v2007
    %v2009 = vmul.f32 %v1946, 1.442695
    %v2010 = vpow.pop %v2009
    %v2011 = vmul.f32 %v1948, 1.442695
    %v2012 = vpow.pop %v2011
    %v2013 = vmul.f32 %v1950, 1.442695
    %v2014 = vpow.pop %v2013
    %v2015 = vmul.f32 %v1952, 1.442695
    %v2016 = vpow.pop %v2015
    %v2017 = vmul.f32 %v1954, 1.442695
    %v2018 = vpow.pop %v2017
    %v2019 = vmul.f32 %v1956, 1.442695
    %v2020 = vpow.pop %v2019
    %v2021 = vmul.f32 %v1958, 1.442695
    %v2022 = vpow.pop %v2021
    %v2023 = vmul.f32 %v1960, 1.442695
    %v2024 = vpow.pop %v2023
    %v2025 = vmul.f32 %v1962, 1.442695
    %v2026 = vpow.pop %v2025
    %v2027 = vmul.f32 %v1964, 1.442695
    %v2028 = vpow.pop %v2027
    %v2029 = vmul.f32 %v1966, 1.442695
    %v2030 = vpow.pop %v2029
    %v2031 = vmul.f32 %v1968, 1.442695
    %v2032 = vpow.pop %v2031
    %v2033 = vmul.f32 %v1970, 1.442695
    %v2034 = vpow.pop %v2033
    %v2035 = vmul.f32 %v1972, 1.442695
    %v2036 = vpow.pop %v2035
    %v2037 = vmul.f32 %v1974, 1.442695
    %v2038 = vpow.pop %v2037
    %v2039 = vmul.f32 %v1976, 1.442695
    %v2040 = vpow.pop %v2039
    %v2041 = vmul.f32 %v1978, 1.442695
    %v2042 = vpow.pop %v2041
    %v2043 = vmul.f32 %v1980, 1.442695
    %v2044 = vpow.pop %v2043
    %v2045 = vmul.f32 %v1982, 1.442695
    %v2046 = vpow.pop %v2045
    %v2047 = vmul.f32 %v1984, 1.442695
    %v2048 = vpow.pop %v2047
    %v2049 = vmul.f32 %v1986, 1.442695
    %v2050 = vpow.pop %v2049
    %v2051 = vld [vmem:[#allocation7 + $0x20] sm:$0xff]
    %v2052 = vld [vmem:[#allocation7 + $0x28] sm:$0xff]
    %v2053 = vld [vmem:[#allocation7 + $0x30] sm:$0xff]
    %v2054 = vld [vmem:[#allocation7 + $0x38] sm:$0xff]
    %v2055 = vmul.f32 %v2051, %v1822
    %v2056 = vmul.f32 %v2052, %v1822
    %v2057 = vmul.f32 %v2053, %v1822
    %v2058 = vmul.f32 %v2054, %v1822
    %v2059 = vmul.f32 %v2051, %v1826
    %v2060 = vmul.f32 %v2052, %v1826
    %v2061 = vmul.f32 %v2053, %v1826
    %v2062 = vmul.f32 %v2054, %v1826
    %v2063 = vmul.f32 %v2051, %v1830
    %v2064 = vmul.f32 %v2052, %v1830
    %v2065 = vmul.f32 %v2053, %v1830
    %v2066 = vmul.f32 %v2054, %v1830
    %v2067 = vmul.f32 %v2051, %v1834
    %v2068 = vmul.f32 %v2052, %v1834
    %v2069 = vmul.f32 %v2053, %v1834
    %v2070 = vmul.f32 %v2054, %v1834
    %v2071 = vmul.f32 %v2051, %v1838
    %v2072 = vmul.f32 %v2052, %v1838
    %v2073 = vmul.f32 %v2053, %v1838
    %v2074 = vmul.f32 %v2054, %v1838
    %v2075 = vmul.f32 %v2051, %v1842
    %v2076 = vmul.f32 %v2052, %v1842
    %v2077 = vmul.f32 %v2053, %v1842
    %v2078 = vmul.f32 %v2054, %v1842
    %v2079 = vmul.f32 %v2051, %v1846
    %v2080 = vmul.f32 %v2052, %v1846
    %v2081 = vmul.f32 %v2053, %v1846
    %v2082 = vmul.f32 %v2054, %v1846
    %v2083 = vmul.f32 %v2051, %v1850
    %v2084 = vmul.f32 %v2052, %v1850
    %v2085 = vmul.f32 %v2053, %v1850
    %v2086 = vmul.f32 %v2054, %v1850
    %v2087 = vsel %vm1814, %v2055, -inf
    %v2088 = vsel %vm1814, %v2056, -inf
    %v2089 = vsel %vm1814, %v2057, -inf
    %v2090 = vsel %vm1814, %v2058, -inf
    %v2091 = vsel %vm1814, %v2059, -inf
    %v2092 = vsel %vm1814, %v2060, -inf
    %v2093 = vsel %vm1814, %v2061, -inf
    %v2094 = vsel %vm1814, %v2062, -inf
    %v2095 = vsel %vm1814, %v2063, -inf
    %v2096 = vsel %vm1814, %v2064, -inf
    %v2097 = vsel %vm1814, %v2065, -inf
    %v2098 = vsel %vm1814, %v2066, -inf
    %v2099 = vsel %vm1814, %v2067, -inf
    %v2100 = vsel %vm1814, %v2068, -inf
    %v2101 = vsel %vm1814, %v2069, -inf
    %v2102 = vsel %vm1814, %v2070, -inf
    %v2103 = vsel %vm1814, %v2071, -inf
    %v2104 = vsel %vm1814, %v2072, -inf
    %v2105 = vsel %vm1814, %v2073, -inf
    %v2106 = vsel %vm1814, %v2074, -inf
    %v2107 = vsel %vm1814, %v2075, -inf
    %v2108 = vsel %vm1814, %v2076, -inf
    %v2109 = vsel %vm1814, %v2077, -inf
    %v2110 = vsel %vm1814, %v2078, -inf
    %v2111 = vsel %vm1814, %v2079, -inf
    %v2112 = vsel %vm1814, %v2080, -inf
    %v2113 = vsel %vm1814, %v2081, -inf
    %v2114 = vsel %vm1814, %v2082, -inf
    %v2115 = vsel %vm1814, %v2083, -inf
    %v2116 = vsel %vm1814, %v2084, -inf
    %v2117 = vsel %vm1814, %v2085, -inf
    %v2118 = vsel %vm1814, %v2086, -inf
    %2119 = vmax.xlane.f32.xlu0 %v2087
    %v2120 = vpop.xlane.xlu0 %2119
    %2121 = vmax.xlane.f32.xlu0 %v2088
    %v2122 = vpop.xlane.xlu0 %2121
    %2123 = vmax.xlane.f32.xlu0 %v2089
    %v2124 = vpop.xlane.xlu0 %2123
    %2125 = vmax.xlane.f32.xlu0 %v2090
    %v2126 = vpop.xlane.xlu0 %2125
    %2127 = vmax.xlane.f32.xlu0 %v2091
    %v2128 = vpop.xlane.xlu0 %2127
    %2129 = vmax.xlane.f32.xlu0 %v2092
    %v2130 = vpop.xlane.xlu0 %2129
    %2131 = vmax.xlane.f32.xlu0 %v2093
    %v2132 = vpop.xlane.xlu0 %2131
    %2133 = vmax.xlane.f32.xlu0 %v2094
    %v2134 = vpop.xlane.xlu0 %2133
    %2135 = vmax.xlane.f32.xlu0 %v2095
    %v2136 = vpop.xlane.xlu0 %2135
    %2137 = vmax.xlane.f32.xlu0 %v2096
    %v2138 = vpop.xlane.xlu0 %2137
    %2139 = vmax.xlane.f32.xlu0 %v2097
    %v2140 = vpop.xlane.xlu0 %2139
    %2141 = vmax.xlane.f32.xlu0 %v2098
    %v2142 = vpop.xlane.xlu0 %2141
    %2143 = vmax.xlane.f32.xlu0 %v2099
    %v2144 = vpop.xlane.xlu0 %2143
    %2145 = vmax.xlane.f32.xlu0 %v2100
    %v2146 = vpop.xlane.xlu0 %2145
    %2147 = vmax.xlane.f32.xlu0 %v2101
    %v2148 = vpop.xlane.xlu0 %2147
    %2149 = vmax.xlane.f32.xlu0 %v2102
    %v2150 = vpop.xlane.xlu0 %2149
    %2151 = vmax.xlane.f32.xlu0 %v2103
    %v2152 = vpop.xlane.xlu0 %2151
    %2153 = vmax.xlane.f32.xlu0 %v2104
    %v2154 = vpop.xlane.xlu0 %2153
    %2155 = vmax.xlane.f32.xlu0 %v2105
    %v2156 = vpop.xlane.xlu0 %2155
    %2157 = vmax.xlane.f32.xlu0 %v2106
    %v2158 = vpop.xlane.xlu0 %2157
    %2159 = vmax.xlane.f32.xlu0 %v2107
    %v2160 = vpop.xlane.xlu0 %2159
    %2161 = vmax.xlane.f32.xlu0 %v2108
    %v2162 = vpop.xlane.xlu0 %2161
    %2163 = vmax.xlane.f32.xlu0 %v2109
    %v2164 = vpop.xlane.xlu0 %2163
    %2165 = vmax.xlane.f32.xlu0 %v2110
    %v2166 = vpop.xlane.xlu0 %2165
    %2167 = vmax.xlane.f32.xlu0 %v2111
    %v2168 = vpop.xlane.xlu0 %2167
    %2169 = vmax.xlane.f32.xlu0 %v2112
    %v2170 = vpop.xlane.xlu0 %2169
    %2171 = vmax.xlane.f32.xlu0 %v2113
    %v2172 = vpop.xlane.xlu0 %2171
    %2173 = vmax.xlane.f32.xlu0 %v2114
    %v2174 = vpop.xlane.xlu0 %2173
    %2175 = vmax.xlane.f32.xlu0 %v2115
    %v2176 = vpop.xlane.xlu0 %2175
    %2177 = vmax.xlane.f32.xlu0 %v2116
    %v2178 = vpop.xlane.xlu0 %2177
    %2179 = vmax.xlane.f32.xlu0 %v2117
    %v2180 = vpop.xlane.xlu0 %2179
    %2181 = vmax.xlane.f32.xlu0 %v2118
    %v2182 = vpop.xlane.xlu0 %2181
    %v2183 = vmul.f32 %v2120, 1.442695
    %v2184 = vpow.pop %v2183
    %v2185 = vmul.f32 %v2122, 1.442695
    %v2186 = vpow.pop %v2185
    %v2187 = vmul.f32 %v2124, 1.442695
    %v2188 = vpow.pop %v2187
    %v2189 = vmul.f32 %v2126, 1.442695
    %v2190 = vpow.pop %v2189
    %v2191 = vmul.f32 %v2128, 1.442695
    %v2192 = vpow.pop %v2191
    %v2193 = vmul.f32 %v2130, 1.442695
    %v2194 = vpow.pop %v2193
    %v2195 = vmul.f32 %v2132, 1.442695
    %v2196 = vpow.pop %v2195
    %v2197 = vmul.f32 %v2134, 1.442695
    %v2198 = vpow.pop %v2197
    %v2199 = vmul.f32 %v2136, 1.442695
    %v2200 = vpow.pop %v2199
    %v2201 = vmul.f32 %v2138, 1.442695
    %v2202 = vpow.pop %v2201
    %v2203 = vmul.f32 %v2140, 1.442695
    %v2204 = vpow.pop %v2203
    %v2205 = vmul.f32 %v2142, 1.442695
    %v2206 = vpow.pop %v2205
    %v2207 = vmul.f32 %v2144, 1.442695
    %v2208 = vpow.pop %v2207
    %v2209 = vmul.f32 %v2146, 1.442695
    %v2210 = vpow.pop %v2209
    %v2211 = vmul.f32 %v2148, 1.442695
    %v2212 = vpow.pop %v2211
    %v2213 = vmul.f32 %v2150, 1.442695
    %v2214 = vpow.pop %v2213
    %v2215 = vmul.f32 %v2152, 1.442695
    %v2216 = vpow.pop %v2215
    %v2217 = vmul.f32 %v2154, 1.442695
    %v2218 = vpow.pop %v2217
    %v2219 = vmul.f32 %v2156, 1.442695
    %v2220 = vpow.pop %v2219
    %v2221 = vmul.f32 %v2158, 1.442695
    %v2222 = vpow.pop %v2221
    %v2223 = vmul.f32 %v2160, 1.442695
    %v2224 = vpow.pop %v2223
    %v2225 = vmul.f32 %v2162, 1.442695
    %v2226 = vpow.pop %v2225
    %v2227 = vmul.f32 %v2164, 1.442695
    %v2228 = vpow.pop %v2227
    %v2229 = vmul.f32 %v2166, 1.442695
    %v2230 = vpow.pop %v2229
    %v2231 = vmul.f32 %v2168, 1.442695
    %v2232 = vpow.pop %v2231
    %v2233 = vmul.f32 %v2170, 1.442695
    %v2234 = vpow.pop %v2233
    %v2235 = vmul.f32 %v2172, 1.442695
    %v2236 = vpow.pop %v2235
    %v2237 = vmul.f32 %v2174, 1.442695
    %v2238 = vpow.pop %v2237
    %v2239 = vmul.f32 %v2176, 1.442695
    %v2240 = vpow.pop %v2239
    %v2241 = vmul.f32 %v2178, 1.442695
    %v2242 = vpow.pop %v2241
    %v2243 = vmul.f32 %v2180, 1.442695
    %v2244 = vpow.pop %v2243
    %v2245 = vmul.f32 %v2182, 1.442695
    %v2246 = vpow.pop %v2245
    %v2247 = vld [vmem:[#allocation7 + $0x40] sm:$0xff]
    %v2248 = vld [vmem:[#allocation7 + $0x48] sm:$0xff]
    %v2249 = vld [vmem:[#allocation7 + $0x50] sm:$0xff]
    %v2250 = vld [vmem:[#allocation7 + $0x58] sm:$0xff]
    %v2251 = vmul.f32 %v2247, %v1822
    %v2252 = vmul.f32 %v2248, %v1822
    %v2253 = vmul.f32 %v2249, %v1822
    %v2254 = vmul.f32 %v2250, %v1822
    %v2255 = vmul.f32 %v2247, %v1826
    %v2256 = vmul.f32 %v2248, %v1826
    %v2257 = vmul.f32 %v2249, %v1826
    %v2258 = vmul.f32 %v2250, %v1826
    %v2259 = vmul.f32 %v2247, %v1830
    %v2260 = vmul.f32 %v2248, %v1830
    %v2261 = vmul.f32 %v2249, %v1830
    %v2262 = vmul.f32 %v2250, %v1830
    %v2263 = vmul.f32 %v2247, %v1834
    %v2264 = vmul.f32 %v2248, %v1834
    %v2265 = vmul.f32 %v2249, %v1834
    %v2266 = vmul.f32 %v2250, %v1834
    %v2267 = vmul.f32 %v2247, %v1838
    %v2268 = vmul.f32 %v2248, %v1838
    %v2269 = vmul.f32 %v2249, %v1838
    %v2270 = vmul.f32 %v2250, %v1838
    %v2271 = vmul.f32 %v2247, %v1842
    %v2272 = vmul.f32 %v2248, %v1842
    %v2273 = vmul.f32 %v2249, %v1842
    %v2274 = vmul.f32 %v2250, %v1842
    %v2275 = vmul.f32 %v2247, %v1846
    %v2276 = vmul.f32 %v2248, %v1846
    %v2277 = vmul.f32 %v2249, %v1846
    %v2278 = vmul.f32 %v2250, %v1846
    %v2279 = vmul.f32 %v2247, %v1850
    %v2280 = vmul.f32 %v2248, %v1850
    %v2281 = vmul.f32 %v2249, %v1850
    %v2282 = vmul.f32 %v2250, %v1850
    %v2283 = vsel %vm1814, %v2251, -inf
    %v2284 = vsel %vm1814, %v2252, -inf
    %v2285 = vsel %vm1814, %v2253, -inf
    %v2286 = vsel %vm1814, %v2254, -inf
    %v2287 = vsel %vm1814, %v2255, -inf
    %v2288 = vsel %vm1814, %v2256, -inf
    %v2289 = vsel %vm1814, %v2257, -inf
    %v2290 = vsel %vm1814, %v2258, -inf
    %v2291 = vsel %vm1814, %v2259, -inf
    %v2292 = vsel %vm1814, %v2260, -inf
    %v2293 = vsel %vm1814, %v2261, -inf
    %v2294 = vsel %vm1814, %v2262, -inf
    %v2295 = vsel %vm1814, %v2263, -inf
    %v2296 = vsel %vm1814, %v2264, -inf
    %v2297 = vsel %vm1814, %v2265, -inf
    %v2298 = vsel %vm1814, %v2266, -inf
    %v2299 = vsel %vm1814, %v2267, -inf
    %v2300 = vsel %vm1814, %v2268, -inf
    %v2301 = vsel %vm1814, %v2269, -inf
    %v2302 = vsel %vm1814, %v2270, -inf
    %v2303 = vsel %vm1814, %v2271, -inf
    %v2304 = vsel %vm1814, %v2272, -inf
    %v2305 = vsel %vm1814, %v2273, -inf
    %v2306 = vsel %vm1814, %v2274, -inf
    %v2307 = vsel %vm1814, %v2275, -inf
    %v2308 = vsel %vm1814, %v2276, -inf
    %v2309 = vsel %vm1814, %v2277, -inf
    %v2310 = vsel %vm1814, %v2278, -inf
    %v2311 = vsel %vm1814, %v2279, -inf
    %v2312 = vsel %vm1814, %v2280, -inf
    %v2313 = vsel %vm1814, %v2281, -inf
    %v2314 = vsel %vm1814, %v2282, -inf
    %2315 = vmax.xlane.f32.xlu0 %v2283
    %v2316 = vpop.xlane.xlu0 %2315
    %2317 = vmax.xlane.f32.xlu0 %v2284
    %v2318 = vpop.xlane.xlu0 %2317
    %2319 = vmax.xlane.f32.xlu0 %v2285
    %v2320 = vpop.xlane.xlu0 %2319
    %2321 = vmax.xlane.f32.xlu0 %v2286
    %v2322 = vpop.xlane.xlu0 %2321
    %2323 = vmax.xlane.f32.xlu0 %v2287
    %v2324 = vpop.xlane.xlu0 %2323
    %2325 = vmax.xlane.f32.xlu0 %v2288
    %v2326 = vpop.xlane.xlu0 %2325
    %2327 = vmax.xlane.f32.xlu0 %v2289
    %v2328 = vpop.xlane.xlu0 %2327
    %2329 = vmax.xlane.f32.xlu0 %v2290
    %v2330 = vpop.xlane.xlu0 %2329
    %2331 = vmax.xlane.f32.xlu0 %v2291
    %v2332 = vpop.xlane.xlu0 %2331
    %2333 = vmax.xlane.f32.xlu0 %v2292
    %v2334 = vpop.xlane.xlu0 %2333
    %2335 = vmax.xlane.f32.xlu0 %v2293
    %v2336 = vpop.xlane.xlu0 %2335
    %2337 = vmax.xlane.f32.xlu0 %v2294
    %v2338 = vpop.xlane.xlu0 %2337
    %2339 = vmax.xlane.f32.xlu0 %v2295
    %v2340 = vpop.xlane.xlu0 %2339
    %2341 = vmax.xlane.f32.xlu0 %v2296
    %v2342 = vpop.xlane.xlu0 %2341
    %2343 = vmax.xlane.f32.xlu0 %v2297
    %v2344 = vpop.xlane.xlu0 %2343
    %2345 = vmax.xlane.f32.xlu0 %v2298
    %v2346 = vpop.xlane.xlu0 %2345
    %2347 = vmax.xlane.f32.xlu0 %v2299
    %v2348 = vpop.xlane.xlu0 %2347
    %2349 = vmax.xlane.f32.xlu0 %v2300
    %v2350 = vpop.xlane.xlu0 %2349
    %2351 = vmax.xlane.f32.xlu0 %v2301
    %v2352 = vpop.xlane.xlu0 %2351
    %2353 = vmax.xlane.f32.xlu0 %v2302
    %v2354 = vpop.xlane.xlu0 %2353
    %2355 = vmax.xlane.f32.xlu0 %v2303
    %v2356 = vpop.xlane.xlu0 %2355
    %2357 = vmax.xlane.f32.xlu0 %v2304
    %v2358 = vpop.xlane.xlu0 %2357
    %2359 = vmax.xlane.f32.xlu0 %v2305
    %v2360 = vpop.xlane.xlu0 %2359
    %2361 = vmax.xlane.f32.xlu0 %v2306
    %v2362 = vpop.xlane.xlu0 %2361
    %2363 = vmax.xlane.f32.xlu0 %v2307
    %v2364 = vpop.xlane.xlu0 %2363
    %2365 = vmax.xlane.f32.xlu0 %v2308
    %v2366 = vpop.xlane.xlu0 %2365
    %2367 = vmax.xlane.f32.xlu0 %v2309
    %v2368 = vpop.xlane.xlu0 %2367
    %2369 = vmax.xlane.f32.xlu0 %v2310
    %v2370 = vpop.xlane.xlu0 %2369
    %2371 = vmax.xlane.f32.xlu0 %v2311
    %v2372 = vpop.xlane.xlu0 %2371
    %2373 = vmax.xlane.f32.xlu0 %v2312
    %v2374 = vpop.xlane.xlu0 %2373
    %2375 = vmax.xlane.f32.xlu0 %v2313
    %v2376 = vpop.xlane.xlu0 %2375
    %2377 = vmax.xlane.f32.xlu0 %v2314
    %v2378 = vpop.xlane.xlu0 %2377
    %v2379 = vmul.f32 %v2316, 1.442695
    %v2380 = vpow.pop %v2379
    %v2381 = vmul.f32 %v2318, 1.442695
    %v2382 = vpow.pop %v2381
    %v2383 = vmul.f32 %v2320, 1.442695
    %v2384 = vpow.pop %v2383
    %v2385 = vmul.f32 %v2322, 1.442695
    %v2386 = vpow.pop %v2385
    %v2387 = vmul.f32 %v2324, 1.442695
    %v2388 = vpow.pop %v2387
    %v2389 = vmul.f32 %v2326, 1.442695
    %v2390 = vpow.pop %v2389
    %v2391 = vmul.f32 %v2328, 1.442695
    %v2392 = vpow.pop %v2391
    %v2393 = vmul.f32 %v2330, 1.442695
    %v2394 = vpow.pop %v2393
    %v2395 = vmul.f32 %v2332, 1.442695
    %v2396 = vpow.pop %v2395
    %v2397 = vmul.f32 %v2334, 1.442695
    %v2398 = vpow.pop %v2397
    %v2399 = vmul.f32 %v2336, 1.442695
    %v2400 = vpow.pop %v2399
    %v2401 = vmul.f32 %v2338, 1.442695
    %v2402 = vpow.pop %v2401
    %v2403 = vmul.f32 %v2340, 1.442695
    %v2404 = vpow.pop %v2403
    %v2405 = vmul.f32 %v2342, 1.442695
    %v2406 = vpow.pop %v2405
    %v2407 = vmul.f32 %v2344, 1.442695
    %v2408 = vpow.pop %v2407
    %v2409 = vmul.f32 %v2346, 1.442695
    %v2410 = vpow.pop %v2409
    %v2411 = vmul.f32 %v2348, 1.442695
    %v2412 = vpow.pop %v2411
    %v2413 = vmul.f32 %v2350, 1.442695
    %v2414 = vpow.pop %v2413
    %v2415 = vmul.f32 %v2352, 1.442695
    %v2416 = vpow.pop %v2415
    %v2417 = vmul.f32 %v2354, 1.442695
    %v2418 = vpow.pop %v2417
    %v2419 = vmul.f32 %v2356, 1.442695
    %v2420 = vpow.pop %v2419
    %v2421 = vmul.f32 %v2358, 1.442695
    %v2422 = vpow.pop %v2421
    %v2423 = vmul.f32 %v2360, 1.442695
    %v2424 = vpow.pop %v2423
    %v2425 = vmul.f32 %v2362, 1.442695
    %v2426 = vpow.pop %v2425
    %v2427 = vmul.f32 %v2364, 1.442695
    %v2428 = vpow.pop %v2427
    %v2429 = vmul.f32 %v2366, 1.442695
    %v2430 = vpow.pop %v2429
    %v2431 = vmul.f32 %v2368, 1.442695
    %v2432 = vpow.pop %v2431
    %v2433 = vmul.f32 %v2370, 1.442695
    %v2434 = vpow.pop %v2433
    %v2435 = vmul.f32 %v2372, 1.442695
    %v2436 = vpow.pop %v2435
    %v2437 = vmul.f32 %v2374, 1.442695
    %v2438 = vpow.pop %v2437
    %v2439 = vmul.f32 %v2376, 1.442695
    %v2440 = vpow.pop %v2439
    %v2441 = vmul.f32 %v2378, 1.442695
    %v2442 = vpow.pop %v2441
    %v2443 = vld [vmem:[#allocation7 + $0x60] sm:$0xff]
    %v2444 = vld [vmem:[#allocation7 + $0x68] sm:$0xff]
    %v2445 = vld [vmem:[#allocation7 + $0x70] sm:$0xff]
    %v2446 = vld [vmem:[#allocation7 + $0x78] sm:$0xff]
    %v2447 = vmul.f32 %v2443, %v1822
    %v2448 = vmul.f32 %v2444, %v1822
    %v2449 = vmul.f32 %v2445, %v1822
    %v2450 = vmul.f32 %v2446, %v1822
    %v2451 = vmul.f32 %v2443, %v1826
    %v2452 = vmul.f32 %v2444, %v1826
    %v2453 = vmul.f32 %v2445, %v1826
    %v2454 = vmul.f32 %v2446, %v1826
    %v2455 = vmul.f32 %v2443, %v1830
    %v2456 = vmul.f32 %v2444, %v1830
    %v2457 = vmul.f32 %v2445, %v1830
    %v2458 = vmul.f32 %v2446, %v1830
    %v2459 = vmul.f32 %v2443, %v1834
    %v2460 = vmul.f32 %v2444, %v1834
    %v2461 = vmul.f32 %v2445, %v1834
    %v2462 = vmul.f32 %v2446, %v1834
    %v2463 = vmul.f32 %v2443, %v1838
    %v2464 = vmul.f32 %v2444, %v1838
    %v2465 = vmul.f32 %v2445, %v1838
    %v2466 = vmul.f32 %v2446, %v1838
    %v2467 = vmul.f32 %v2443, %v1842
    %v2468 = vmul.f32 %v2444, %v1842
    %v2469 = vmul.f32 %v2445, %v1842
    %v2470 = vmul.f32 %v2446, %v1842
    %v2471 = vmul.f32 %v2443, %v1846
    %v2472 = vmul.f32 %v2444, %v1846
    %v2473 = vmul.f32 %v2445, %v1846
    %v2474 = vmul.f32 %v2446, %v1846
    %v2475 = vmul.f32 %v2443, %v1850
    %v2476 = vmul.f32 %v2444, %v1850
    %v2477 = vmul.f32 %v2445, %v1850
    %v2478 = vmul.f32 %v2446, %v1850
    %v2479 = vsel %vm1814, %v2447, -inf
    %v2480 = vsel %vm1814, %v2448, -inf
    %v2481 = vsel %vm1814, %v2449, -inf
    %v2482 = vsel %vm1814, %v2450, -inf
    %v2483 = vsel %vm1814, %v2451, -inf
    %v2484 = vsel %vm1814, %v2452, -inf
    %v2485 = vsel %vm1814, %v2453, -inf
    %v2486 = vsel %vm1814, %v2454, -inf
    %v2487 = vsel %vm1814, %v2455, -inf
    %v2488 = vsel %vm1814, %v2456, -inf
    %v2489 = vsel %vm1814, %v2457, -inf
    %v2490 = vsel %vm1814, %v2458, -inf
    %v2491 = vsel %vm1814, %v2459, -inf
    %v2492 = vsel %vm1814, %v2460, -inf
    %v2493 = vsel %vm1814, %v2461, -inf
    %v2494 = vsel %vm1814, %v2462, -inf
    %v2495 = vsel %vm1814, %v2463, -inf
    %v2496 = vsel %vm1814, %v2464, -inf
    %v2497 = vsel %vm1814, %v2465, -inf
    %v2498 = vsel %vm1814, %v2466, -inf
    %v2499 = vsel %vm1814, %v2467, -inf
    %v2500 = vsel %vm1814, %v2468, -inf
    %v2501 = vsel %vm1814, %v2469, -inf
    %v2502 = vsel %vm1814, %v2470, -inf
    %v2503 = vsel %vm1814, %v2471, -inf
    %v2504 = vsel %vm1814, %v2472, -inf
    %v2505 = vsel %vm1814, %v2473, -inf
    %v2506 = vsel %vm1814, %v2474, -inf
    %v2507 = vsel %vm1814, %v2475, -inf
    %v2508 = vsel %vm1814, %v2476, -inf
    %v2509 = vsel %vm1814, %v2477, -inf
    %v2510 = vsel %vm1814, %v2478, -inf
    %2511 = vmax.xlane.f32.xlu0 %v2479
    %v2512 = vpop.xlane.xlu0 %2511
    %2513 = vmax.xlane.f32.xlu0 %v2480
    %v2514 = vpop.xlane.xlu0 %2513
    %2515 = vmax.xlane.f32.xlu0 %v2481
    %v2516 = vpop.xlane.xlu0 %2515
    %2517 = vmax.xlane.f32.xlu0 %v2482
    %v2518 = vpop.xlane.xlu0 %2517
    %2519 = vmax.xlane.f32.xlu0 %v2483
    %v2520 = vpop.xlane.xlu0 %2519
    %2521 = vmax.xlane.f32.xlu0 %v2484
    %v2522 = vpop.xlane.xlu0 %2521
    %2523 = vmax.xlane.f32.xlu0 %v2485
    %v2524 = vpop.xlane.xlu0 %2523
    %2525 = vmax.xlane.f32.xlu0 %v2486
    %v2526 = vpop.xlane.xlu0 %2525
    %2527 = vmax.xlane.f32.xlu0 %v2487
    %v2528 = vpop.xlane.xlu0 %2527
    %2529 = vmax.xlane.f32.xlu0 %v2488
    %v2530 = vpop.xlane.xlu0 %2529
    %2531 = vmax.xlane.f32.xlu0 %v2489
    %v2532 = vpop.xlane.xlu0 %2531
    %2533 = vmax.xlane.f32.xlu0 %v2490
    %v2534 = vpop.xlane.xlu0 %2533
    %2535 = vmax.xlane.f32.xlu0 %v2491
    %v2536 = vpop.xlane.xlu0 %2535
    %2537 = vmax.xlane.f32.xlu0 %v2492
    %v2538 = vpop.xlane.xlu0 %2537
    %2539 = vmax.xlane.f32.xlu0 %v2493
    %v2540 = vpop.xlane.xlu0 %2539
    %2541 = vmax.xlane.f32.xlu0 %v2494
    %v2542 = vpop.xlane.xlu0 %2541
    %2543 = vmax.xlane.f32.xlu0 %v2495
    %v2544 = vpop.xlane.xlu0 %2543
    %2545 = vmax.xlane.f32.xlu0 %v2496
    %v2546 = vpop.xlane.xlu0 %2545
    %2547 = vmax.xlane.f32.xlu0 %v2497
    %v2548 = vpop.xlane.xlu0 %2547
    %2549 = vmax.xlane.f32.xlu0 %v2498
    %v2550 = vpop.xlane.xlu0 %2549
    %2551 = vmax.xlane.f32.xlu0 %v2499
    %v2552 = vpop.xlane.xlu0 %2551
    %2553 = vmax.xlane.f32.xlu0 %v2500
    %v2554 = vpop.xlane.xlu0 %2553
    %2555 = vmax.xlane.f32.xlu0 %v2501
    %v2556 = vpop.xlane.xlu0 %2555
    %2557 = vmax.xlane.f32.xlu0 %v2502
    %v2558 = vpop.xlane.xlu0 %2557
    %2559 = vmax.xlane.f32.xlu0 %v2503
    %v2560 = vpop.xlane.xlu0 %2559
    %2561 = vmax.xlane.f32.xlu0 %v2504
    %v2562 = vpop.xlane.xlu0 %2561
    %2563 = vmax.xlane.f32.xlu0 %v2505
    %v2564 = vpop.xlane.xlu0 %2563
    %2565 = vmax.xlane.f32.xlu0 %v2506
    %v2566 = vpop.xlane.xlu0 %2565
    %2567 = vmax.xlane.f32.xlu0 %v2507
    %v2568 = vpop.xlane.xlu0 %2567
    %2569 = vmax.xlane.f32.xlu0 %v2508
    %v2570 = vpop.xlane.xlu0 %2569
    %2571 = vmax.xlane.f32.xlu0 %v2509
    %v2572 = vpop.xlane.xlu0 %2571
    %2573 = vmax.xlane.f32.xlu0 %v2510
    %v2574 = vpop.xlane.xlu0 %2573
    %v2575 = vmul.f32 %v2512, 1.442695
    %v2576 = vpow.pop %v2575
    %v2577 = vmul.f32 %v2514, 1.442695
    %v2578 = vpow.pop %v2577
    %v2579 = vmul.f32 %v2516, 1.442695
    %v2580 = vpow.pop %v2579
    %v2581 = vmul.f32 %v2518, 1.442695
    %v2582 = vpow.pop %v2581
    %v2583 = vmul.f32 %v2520, 1.442695
    %v2584 = vpow.pop %v2583
    %v2585 = vmul.f32 %v2522, 1.442695
    %v2586 = vpow.pop %v2585
    %v2587 = vmul.f32 %v2524, 1.442695
    %v2588 = vpow.pop %v2587
    %v2589 = vmul.f32 %v2526, 1.442695
    %v2590 = vpow.pop %v2589
    %v2591 = vmul.f32 %v2528, 1.442695
    %v2592 = vpow.pop %v2591
    %v2593 = vmul.f32 %v2530, 1.442695
    %v2594 = vpow.pop %v2593
    %v2595 = vmul.f32 %v2532, 1.442695
    %v2596 = vpow.pop %v2595
    %v2597 = vmul.f32 %v2534, 1.442695
    %v2598 = vpow.pop %v2597
    %v2599 = vmul.f32 %v2536, 1.442695
    %v2600 = vpow.pop %v2599
    %v2601 = vmul.f32 %v2538, 1.442695
    %v2602 = vpow.pop %v2601
    %v2603 = vmul.f32 %v2540, 1.442695
    %v2604 = vpow.pop %v2603
    %v2605 = vmul.f32 %v2542, 1.442695
    %v2606 = vpow.pop %v2605
    %v2607 = vmul.f32 %v2544, 1.442695
    %v2608 = vpow.pop %v2607
    %v2609 = vmul.f32 %v2546, 1.442695
    %v2610 = vpow.pop %v2609
    %v2611 = vmul.f32 %v2548, 1.442695
    %v2612 = vpow.pop %v2611
    %v2613 = vmul.f32 %v2550, 1.442695
    %v2614 = vpow.pop %v2613
    %v2615 = vmul.f32 %v2552, 1.442695
    %v2616 = vpow.pop %v2615
    %v2617 = vmul.f32 %v2554, 1.442695
    %v2618 = vpow.pop %v2617
    %v2619 = vmul.f32 %v2556, 1.442695
    %v2620 = vpow.pop %v2619
    %v2621 = vmul.f32 %v2558, 1.442695
    %v2622 = vpow.pop %v2621
    %v2623 = vmul.f32 %v2560, 1.442695
    %v2624 = vpow.pop %v2623
    %v2625 = vmul.f32 %v2562, 1.442695
    %v2626 = vpow.pop %v2625
    %v2627 = vmul.f32 %v2564, 1.442695
    %v2628 = vpow.pop %v2627
    %v2629 = vmul.f32 %v2566, 1.442695
    %v2630 = vpow.pop %v2629
    %v2631 = vmul.f32 %v2568, 1.442695
    %v2632 = vpow.pop %v2631
    %v2633 = vmul.f32 %v2570, 1.442695
    %v2634 = vpow.pop %v2633
    %v2635 = vmul.f32 %v2572, 1.442695
    %v2636 = vpow.pop %v2635
    %v2637 = vmul.f32 %v2574, 1.442695
    %v2638 = vpow.pop %v2637
    %v2671 = vlaneseq
    %v2672 = vshrl.u32 %v2671, 7
    %v2673 = vsub.s32 %v126, %v2672
    %v2674 = vrot.slane %v1988, %v2673
    %v2675 = vlaneseq
    %v2676 = vshrl.u32 %v2675, 7
    %v2677 = vsub.s32 %v988, %v2676
    %v2678 = vrot.slane %v1990, %v2677
    %v2679 = vsel %vm993, %v2678, %v2674
    %v2680 = vlaneseq
    %v2681 = vshrl.u32 %v2680, 7
    %v2682 = vsub.s32 %v995, %v2681
    %v2683 = vrot.slane %v1992, %v2682
    %v2684 = vsel %vm1000, %v2683, %v2679
    %v2685 = vlaneseq
    %v2686 = vshrl.u32 %v2685, 7
    %v2687 = vsub.s32 %v1002, %v2686
    %v2688 = vrot.slane %v1994, %v2687
    %v2689 = vsel %vm1007, %v2688, %v2684
    %v2690 = vlaneseq
    %v2691 = vshrl.u32 %v2690, 7
    %v2692 = vsub.s32 %v126, %v2691
    %v2693 = vrot.slane %v1996, %v2692
    %v2694 = vlaneseq
    %v2695 = vshrl.u32 %v2694, 7
    %v2696 = vsub.s32 %v988, %v2695
    %v2697 = vrot.slane %v1998, %v2696
    %v2698 = vsel %vm993, %v2697, %v2693
    %v2699 = vlaneseq
    %v2700 = vshrl.u32 %v2699, 7
    %v2701 = vsub.s32 %v995, %v2700
    %v2702 = vrot.slane %v2000, %v2701
    %v2703 = vsel %vm1000, %v2702, %v2698
    %v2704 = vlaneseq
    %v2705 = vshrl.u32 %v2704, 7
    %v2706 = vsub.s32 %v1002, %v2705
    %v2707 = vrot.slane %v2002, %v2706
    %v2708 = vsel %vm1007, %v2707, %v2703
    %v2709 = vlaneseq
    %v2710 = vshrl.u32 %v2709, 7
    %v2711 = vsub.s32 %v126, %v2710
    %v2712 = vrot.slane %v2004, %v2711
    %v2713 = vlaneseq
    %v2714 = vshrl.u32 %v2713, 7
    %v2715 = vsub.s32 %v988, %v2714
    %v2716 = vrot.slane %v2006, %v2715
    %v2717 = vsel %vm993, %v2716, %v2712
    %v2718 = vlaneseq
    %v2719 = vshrl.u32 %v2718, 7
    %v2720 = vsub.s32 %v995, %v2719
    %v2721 = vrot.slane %v2008, %v2720
    %v2722 = vsel %vm1000, %v2721, %v2717
    %v2723 = vlaneseq
    %v2724 = vshrl.u32 %v2723, 7
    %v2725 = vsub.s32 %v1002, %v2724
    %v2726 = vrot.slane %v2010, %v2725
    %v2727 = vsel %vm1007, %v2726, %v2722
    %v2728 = vlaneseq
    %v2729 = vshrl.u32 %v2728, 7
    %v2730 = vsub.s32 %v126, %v2729
    %v2731 = vrot.slane %v2012, %v2730
    %v2732 = vlaneseq
    %v2733 = vshrl.u32 %v2732, 7
    %v2734 = vsub.s32 %v988, %v2733
    %v2735 = vrot.slane %v2014, %v2734
    %v2736 = vsel %vm993, %v2735, %v2731
    %v2737 = vlaneseq
    %v2738 = vshrl.u32 %v2737, 7
    %v2739 = vsub.s32 %v995, %v2738
    %v2740 = vrot.slane %v2016, %v2739
    %v2741 = vsel %vm1000, %v2740, %v2736
    %v2742 = vlaneseq
    %v2743 = vshrl.u32 %v2742, 7
    %v2744 = vsub.s32 %v1002, %v2743
    %v2745 = vrot.slane %v2018, %v2744
    %v2746 = vsel %vm1007, %v2745, %v2741
    %v2747 = vlaneseq
    %v2748 = vshrl.u32 %v2747, 7
    %v2749 = vsub.s32 %v126, %v2748
    %v2750 = vrot.slane %v2020, %v2749
    %v2751 = vlaneseq
    %v2752 = vshrl.u32 %v2751, 7
    %v2753 = vsub.s32 %v988, %v2752
    %v2754 = vrot.slane %v2022, %v2753
    %v2755 = vsel %vm993, %v2754, %v2750
    %v2756 = vlaneseq
    %v2757 = vshrl.u32 %v2756, 7
    %v2758 = vsub.s32 %v995, %v2757
    %v2759 = vrot.slane %v2024, %v2758
    %v2760 = vsel %vm1000, %v2759, %v2755
    %v2761 = vlaneseq
    %v2762 = vshrl.u32 %v2761, 7
    %v2763 = vsub.s32 %v1002, %v2762
    %v2764 = vrot.slane %v2026, %v2763
    %v2765 = vsel %vm1007, %v2764, %v2760
    %v2766 = vlaneseq
    %v2767 = vshrl.u32 %v2766, 7
    %v2768 = vsub.s32 %v126, %v2767
    %v2769 = vrot.slane %v2028, %v2768
    %v2770 = vlaneseq
    %v2771 = vshrl.u32 %v2770, 7
    %v2772 = vsub.s32 %v988, %v2771
    %v2773 = vrot.slane %v2030, %v2772
    %v2774 = vsel %vm993, %v2773, %v2769
    %v2775 = vlaneseq
    %v2776 = vshrl.u32 %v2775, 7
    %v2777 = vsub.s32 %v995, %v2776
    %v2778 = vrot.slane %v2032, %v2777
    %v2779 = vsel %vm1000, %v2778, %v2774
    %v2780 = vlaneseq
    %v2781 = vshrl.u32 %v2780, 7
    %v2782 = vsub.s32 %v1002, %v2781
    %v2783 = vrot.slane %v2034, %v2782
    %v2784 = vsel %vm1007, %v2783, %v2779
    %v2785 = vlaneseq
    %v2786 = vshrl.u32 %v2785, 7
    %v2787 = vsub.s32 %v126, %v2786
    %v2788 = vrot.slane %v2036, %v2787
    %v2789 = vlaneseq
    %v2790 = vshrl.u32 %v2789, 7
    %v2791 = vsub.s32 %v988, %v2790
    %v2792 = vrot.slane %v2038, %v2791
    %v2793 = vsel %vm993, %v2792, %v2788
    %v2794 = vlaneseq
    %v2795 = vshrl.u32 %v2794, 7
    %v2796 = vsub.s32 %v995, %v2795
    %v2797 = vrot.slane %v2040, %v2796
    %v2798 = vsel %vm1000, %v2797, %v2793
    %v2799 = vlaneseq
    %v2800 = vshrl.u32 %v2799, 7
    %v2801 = vsub.s32 %v1002, %v2800
    %v2802 = vrot.slane %v2042, %v2801
    %v2803 = vsel %vm1007, %v2802, %v2798
    %v2804 = vlaneseq
    %v2805 = vshrl.u32 %v2804, 7
    %v2806 = vsub.s32 %v126, %v2805
    %v2807 = vrot.slane %v2044, %v2806
    %v2808 = vlaneseq
    %v2809 = vshrl.u32 %v2808, 7
    %v2810 = vsub.s32 %v988, %v2809
    %v2811 = vrot.slane %v2046, %v2810
    %v2812 = vsel %vm993, %v2811, %v2807
    %v2813 = vlaneseq
    %v2814 = vshrl.u32 %v2813, 7
    %v2815 = vsub.s32 %v995, %v2814
    %v2816 = vrot.slane %v2048, %v2815
    %v2817 = vsel %vm1000, %v2816, %v2812
    %v2818 = vlaneseq
    %v2819 = vshrl.u32 %v2818, 7
    %v2820 = vsub.s32 %v1002, %v2819
    %v2821 = vrot.slane %v2050, %v2820
    %v2822 = vsel %vm1007, %v2821, %v2817
    %v2823 = vsel %vm1142, %v2708, %v2689
    %v2824 = vsel %vm1144, %v2727, %v2823
    %v2825 = vsel %vm1146, %v2746, %v2824
    %v2826 = vsel %vm1148, %v2765, %v2825
    %v2827 = vsel %vm1150, %v2784, %v2826
    %v2828 = vsel %vm1152, %v2803, %v2827
    %v2829 = vsel %vm1154, %v2822, %v2828
    %v2863 = vlaneseq
    %v2864 = vshrl.u32 %v2863, 7
    %v2865 = vsub.s32 %v1189, %v2864
    %v2866 = vrot.slane %v2184, %v2865
    %v2867 = vlaneseq
    %v2868 = vshrl.u32 %v2867, 7
    %v2869 = vsub.s32 %v1194, %v2868
    %v2870 = vrot.slane %v2186, %v2869
    %v2871 = vsel %vm1199, %v2870, %v2866
    %v2872 = vlaneseq
    %v2873 = vshrl.u32 %v2872, 7
    %v2874 = vsub.s32 %v1201, %v2873
    %v2875 = vrot.slane %v2188, %v2874
    %v2876 = vsel %vm1206, %v2875, %v2871
    %v2877 = vlaneseq
    %v2878 = vshrl.u32 %v2877, 7
    %v2879 = vsub.s32 %v1208, %v2878
    %v2880 = vrot.slane %v2190, %v2879
    %v2881 = vsel %vm1213, %v2880, %v2876
    %v2882 = vlaneseq
    %v2883 = vshrl.u32 %v2882, 7
    %v2884 = vsub.s32 %v1189, %v2883
    %v2885 = vrot.slane %v2192, %v2884
    %v2886 = vlaneseq
    %v2887 = vshrl.u32 %v2886, 7
    %v2888 = vsub.s32 %v1194, %v2887
    %v2889 = vrot.slane %v2194, %v2888
    %v2890 = vsel %vm1199, %v2889, %v2885
    %v2891 = vlaneseq
    %v2892 = vshrl.u32 %v2891, 7
    %v2893 = vsub.s32 %v1201, %v2892
    %v2894 = vrot.slane %v2196, %v2893
    %v2895 = vsel %vm1206, %v2894, %v2890
    %v2896 = vlaneseq
    %v2897 = vshrl.u32 %v2896, 7
    %v2898 = vsub.s32 %v1208, %v2897
    %v2899 = vrot.slane %v2198, %v2898
    %v2900 = vsel %vm1213, %v2899, %v2895
    %v2901 = vlaneseq
    %v2902 = vshrl.u32 %v2901, 7
    %v2903 = vsub.s32 %v1189, %v2902
    %v2904 = vrot.slane %v2200, %v2903
    %v2905 = vlaneseq
    %v2906 = vshrl.u32 %v2905, 7
    %v2907 = vsub.s32 %v1194, %v2906
    %v2908 = vrot.slane %v2202, %v2907
    %v2909 = vsel %vm1199, %v2908, %v2904
    %v2910 = vlaneseq
    %v2911 = vshrl.u32 %v2910, 7
    %v2912 = vsub.s32 %v1201, %v2911
    %v2913 = vrot.slane %v2204, %v2912
    %v2914 = vsel %vm1206, %v2913, %v2909
    %v2915 = vlaneseq
    %v2916 = vshrl.u32 %v2915, 7
    %v2917 = vsub.s32 %v1208, %v2916
    %v2918 = vrot.slane %v2206, %v2917
    %v2919 = vsel %vm1213, %v2918, %v2914
    %v2920 = vlaneseq
    %v2921 = vshrl.u32 %v2920, 7
    %v2922 = vsub.s32 %v1189, %v2921
    %v2923 = vrot.slane %v2208, %v2922
    %v2924 = vlaneseq
    %v2925 = vshrl.u32 %v2924, 7
    %v2926 = vsub.s32 %v1194, %v2925
    %v2927 = vrot.slane %v2210, %v2926
    %v2928 = vsel %vm1199, %v2927, %v2923
    %v2929 = vlaneseq
    %v2930 = vshrl.u32 %v2929, 7
    %v2931 = vsub.s32 %v1201, %v2930
    %v2932 = vrot.slane %v2212, %v2931
    %v2933 = vsel %vm1206, %v2932, %v2928
    %v2934 = vlaneseq
    %v2935 = vshrl.u32 %v2934, 7
    %v2936 = vsub.s32 %v1208, %v2935
    %v2937 = vrot.slane %v2214, %v2936
    %v2938 = vsel %vm1213, %v2937, %v2933
    %v2939 = vlaneseq
    %v2940 = vshrl.u32 %v2939, 7
    %v2941 = vsub.s32 %v1189, %v2940
    %v2942 = vrot.slane %v2216, %v2941
    %v2943 = vlaneseq
    %v2944 = vshrl.u32 %v2943, 7
    %v2945 = vsub.s32 %v1194, %v2944
    %v2946 = vrot.slane %v2218, %v2945
    %v2947 = vsel %vm1199, %v2946, %v2942
    %v2948 = vlaneseq
    %v2949 = vshrl.u32 %v2948, 7
    %v2950 = vsub.s32 %v1201, %v2949
    %v2951 = vrot.slane %v2220, %v2950
    %v2952 = vsel %vm1206, %v2951, %v2947
    %v2953 = vlaneseq
    %v2954 = vshrl.u32 %v2953, 7
    %v2955 = vsub.s32 %v1208, %v2954
    %v2956 = vrot.slane %v2222, %v2955
    %v2957 = vsel %vm1213, %v2956, %v2952
    %v2958 = vlaneseq
    %v2959 = vshrl.u32 %v2958, 7
    %v2960 = vsub.s32 %v1189, %v2959
    %v2961 = vrot.slane %v2224, %v2960
    %v2962 = vlaneseq
    %v2963 = vshrl.u32 %v2962, 7
    %v2964 = vsub.s32 %v1194, %v2963
    %v2965 = vrot.slane %v2226, %v2964
    %v2966 = vsel %vm1199, %v2965, %v2961
    %v2967 = vlaneseq
    %v2968 = vshrl.u32 %v2967, 7
    %v2969 = vsub.s32 %v1201, %v2968
    %v2970 = vrot.slane %v2228, %v2969
    %v2971 = vsel %vm1206, %v2970, %v2966
    %v2972 = vlaneseq
    %v2973 = vshrl.u32 %v2972, 7
    %v2974 = vsub.s32 %v1208, %v2973
    %v2975 = vrot.slane %v2230, %v2974
    %v2976 = vsel %vm1213, %v2975, %v2971
    %v2977 = vlaneseq
    %v2978 = vshrl.u32 %v2977, 7
    %v2979 = vsub.s32 %v1189, %v2978
    %v2980 = vrot.slane %v2232, %v2979
    %v2981 = vlaneseq
    %v2982 = vshrl.u32 %v2981, 7
    %v2983 = vsub.s32 %v1194, %v2982
    %v2984 = vrot.slane %v2234, %v2983
    %v2985 = vsel %vm1199, %v2984, %v2980
    %v2986 = vlaneseq
    %v2987 = vshrl.u32 %v2986, 7
    %v2988 = vsub.s32 %v1201, %v2987
    %v2989 = vrot.slane %v2236, %v2988
    %v2990 = vsel %vm1206, %v2989, %v2985
    %v2991 = vlaneseq
    %v2992 = vshrl.u32 %v2991, 7
    %v2993 = vsub.s32 %v1208, %v2992
    %v2994 = vrot.slane %v2238, %v2993
    %v2995 = vsel %vm1213, %v2994, %v2990
    %v2996 = vlaneseq
    %v2997 = vshrl.u32 %v2996, 7
    %v2998 = vsub.s32 %v1189, %v2997
    %v2999 = vrot.slane %v2240, %v2998
    %v3000 = vlaneseq
    %v3001 = vshrl.u32 %v3000, 7
    %v3002 = vsub.s32 %v1194, %v3001
    %v3003 = vrot.slane %v2242, %v3002
    %v3004 = vsel %vm1199, %v3003, %v2999
    %v3005 = vlaneseq
    %v3006 = vshrl.u32 %v3005, 7
    %v3007 = vsub.s32 %v1201, %v3006
    %v3008 = vrot.slane %v2244, %v3007
    %v3009 = vsel %vm1206, %v3008, %v3004
    %v3010 = vlaneseq
    %v3011 = vshrl.u32 %v3010, 7
    %v3012 = vsub.s32 %v1208, %v3011
    %v3013 = vrot.slane %v2246, %v3012
    %v3014 = vsel %vm1213, %v3013, %v3009
    %v3015 = vsel %vm1142, %v2900, %v2881
    %v3016 = vsel %vm1144, %v2919, %v3015
    %v3017 = vsel %vm1146, %v2938, %v3016
    %v3018 = vsel %vm1148, %v2957, %v3017
    %v3019 = vsel %vm1150, %v2976, %v3018
    %v3020 = vsel %vm1152, %v2995, %v3019
    %v3021 = vsel %vm1154, %v3014, %v3020
    %v3055 = vlaneseq
    %v3056 = vshrl.u32 %v3055, 7
    %v3057 = vsub.s32 %v1388, %v3056
    %v3058 = vrot.slane %v2380, %v3057
    %v3059 = vlaneseq
    %v3060 = vshrl.u32 %v3059, 7
    %v3061 = vsub.s32 %v1393, %v3060
    %v3062 = vrot.slane %v2382, %v3061
    %v3063 = vsel %vm1398, %v3062, %v3058
    %v3064 = vlaneseq
    %v3065 = vshrl.u32 %v3064, 7
    %v3066 = vsub.s32 %v1400, %v3065
    %v3067 = vrot.slane %v2384, %v3066
    %v3068 = vsel %vm1405, %v3067, %v3063
    %v3069 = vlaneseq
    %v3070 = vshrl.u32 %v3069, 7
    %v3071 = vsub.s32 %v1407, %v3070
    %v3072 = vrot.slane %v2386, %v3071
    %v3073 = vsel %vm1412, %v3072, %v3068
    %v3074 = vlaneseq
    %v3075 = vshrl.u32 %v3074, 7
    %v3076 = vsub.s32 %v1388, %v3075
    %v3077 = vrot.slane %v2388, %v3076
    %v3078 = vlaneseq
    %v3079 = vshrl.u32 %v3078, 7
    %v3080 = vsub.s32 %v1393, %v3079
    %v3081 = vrot.slane %v2390, %v3080
    %v3082 = vsel %vm1398, %v3081, %v3077
    %v3083 = vlaneseq
    %v3084 = vshrl.u32 %v3083, 7
    %v3085 = vsub.s32 %v1400, %v3084
    %v3086 = vrot.slane %v2392, %v3085
    %v3087 = vsel %vm1405, %v3086, %v3082
    %v3088 = vlaneseq
    %v3089 = vshrl.u32 %v3088, 7
    %v3090 = vsub.s32 %v1407, %v3089
    %v3091 = vrot.slane %v2394, %v3090
    %v3092 = vsel %vm1412, %v3091, %v3087
    %v3093 = vlaneseq
    %v3094 = vshrl.u32 %v3093, 7
    %v3095 = vsub.s32 %v1388, %v3094
    %v3096 = vrot.slane %v2396, %v3095
    %v3097 = vlaneseq
    %v3098 = vshrl.u32 %v3097, 7
    %v3099 = vsub.s32 %v1393, %v3098
    %v3100 = vrot.slane %v2398, %v3099
    %v3101 = vsel %vm1398, %v3100, %v3096
    %v3102 = vlaneseq
    %v3103 = vshrl.u32 %v3102, 7
    %v3104 = vsub.s32 %v1400, %v3103
    %v3105 = vrot.slane %v2400, %v3104
    %v3106 = vsel %vm1405, %v3105, %v3101
    %v3107 = vlaneseq
    %v3108 = vshrl.u32 %v3107, 7
    %v3109 = vsub.s32 %v1407, %v3108
    %v3110 = vrot.slane %v2402, %v3109
    %v3111 = vsel %vm1412, %v3110, %v3106
    %v3112 = vlaneseq
    %v3113 = vshrl.u32 %v3112, 7
    %v3114 = vsub.s32 %v1388, %v3113
    %v3115 = vrot.slane %v2404, %v3114
    %v3116 = vlaneseq
    %v3117 = vshrl.u32 %v3116, 7
    %v3118 = vsub.s32 %v1393, %v3117
    %v3119 = vrot.slane %v2406, %v3118
    %v3120 = vsel %vm1398, %v3119, %v3115
    %v3121 = vlaneseq
    %v3122 = vshrl.u32 %v3121, 7
    %v3123 = vsub.s32 %v1400, %v3122
    %v3124 = vrot.slane %v2408, %v3123
    %v3125 = vsel %vm1405, %v3124, %v3120
    %v3126 = vlaneseq
    %v3127 = vshrl.u32 %v3126, 7
    %v3128 = vsub.s32 %v1407, %v3127
    %v3129 = vrot.slane %v2410, %v3128
    %v3130 = vsel %vm1412, %v3129, %v3125
    %v3131 = vlaneseq
    %v3132 = vshrl.u32 %v3131, 7
    %v3133 = vsub.s32 %v1388, %v3132
    %v3134 = vrot.slane %v2412, %v3133
    %v3135 = vlaneseq
    %v3136 = vshrl.u32 %v3135, 7
    %v3137 = vsub.s32 %v1393, %v3136
    %v3138 = vrot.slane %v2414, %v3137
    %v3139 = vsel %vm1398, %v3138, %v3134
    %v3140 = vlaneseq
    %v3141 = vshrl.u32 %v3140, 7
    %v3142 = vsub.s32 %v1400, %v3141
    %v3143 = vrot.slane %v2416, %v3142
    %v3144 = vsel %vm1405, %v3143, %v3139
    %v3145 = vlaneseq
    %v3146 = vshrl.u32 %v3145, 7
    %v3147 = vsub.s32 %v1407, %v3146
    %v3148 = vrot.slane %v2418, %v3147
    %v3149 = vsel %vm1412, %v3148, %v3144
    %v3150 = vlaneseq
    %v3151 = vshrl.u32 %v3150, 7
    %v3152 = vsub.s32 %v1388, %v3151
    %v3153 = vrot.slane %v2420, %v3152
    %v3154 = vlaneseq
    %v3155 = vshrl.u32 %v3154, 7
    %v3156 = vsub.s32 %v1393, %v3155
    %v3157 = vrot.slane %v2422, %v3156
    %v3158 = vsel %vm1398, %v3157, %v3153
    %v3159 = vlaneseq
    %v3160 = vshrl.u32 %v3159, 7
    %v3161 = vsub.s32 %v1400, %v3160
    %v3162 = vrot.slane %v2424, %v3161
    %v3163 = vsel %vm1405, %v3162, %v3158
    %v3164 = vlaneseq
    %v3165 = vshrl.u32 %v3164, 7
    %v3166 = vsub.s32 %v1407, %v3165
    %v3167 = vrot.slane %v2426, %v3166
    %v3168 = vsel %vm1412, %v3167, %v3163
    %v3169 = vlaneseq
    %v3170 = vshrl.u32 %v3169, 7
    %v3171 = vsub.s32 %v1388, %v3170
    %v3172 = vrot.slane %v2428, %v3171
    %v3173 = vlaneseq
    %v3174 = vshrl.u32 %v3173, 7
    %v3175 = vsub.s32 %v1393, %v3174
    %v3176 = vrot.slane %v2430, %v3175
    %v3177 = vsel %vm1398, %v3176, %v3172
    %v3178 = vlaneseq
    %v3179 = vshrl.u32 %v3178, 7
    %v3180 = vsub.s32 %v1400, %v3179
    %v3181 = vrot.slane %v2432, %v3180
    %v3182 = vsel %vm1405, %v3181, %v3177
    %v3183 = vlaneseq
    %v3184 = vshrl.u32 %v3183, 7
    %v3185 = vsub.s32 %v1407, %v3184
    %v3186 = vrot.slane %v2434, %v3185
    %v3187 = vsel %vm1412, %v3186, %v3182
    %v3188 = vlaneseq
    %v3189 = vshrl.u32 %v3188, 7
    %v3190 = vsub.s32 %v1388, %v3189
    %v3191 = vrot.slane %v2436, %v3190
    %v3192 = vlaneseq
    %v3193 = vshrl.u32 %v3192, 7
    %v3194 = vsub.s32 %v1393, %v3193
    %v3195 = vrot.slane %v2438, %v3194
    %v3196 = vsel %vm1398, %v3195, %v3191
    %v3197 = vlaneseq
    %v3198 = vshrl.u32 %v3197, 7
    %v3199 = vsub.s32 %v1400, %v3198
    %v3200 = vrot.slane %v2440, %v3199
    %v3201 = vsel %vm1405, %v3200, %v3196
    %v3202 = vlaneseq
    %v3203 = vshrl.u32 %v3202, 7
    %v3204 = vsub.s32 %v1407, %v3203
    %v3205 = vrot.slane %v2442, %v3204
    %v3206 = vsel %vm1412, %v3205, %v3201
    %v3207 = vsel %vm1142, %v3092, %v3073
    %v3208 = vsel %vm1144, %v3111, %v3207
    %v3209 = vsel %vm1146, %v3130, %v3208
    %v3210 = vsel %vm1148, %v3149, %v3209
    %v3211 = vsel %vm1150, %v3168, %v3210
    %v3212 = vsel %vm1152, %v3187, %v3211
    %v3213 = vsel %vm1154, %v3206, %v3212
    %v3247 = vlaneseq
    %v3248 = vshrl.u32 %v3247, 7
    %v3249 = vsub.s32 %v1587, %v3248
    %v3250 = vrot.slane %v2576, %v3249
    %v3251 = vlaneseq
    %v3252 = vshrl.u32 %v3251, 7
    %v3253 = vsub.s32 %v1592, %v3252
    %v3254 = vrot.slane %v2578, %v3253
    %v3255 = vsel %vm1597, %v3254, %v3250
    %v3256 = vlaneseq
    %v3257 = vshrl.u32 %v3256, 7
    %v3258 = vsub.s32 %v1599, %v3257
    %v3259 = vrot.slane %v2580, %v3258
    %v3260 = vsel %vm1604, %v3259, %v3255
    %v3261 = vlaneseq
    %v3262 = vshrl.u32 %v3261, 7
    %v3263 = vsub.s32 %v1606, %v3262
    %v3264 = vrot.slane %v2582, %v3263
    %v3265 = vsel %vm1611, %v3264, %v3260
    %v3266 = vlaneseq
    %v3267 = vshrl.u32 %v3266, 7
    %v3268 = vsub.s32 %v1587, %v3267
    %v3269 = vrot.slane %v2584, %v3268
    %v3270 = vlaneseq
    %v3271 = vshrl.u32 %v3270, 7
    %v3272 = vsub.s32 %v1592, %v3271
    %v3273 = vrot.slane %v2586, %v3272
    %v3274 = vsel %vm1597, %v3273, %v3269
    %v3275 = vlaneseq
    %v3276 = vshrl.u32 %v3275, 7
    %v3277 = vsub.s32 %v1599, %v3276
    %v3278 = vrot.slane %v2588, %v3277
    %v3279 = vsel %vm1604, %v3278, %v3274
    %v3280 = vlaneseq
    %v3281 = vshrl.u32 %v3280, 7
    %v3282 = vsub.s32 %v1606, %v3281
    %v3283 = vrot.slane %v2590, %v3282
    %v3284 = vsel %vm1611, %v3283, %v3279
    %v3285 = vlaneseq
    %v3286 = vshrl.u32 %v3285, 7
    %v3287 = vsub.s32 %v1587, %v3286
    %v3288 = vrot.slane %v2592, %v3287
    %v3289 = vlaneseq
    %v3290 = vshrl.u32 %v3289, 7
    %v3291 = vsub.s32 %v1592, %v3290
    %v3292 = vrot.slane %v2594, %v3291
    %v3293 = vsel %vm1597, %v3292, %v3288
    %v3294 = vlaneseq
    %v3295 = vshrl.u32 %v3294, 7
    %v3296 = vsub.s32 %v1599, %v3295
    %v3297 = vrot.slane %v2596, %v3296
    %v3298 = vsel %vm1604, %v3297, %v3293
    %v3299 = vlaneseq
    %v3300 = vshrl.u32 %v3299, 7
    %v3301 = vsub.s32 %v1606, %v3300
    %v3302 = vrot.slane %v2598, %v3301
    %v3303 = vsel %vm1611, %v3302, %v3298
    %v3304 = vlaneseq
    %v3305 = vshrl.u32 %v3304, 7
    %v3306 = vsub.s32 %v1587, %v3305
    %v3307 = vrot.slane %v2600, %v3306
    %v3308 = vlaneseq
    %v3309 = vshrl.u32 %v3308, 7
    %v3310 = vsub.s32 %v1592, %v3309
    %v3311 = vrot.slane %v2602, %v3310
    %v3312 = vsel %vm1597, %v3311, %v3307
    %v3313 = vlaneseq
    %v3314 = vshrl.u32 %v3313, 7
    %v3315 = vsub.s32 %v1599, %v3314
    %v3316 = vrot.slane %v2604, %v3315
    %v3317 = vsel %vm1604, %v3316, %v3312
    %v3318 = vlaneseq
    %v3319 = vshrl.u32 %v3318, 7
    %v3320 = vsub.s32 %v1606, %v3319
    %v3321 = vrot.slane %v2606, %v3320
    %v3322 = vsel %vm1611, %v3321, %v3317
    %v3323 = vlaneseq
    %v3324 = vshrl.u32 %v3323, 7
    %v3325 = vsub.s32 %v1587, %v3324
    %v3326 = vrot.slane %v2608, %v3325
    %v3327 = vlaneseq
    %v3328 = vshrl.u32 %v3327, 7
    %v3329 = vsub.s32 %v1592, %v3328
    %v3330 = vrot.slane %v2610, %v3329
    %v3331 = vsel %vm1597, %v3330, %v3326
    %v3332 = vlaneseq
    %v3333 = vshrl.u32 %v3332, 7
    %v3334 = vsub.s32 %v1599, %v3333
    %v3335 = vrot.slane %v2612, %v3334
    %v3336 = vsel %vm1604, %v3335, %v3331
    %v3337 = vlaneseq
    %v3338 = vshrl.u32 %v3337, 7
    %v3339 = vsub.s32 %v1606, %v3338
    %v3340 = vrot.slane %v2614, %v3339
    %v3341 = vsel %vm1611, %v3340, %v3336
    %v3342 = vlaneseq
    %v3343 = vshrl.u32 %v3342, 7
    %v3344 = vsub.s32 %v1587, %v3343
    %v3345 = vrot.slane %v2616, %v3344
    %v3346 = vlaneseq
    %v3347 = vshrl.u32 %v3346, 7
    %v3348 = vsub.s32 %v1592, %v3347
    %v3349 = vrot.slane %v2618, %v3348
    %v3350 = vsel %vm1597, %v3349, %v3345
    %v3351 = vlaneseq
    %v3352 = vshrl.u32 %v3351, 7
    %v3353 = vsub.s32 %v1599, %v3352
    %v3354 = vrot.slane %v2620, %v3353
    %v3355 = vsel %vm1604, %v3354, %v3350
    %v3356 = vlaneseq
    %v3357 = vshrl.u32 %v3356, 7
    %v3358 = vsub.s32 %v1606, %v3357
    %v3359 = vrot.slane %v2622, %v3358
    %v3360 = vsel %vm1611, %v3359, %v3355
    %v3361 = vlaneseq
    %v3362 = vshrl.u32 %v3361, 7
    %v3363 = vsub.s32 %v1587, %v3362
    %v3364 = vrot.slane %v2624, %v3363
    %v3365 = vlaneseq
    %v3366 = vshrl.u32 %v3365, 7
    %v3367 = vsub.s32 %v1592, %v3366
    %v3368 = vrot.slane %v2626, %v3367
    %v3369 = vsel %vm1597, %v3368, %v3364
    %v3370 = vlaneseq
    %v3371 = vshrl.u32 %v3370, 7
    %v3372 = vsub.s32 %v1599, %v3371
    %v3373 = vrot.slane %v2628, %v3372
    %v3374 = vsel %vm1604, %v3373, %v3369
    %v3375 = vlaneseq
    %v3376 = vshrl.u32 %v3375, 7
    %v3377 = vsub.s32 %v1606, %v3376
    %v3378 = vrot.slane %v2630, %v3377
    %v3379 = vsel %vm1611, %v3378, %v3374
    %v3380 = vlaneseq
    %v3381 = vshrl.u32 %v3380, 7
    %v3382 = vsub.s32 %v1587, %v3381
    %v3383 = vrot.slane %v2632, %v3382
    %v3384 = vlaneseq
    %v3385 = vshrl.u32 %v3384, 7
    %v3386 = vsub.s32 %v1592, %v3385
    %v3387 = vrot.slane %v2634, %v3386
    %v3388 = vsel %vm1597, %v3387, %v3383
    %v3389 = vlaneseq
    %v3390 = vshrl.u32 %v3389, 7
    %v3391 = vsub.s32 %v1599, %v3390
    %v3392 = vrot.slane %v2636, %v3391
    %v3393 = vsel %vm1604, %v3392, %v3388
    %v3394 = vlaneseq
    %v3395 = vshrl.u32 %v3394, 7
    %v3396 = vsub.s32 %v1606, %v3395
    %v3397 = vrot.slane %v2638, %v3396
    %v3398 = vsel %vm1611, %v3397, %v3393
    %v3399 = vsel %vm1142, %v3284, %v3265
    %v3400 = vsel %vm1144, %v3303, %v3399
    %v3401 = vsel %vm1146, %v3322, %v3400
    %v3402 = vsel %vm1148, %v3341, %v3401
    %v3403 = vsel %vm1150, %v3360, %v3402
    %v3404 = vsel %vm1152, %v3379, %v3403
    %v3405 = vsel %vm1154, %v3398, %v3404
    %v3407 = vsel %vm1754, %v2829, %v3021
    %v3408 = vsel %vm1756, %v3407, %v3213
    %v3409 = vsel %vm1758, %v3408, %v3405
    %v3410 = vmax.f32 %v3409, 0.0
    %v3411 = vmax.f32 %v3410, 1e-30
    %v3412 = vlog2.pop %v3411
    %v3413 = vmul.f32 %v3412, 0.6931472
    %v3415 = vcombine.high %v3413, %v3413
    %v3417 = vunpack.c.l.s4 1966171168
    %v3418 = vunpack.c.0.s8 %v3417
    %v3419 = vlaneseq
    %v3420 = vshrl.u32 %v3419, 7
    %v3421 = vsub.s32 %v3418, %v3420
    %v3422 = vrot.slane %v3413, %v3421
    %v3424 = vunpack.c.l.s4 1966171168
    %v3425 = vunpack.c.0.s8 %v3424
    %v3426 = vlaneseq
    %v3427 = vshrl.u32 %v3426, 7
    %v3428 = vsub.s32 %v3425, %v3427
    %v3429 = vrot.slane %v3415, %v3428
    %v3430 = vcombine.high %v3422, %v3422
    %v3431 = vcombine.high %v3429, %v3429
    %v3433 = vunpack.c.l.s4 1966171168
    %v3434 = vunpack.c.0.s8 %v3433
    %v3435 = vlaneseq
    %v3436 = vshrl.u32 %v3435, 7
    %v3437 = vsub.s32 %v3434, %v3436
    %v3438 = vrot.slane %v3422, %v3437
    %v3440 = vunpack.c.l.s4 1966171168
    %v3441 = vunpack.c.0.s8 %v3440
    %v3442 = vlaneseq
    %v3443 = vshrl.u32 %v3442, 7
    %v3444 = vsub.s32 %v3441, %v3443
    %v3445 = vrot.slane %v3429, %v3444
    %v3447 = vunpack.c.l.s4 1966171168
    %v3448 = vunpack.c.0.s8 %v3447
    %v3449 = vlaneseq
    %v3450 = vshrl.u32 %v3449, 7
    %v3451 = vsub.s32 %v3448, %v3450
    %v3452 = vrot.slane %v3430, %v3451
    %v3454 = vunpack.c.l.s4 1966171168
    %v3455 = vunpack.c.0.s8 %v3454
    %v3456 = vlaneseq
    %v3457 = vshrl.u32 %v3456, 7
    %v3458 = vsub.s32 %v3455, %v3457
    %v3459 = vrot.slane %v3431, %v3458
    %v3460 = vcombine.high %v3438, %v3438
    %v3461 = vcombine.high %v3445, %v3445
    %v3462 = vcombine.high %v3452, %v3452
    %v3463 = vcombine.high %v3459, %v3459
    %vm3464 = vcmp.lt.s32.totalorder %v126, 8
    %v3465 = vld [vmem:[#allocation8] sm:$0xff]
    %v3466 = vld [vmem:[#allocation8 + $0x8] sm:$0xff]
    %v3467 = vld [vmem:[#allocation8 + $0x10] sm:$0xff]
    %v3468 = vld [vmem:[#allocation8 + $0x18] sm:$0xff]
    %v3469 = vlaneseq
    %v3470 = vshrl.u32 %v3469, 7
    %v3471 = vsub.s32 0, %v3470
    %v3472 = vrot.slane %v3438, %v3471
    %v3473 = vlaneseq
    %v3474 = vshrl.u32 %v3473, 7
    %v3475 = vsub.s32 0, %v3474
    %v3476 = vrot.slane %v3452, %v3475
    %v3477 = vlaneseq
    %v3478 = vshrl.u32 %v3477, 7
    %v3479 = vsub.s32 0, %v3478
    %v3480 = vrot.slane %v3460, %v3479
    %v3481 = vlaneseq
    %v3482 = vshrl.u32 %v3481, 7
    %v3483 = vsub.s32 0, %v3482
    %v3484 = vrot.slane %v3462, %v3483
    %v3485 = vlaneseq
    %v3486 = vshrl.u32 %v3485, 7
    %v3487 = vsub.s32 0, %v3486
    %v3488 = vrot.slane %v3445, %v3487
    %v3489 = vlaneseq
    %v3490 = vshrl.u32 %v3489, 7
    %v3491 = vsub.s32 0, %v3490
    %v3492 = vrot.slane %v3459, %v3491
    %v3493 = vlaneseq
    %v3494 = vshrl.u32 %v3493, 7
    %v3495 = vsub.s32 0, %v3494
    %v3496 = vrot.slane %v3461, %v3495
    %v3497 = vlaneseq
    %v3498 = vshrl.u32 %v3497, 7
    %v3499 = vsub.s32 0, %v3498
    %v3500 = vrot.slane %v3463, %v3499
    %v3509 = vmul.f32 %v3465, %v3472
    %v3510 = vmul.f32 %v3466, %v3472
    %v3511 = vmul.f32 %v3467, %v3472
    %v3512 = vmul.f32 %v3468, %v3472
    %v3513 = vmul.f32 %v3465, %v3476
    %v3514 = vmul.f32 %v3466, %v3476
    %v3515 = vmul.f32 %v3467, %v3476
    %v3516 = vmul.f32 %v3468, %v3476
    %v3517 = vmul.f32 %v3465, %v3480
    %v3518 = vmul.f32 %v3466, %v3480
    %v3519 = vmul.f32 %v3467, %v3480
    %v3520 = vmul.f32 %v3468, %v3480
    %v3521 = vmul.f32 %v3465, %v3484
    %v3522 = vmul.f32 %v3466, %v3484
    %v3523 = vmul.f32 %v3467, %v3484
    %v3524 = vmul.f32 %v3468, %v3484
    %v3525 = vmul.f32 %v3465, %v3488
    %v3526 = vmul.f32 %v3466, %v3488
    %v3527 = vmul.f32 %v3467, %v3488
    %v3528 = vmul.f32 %v3468, %v3488
    %v3529 = vmul.f32 %v3465, %v3492
    %v3530 = vmul.f32 %v3466, %v3492
    %v3531 = vmul.f32 %v3467, %v3492
    %v3532 = vmul.f32 %v3468, %v3492
    %v3533 = vmul.f32 %v3465, %v3496
    %v3534 = vmul.f32 %v3466, %v3496
    %v3535 = vmul.f32 %v3467, %v3496
    %v3536 = vmul.f32 %v3468, %v3496
    %v3537 = vmul.f32 %v3465, %v3500
    %v3538 = vmul.f32 %v3466, %v3500
    %v3539 = vmul.f32 %v3467, %v3500
    %v3540 = vmul.f32 %v3468, %v3500
    %v3541 = vmul.f32 %v3509, 1.442695
    %v3542 = vpow.pop %v3541
    %v3543 = vmul.f32 %v3510, 1.442695
    %v3544 = vpow.pop %v3543
    %v3545 = vmul.f32 %v3511, 1.442695
    %v3546 = vpow.pop %v3545
    %v3547 = vmul.f32 %v3512, 1.442695
    %v3548 = vpow.pop %v3547
    %v3549 = vmul.f32 %v3513, 1.442695
    %v3550 = vpow.pop %v3549
    %v3551 = vmul.f32 %v3514, 1.442695
    %v3552 = vpow.pop %v3551
    %v3553 = vmul.f32 %v3515, 1.442695
    %v3554 = vpow.pop %v3553
    %v3555 = vmul.f32 %v3516, 1.442695
    %v3556 = vpow.pop %v3555
    %v3557 = vmul.f32 %v3517, 1.442695
    %v3558 = vpow.pop %v3557
    %v3559 = vmul.f32 %v3518, 1.442695
    %v3560 = vpow.pop %v3559
    %v3561 = vmul.f32 %v3519, 1.442695
    %v3562 = vpow.pop %v3561
    %v3563 = vmul.f32 %v3520, 1.442695
    %v3564 = vpow.pop %v3563
    %v3565 = vmul.f32 %v3521, 1.442695
    %v3566 = vpow.pop %v3565
    %v3567 = vmul.f32 %v3522, 1.442695
    %v3568 = vpow.pop %v3567
    %v3569 = vmul.f32 %v3523, 1.442695
    %v3570 = vpow.pop %v3569
    %v3571 = vmul.f32 %v3524, 1.442695
    %v3572 = vpow.pop %v3571
    %v3573 = vmul.f32 %v3525, 1.442695
    %v3574 = vpow.pop %v3573
    %v3575 = vmul.f32 %v3526, 1.442695
    %v3576 = vpow.pop %v3575
    %v3577 = vmul.f32 %v3527, 1.442695
    %v3578 = vpow.pop %v3577
    %v3579 = vmul.f32 %v3528, 1.442695
    %v3580 = vpow.pop %v3579
    %v3581 = vmul.f32 %v3529, 1.442695
    %v3582 = vpow.pop %v3581
    %v3583 = vmul.f32 %v3530, 1.442695
    %v3584 = vpow.pop %v3583
    %v3585 = vmul.f32 %v3531, 1.442695
    %v3586 = vpow.pop %v3585
    %v3587 = vmul.f32 %v3532, 1.442695
    %v3588 = vpow.pop %v3587
    %v3589 = vmul.f32 %v3533, 1.442695
    %v3590 = vpow.pop %v3589
    %v3591 = vmul.f32 %v3534, 1.442695
    %v3592 = vpow.pop %v3591
    %v3593 = vmul.f32 %v3535, 1.442695
    %v3594 = vpow.pop %v3593
    %v3595 = vmul.f32 %v3536, 1.442695
    %v3596 = vpow.pop %v3595
    %v3597 = vmul.f32 %v3537, 1.442695
    %v3598 = vpow.pop %v3597
    %v3599 = vmul.f32 %v3538, 1.442695
    %v3600 = vpow.pop %v3599
    %v3601 = vmul.f32 %v3539, 1.442695
    %v3602 = vpow.pop %v3601
    %v3603 = vmul.f32 %v3540, 1.442695
    %v3604 = vpow.pop %v3603
    %v3605 = vsel %vm3464, %v3542, 0.0
    %v3606 = vsel %vm3464, %v3544, 0.0
    %v3607 = vsel %vm3464, %v3546, 0.0
    %v3608 = vsel %vm3464, %v3548, 0.0
    %v3609 = vsel %vm3464, %v3550, 0.0
    %v3610 = vsel %vm3464, %v3552, 0.0
    %v3611 = vsel %vm3464, %v3554, 0.0
    %v3612 = vsel %vm3464, %v3556, 0.0
    %v3613 = vsel %vm3464, %v3558, 0.0
    %v3614 = vsel %vm3464, %v3560, 0.0
    %v3615 = vsel %vm3464, %v3562, 0.0
    %v3616 = vsel %vm3464, %v3564, 0.0
    %v3617 = vsel %vm3464, %v3566, 0.0
    %v3618 = vsel %vm3464, %v3568, 0.0
    %v3619 = vsel %vm3464, %v3570, 0.0
    %v3620 = vsel %vm3464, %v3572, 0.0
    %v3621 = vsel %vm3464, %v3574, 0.0
    %v3622 = vsel %vm3464, %v3576, 0.0
    %v3623 = vsel %vm3464, %v3578, 0.0
    %v3624 = vsel %vm3464, %v3580, 0.0
    %v3625 = vsel %vm3464, %v3582, 0.0
    %v3626 = vsel %vm3464, %v3584, 0.0
    %v3627 = vsel %vm3464, %v3586, 0.0
    %v3628 = vsel %vm3464, %v3588, 0.0
    %v3629 = vsel %vm3464, %v3590, 0.0
    %v3630 = vsel %vm3464, %v3592, 0.0
    %v3631 = vsel %vm3464, %v3594, 0.0
    %v3632 = vsel %vm3464, %v3596, 0.0
    %v3633 = vsel %vm3464, %v3598, 0.0
    %v3634 = vsel %vm3464, %v3600, 0.0
    %v3635 = vsel %vm3464, %v3602, 0.0
    %v3636 = vsel %vm3464, %v3604, 0.0
    %3637 = vadd.xlane.f32.xlu0 %v3605
    %v3638 = vpop.xlane.xlu0 %3637
    %3639 = vadd.xlane.f32.xlu0 %v3606
    %v3640 = vpop.xlane.xlu0 %3639
    %3641 = vadd.xlane.f32.xlu0 %v3607
    %v3642 = vpop.xlane.xlu0 %3641
    %3643 = vadd.xlane.f32.xlu0 %v3608
    %v3644 = vpop.xlane.xlu0 %3643
    %3645 = vadd.xlane.f32.xlu0 %v3609
    %v3646 = vpop.xlane.xlu0 %3645
    %3647 = vadd.xlane.f32.xlu0 %v3610
    %v3648 = vpop.xlane.xlu0 %3647
    %3649 = vadd.xlane.f32.xlu0 %v3611
    %v3650 = vpop.xlane.xlu0 %3649
    %3651 = vadd.xlane.f32.xlu0 %v3612
    %v3652 = vpop.xlane.xlu0 %3651
    %3653 = vadd.xlane.f32.xlu0 %v3613
    %v3654 = vpop.xlane.xlu0 %3653
    %3655 = vadd.xlane.f32.xlu0 %v3614
    %v3656 = vpop.xlane.xlu0 %3655
    %3657 = vadd.xlane.f32.xlu0 %v3615
    %v3658 = vpop.xlane.xlu0 %3657
    %3659 = vadd.xlane.f32.xlu0 %v3616
    %v3660 = vpop.xlane.xlu0 %3659
    %3661 = vadd.xlane.f32.xlu0 %v3617
    %v3662 = vpop.xlane.xlu0 %3661
    %3663 = vadd.xlane.f32.xlu0 %v3618
    %v3664 = vpop.xlane.xlu0 %3663
    %3665 = vadd.xlane.f32.xlu0 %v3619
    %v3666 = vpop.xlane.xlu0 %3665
    %3667 = vadd.xlane.f32.xlu0 %v3620
    %v3668 = vpop.xlane.xlu0 %3667
    %3669 = vadd.xlane.f32.xlu0 %v3621
    %v3670 = vpop.xlane.xlu0 %3669
    %3671 = vadd.xlane.f32.xlu0 %v3622
    %v3672 = vpop.xlane.xlu0 %3671
    %3673 = vadd.xlane.f32.xlu0 %v3623
    %v3674 = vpop.xlane.xlu0 %3673
    %3675 = vadd.xlane.f32.xlu0 %v3624
    %v3676 = vpop.xlane.xlu0 %3675
    %3677 = vadd.xlane.f32.xlu0 %v3625
    %v3678 = vpop.xlane.xlu0 %3677
    %3679 = vadd.xlane.f32.xlu0 %v3626
    %v3680 = vpop.xlane.xlu0 %3679
    %3681 = vadd.xlane.f32.xlu0 %v3627
    %v3682 = vpop.xlane.xlu0 %3681
    %3683 = vadd.xlane.f32.xlu0 %v3628
    %v3684 = vpop.xlane.xlu0 %3683
    %3685 = vadd.xlane.f32.xlu0 %v3629
    %v3686 = vpop.xlane.xlu0 %3685
    %3687 = vadd.xlane.f32.xlu0 %v3630
    %v3688 = vpop.xlane.xlu0 %3687
    %3689 = vadd.xlane.f32.xlu0 %v3631
    %v3690 = vpop.xlane.xlu0 %3689
    %3691 = vadd.xlane.f32.xlu0 %v3632
    %v3692 = vpop.xlane.xlu0 %3691
    %3693 = vadd.xlane.f32.xlu0 %v3633
    %v3694 = vpop.xlane.xlu0 %3693
    %3695 = vadd.xlane.f32.xlu0 %v3634
    %v3696 = vpop.xlane.xlu0 %3695
    %3697 = vadd.xlane.f32.xlu0 %v3635
    %v3698 = vpop.xlane.xlu0 %3697
    %3699 = vadd.xlane.f32.xlu0 %v3636
    %v3700 = vpop.xlane.xlu0 %3699
    %v3701 = vmul.f32 %v3638, 0.125
    %v3702 = vmul.f32 %v3640, 0.125
    %v3703 = vmul.f32 %v3642, 0.125
    %v3704 = vmul.f32 %v3644, 0.125
    %v3705 = vmul.f32 %v3646, 0.125
    %v3706 = vmul.f32 %v3648, 0.125
    %v3707 = vmul.f32 %v3650, 0.125
    %v3708 = vmul.f32 %v3652, 0.125
    %v3709 = vmul.f32 %v3654, 0.125
    %v3710 = vmul.f32 %v3656, 0.125
    %v3711 = vmul.f32 %v3658, 0.125
    %v3712 = vmul.f32 %v3660, 0.125
    %v3713 = vmul.f32 %v3662, 0.125
    %v3714 = vmul.f32 %v3664, 0.125
    %v3715 = vmul.f32 %v3666, 0.125
    %v3716 = vmul.f32 %v3668, 0.125
    %v3717 = vmul.f32 %v3670, 0.125
    %v3718 = vmul.f32 %v3672, 0.125
    %v3719 = vmul.f32 %v3674, 0.125
    %v3720 = vmul.f32 %v3676, 0.125
    %v3721 = vmul.f32 %v3678, 0.125
    %v3722 = vmul.f32 %v3680, 0.125
    %v3723 = vmul.f32 %v3682, 0.125
    %v3724 = vmul.f32 %v3684, 0.125
    %v3725 = vmul.f32 %v3686, 0.125
    %v3726 = vmul.f32 %v3688, 0.125
    %v3727 = vmul.f32 %v3690, 0.125
    %v3728 = vmul.f32 %v3692, 0.125
    %v3729 = vmul.f32 %v3694, 0.125
    %v3730 = vmul.f32 %v3696, 0.125
    %v3731 = vmul.f32 %v3698, 0.125
    %v3732 = vmul.f32 %v3700, 0.125
    %v3733 = vld [vmem:[#allocation8 + $0x20] sm:$0xff]
    %v3734 = vld [vmem:[#allocation8 + $0x28] sm:$0xff]
    %v3735 = vld [vmem:[#allocation8 + $0x30] sm:$0xff]
    %v3736 = vld [vmem:[#allocation8 + $0x38] sm:$0xff]
    %v3737 = vmul.f32 %v3733, %v3472
    %v3738 = vmul.f32 %v3734, %v3472
    %v3739 = vmul.f32 %v3735, %v3472
    %v3740 = vmul.f32 %v3736, %v3472
    %v3741 = vmul.f32 %v3733, %v3476
    %v3742 = vmul.f32 %v3734, %v3476
    %v3743 = vmul.f32 %v3735, %v3476
    %v3744 = vmul.f32 %v3736, %v3476
    %v3745 = vmul.f32 %v3733, %v3480
    %v3746 = vmul.f32 %v3734, %v3480
    %v3747 = vmul.f32 %v3735, %v3480
    %v3748 = vmul.f32 %v3736, %v3480
    %v3749 = vmul.f32 %v3733, %v3484
    %v3750 = vmul.f32 %v3734, %v3484
    %v3751 = vmul.f32 %v3735, %v3484
    %v3752 = vmul.f32 %v3736, %v3484
    %v3753 = vmul.f32 %v3733, %v3488
    %v3754 = vmul.f32 %v3734, %v3488
    %v3755 = vmul.f32 %v3735, %v3488
    %v3756 = vmul.f32 %v3736, %v3488
    %v3757 = vmul.f32 %v3733, %v3492
    %v3758 = vmul.f32 %v3734, %v3492
    %v3759 = vmul.f32 %v3735, %v3492
    %v3760 = vmul.f32 %v3736, %v3492
    %v3761 = vmul.f32 %v3733, %v3496
    %v3762 = vmul.f32 %v3734, %v3496
    %v3763 = vmul.f32 %v3735, %v3496
    %v3764 = vmul.f32 %v3736, %v3496
    %v3765 = vmul.f32 %v3733, %v3500
    %v3766 = vmul.f32 %v3734, %v3500
    %v3767 = vmul.f32 %v3735, %v3500
    %v3768 = vmul.f32 %v3736, %v3500
    %v3769 = vmul.f32 %v3737, 1.442695
    %v3770 = vpow.pop %v3769
    %v3771 = vmul.f32 %v3738, 1.442695
    %v3772 = vpow.pop %v3771
    %v3773 = vmul.f32 %v3739, 1.442695
    %v3774 = vpow.pop %v3773
    %v3775 = vmul.f32 %v3740, 1.442695
    %v3776 = vpow.pop %v3775
    %v3777 = vmul.f32 %v3741, 1.442695
    %v3778 = vpow.pop %v3777
    %v3779 = vmul.f32 %v3742, 1.442695
    %v3780 = vpow.pop %v3779
    %v3781 = vmul.f32 %v3743, 1.442695
    %v3782 = vpow.pop %v3781
    %v3783 = vmul.f32 %v3744, 1.442695
    %v3784 = vpow.pop %v3783
    %v3785 = vmul.f32 %v3745, 1.442695
    %v3786 = vpow.pop %v3785
    %v3787 = vmul.f32 %v3746, 1.442695
    %v3788 = vpow.pop %v3787
    %v3789 = vmul.f32 %v3747, 1.442695
    %v3790 = vpow.pop %v3789
    %v3791 = vmul.f32 %v3748, 1.442695
    %v3792 = vpow.pop %v3791
    %v3793 = vmul.f32 %v3749, 1.442695
    %v3794 = vpow.pop %v3793
    %v3795 = vmul.f32 %v3750, 1.442695
    %v3796 = vpow.pop %v3795
    %v3797 = vmul.f32 %v3751, 1.442695
    %v3798 = vpow.pop %v3797
    %v3799 = vmul.f32 %v3752, 1.442695
    %v3800 = vpow.pop %v3799
    %v3801 = vmul.f32 %v3753, 1.442695
    %v3802 = vpow.pop %v3801
    %v3803 = vmul.f32 %v3754, 1.442695
    %v3804 = vpow.pop %v3803
    %v3805 = vmul.f32 %v3755, 1.442695
    %v3806 = vpow.pop %v3805
    %v3807 = vmul.f32 %v3756, 1.442695
    %v3808 = vpow.pop %v3807
    %v3809 = vmul.f32 %v3757, 1.442695
    %v3810 = vpow.pop %v3809
    %v3811 = vmul.f32 %v3758, 1.442695
    %v3812 = vpow.pop %v3811
    %v3813 = vmul.f32 %v3759, 1.442695
    %v3814 = vpow.pop %v3813
    %v3815 = vmul.f32 %v3760, 1.442695
    %v3816 = vpow.pop %v3815
    %v3817 = vmul.f32 %v3761, 1.442695
    %v3818 = vpow.pop %v3817
    %v3819 = vmul.f32 %v3762, 1.442695
    %v3820 = vpow.pop %v3819
    %v3821 = vmul.f32 %v3763, 1.442695
    %v3822 = vpow.pop %v3821
    %v3823 = vmul.f32 %v3764, 1.442695
    %v3824 = vpow.pop %v3823
    %v3825 = vmul.f32 %v3765, 1.442695
    %v3826 = vpow.pop %v3825
    %v3827 = vmul.f32 %v3766, 1.442695
    %v3828 = vpow.pop %v3827
    %v3829 = vmul.f32 %v3767, 1.442695
    %v3830 = vpow.pop %v3829
    %v3831 = vmul.f32 %v3768, 1.442695
    %v3832 = vpow.pop %v3831
    %v3833 = vsel %vm3464, %v3770, 0.0
    %v3834 = vsel %vm3464, %v3772, 0.0
    %v3835 = vsel %vm3464, %v3774, 0.0
    %v3836 = vsel %vm3464, %v3776, 0.0
    %v3837 = vsel %vm3464, %v3778, 0.0
    %v3838 = vsel %vm3464, %v3780, 0.0
    %v3839 = vsel %vm3464, %v3782, 0.0
    %v3840 = vsel %vm3464, %v3784, 0.0
    %v3841 = vsel %vm3464, %v3786, 0.0
    %v3842 = vsel %vm3464, %v3788, 0.0
    %v3843 = vsel %vm3464, %v3790, 0.0
    %v3844 = vsel %vm3464, %v3792, 0.0
    %v3845 = vsel %vm3464, %v3794, 0.0
    %v3846 = vsel %vm3464, %v3796, 0.0
    %v3847 = vsel %vm3464, %v3798, 0.0
    %v3848 = vsel %vm3464, %v3800, 0.0
    %v3849 = vsel %vm3464, %v3802, 0.0
    %v3850 = vsel %vm3464, %v3804, 0.0
    %v3851 = vsel %vm3464, %v3806, 0.0
    %v3852 = vsel %vm3464, %v3808, 0.0
    %v3853 = vsel %vm3464, %v3810, 0.0
    %v3854 = vsel %vm3464, %v3812, 0.0
    %v3855 = vsel %vm3464, %v3814, 0.0
    %v3856 = vsel %vm3464, %v3816, 0.0
    %v3857 = vsel %vm3464, %v3818, 0.0
    %v3858 = vsel %vm3464, %v3820, 0.0
    %v3859 = vsel %vm3464, %v3822, 0.0
    %v3860 = vsel %vm3464, %v3824, 0.0
    %v3861 = vsel %vm3464, %v3826, 0.0
    %v3862 = vsel %vm3464, %v3828, 0.0
    %v3863 = vsel %vm3464, %v3830, 0.0
    %v3864 = vsel %vm3464, %v3832, 0.0
    %3865 = vadd.xlane.f32.xlu0 %v3833
    %v3866 = vpop.xlane.xlu0 %3865
    %3867 = vadd.xlane.f32.xlu0 %v3834
    %v3868 = vpop.xlane.xlu0 %3867
    %3869 = vadd.xlane.f32.xlu0 %v3835
    %v3870 = vpop.xlane.xlu0 %3869
    %3871 = vadd.xlane.f32.xlu0 %v3836
    %v3872 = vpop.xlane.xlu0 %3871
    %3873 = vadd.xlane.f32.xlu0 %v3837
    %v3874 = vpop.xlane.xlu0 %3873
    %3875 = vadd.xlane.f32.xlu0 %v3838
    %v3876 = vpop.xlane.xlu0 %3875
    %3877 = vadd.xlane.f32.xlu0 %v3839
    %v3878 = vpop.xlane.xlu0 %3877
    %3879 = vadd.xlane.f32.xlu0 %v3840
    %v3880 = vpop.xlane.xlu0 %3879
    %3881 = vadd.xlane.f32.xlu0 %v3841
    %v3882 = vpop.xlane.xlu0 %3881
    %3883 = vadd.xlane.f32.xlu0 %v3842
    %v3884 = vpop.xlane.xlu0 %3883
    %3885 = vadd.xlane.f32.xlu0 %v3843
    %v3886 = vpop.xlane.xlu0 %3885
    %3887 = vadd.xlane.f32.xlu0 %v3844
    %v3888 = vpop.xlane.xlu0 %3887
    %3889 = vadd.xlane.f32.xlu0 %v3845
    %v3890 = vpop.xlane.xlu0 %3889
    %3891 = vadd.xlane.f32.xlu0 %v3846
    %v3892 = vpop.xlane.xlu0 %3891
    %3893 = vadd.xlane.f32.xlu0 %v3847
    %v3894 = vpop.xlane.xlu0 %3893
    %3895 = vadd.xlane.f32.xlu0 %v3848
    %v3896 = vpop.xlane.xlu0 %3895
    %3897 = vadd.xlane.f32.xlu0 %v3849
    %v3898 = vpop.xlane.xlu0 %3897
    %3899 = vadd.xlane.f32.xlu0 %v3850
    %v3900 = vpop.xlane.xlu0 %3899
    %3901 = vadd.xlane.f32.xlu0 %v3851
    %v3902 = vpop.xlane.xlu0 %3901
    %3903 = vadd.xlane.f32.xlu0 %v3852
    %v3904 = vpop.xlane.xlu0 %3903
    %3905 = vadd.xlane.f32.xlu0 %v3853
    %v3906 = vpop.xlane.xlu0 %3905
    %3907 = vadd.xlane.f32.xlu0 %v3854
    %v3908 = vpop.xlane.xlu0 %3907
    %3909 = vadd.xlane.f32.xlu0 %v3855
    %v3910 = vpop.xlane.xlu0 %3909
    %3911 = vadd.xlane.f32.xlu0 %v3856
    %v3912 = vpop.xlane.xlu0 %3911
    %3913 = vadd.xlane.f32.xlu0 %v3857
    %v3914 = vpop.xlane.xlu0 %3913
    %3915 = vadd.xlane.f32.xlu0 %v3858
    %v3916 = vpop.xlane.xlu0 %3915
    %3917 = vadd.xlane.f32.xlu0 %v3859
    %v3918 = vpop.xlane.xlu0 %3917
    %3919 = vadd.xlane.f32.xlu0 %v3860
    %v3920 = vpop.xlane.xlu0 %3919
    %3921 = vadd.xlane.f32.xlu0 %v3861
    %v3922 = vpop.xlane.xlu0 %3921
    %3923 = vadd.xlane.f32.xlu0 %v3862
    %v3924 = vpop.xlane.xlu0 %3923
    %3925 = vadd.xlane.f32.xlu0 %v3863
    %v3926 = vpop.xlane.xlu0 %3925
    %3927 = vadd.xlane.f32.xlu0 %v3864
    %v3928 = vpop.xlane.xlu0 %3927
    %v3929 = vmul.f32 %v3866, 0.125
    %v3930 = vmul.f32 %v3868, 0.125
    %v3931 = vmul.f32 %v3870, 0.125
    %v3932 = vmul.f32 %v3872, 0.125
    %v3933 = vmul.f32 %v3874, 0.125
    %v3934 = vmul.f32 %v3876, 0.125
    %v3935 = vmul.f32 %v3878, 0.125
    %v3936 = vmul.f32 %v3880, 0.125
    %v3937 = vmul.f32 %v3882, 0.125
    %v3938 = vmul.f32 %v3884, 0.125
    %v3939 = vmul.f32 %v3886, 0.125
    %v3940 = vmul.f32 %v3888, 0.125
    %v3941 = vmul.f32 %v3890, 0.125
    %v3942 = vmul.f32 %v3892, 0.125
    %v3943 = vmul.f32 %v3894, 0.125
    %v3944 = vmul.f32 %v3896, 0.125
    %v3945 = vmul.f32 %v3898, 0.125
    %v3946 = vmul.f32 %v3900, 0.125
    %v3947 = vmul.f32 %v3902, 0.125
    %v3948 = vmul.f32 %v3904, 0.125
    %v3949 = vmul.f32 %v3906, 0.125
    %v3950 = vmul.f32 %v3908, 0.125
    %v3951 = vmul.f32 %v3910, 0.125
    %v3952 = vmul.f32 %v3912, 0.125
    %v3953 = vmul.f32 %v3914, 0.125
    %v3954 = vmul.f32 %v3916, 0.125
    %v3955 = vmul.f32 %v3918, 0.125
    %v3956 = vmul.f32 %v3920, 0.125
    %v3957 = vmul.f32 %v3922, 0.125
    %v3958 = vmul.f32 %v3924, 0.125
    %v3959 = vmul.f32 %v3926, 0.125
    %v3960 = vmul.f32 %v3928, 0.125
    %v3961 = vld [vmem:[#allocation8 + $0x40] sm:$0xff]
    %v3962 = vld [vmem:[#allocation8 + $0x48] sm:$0xff]
    %v3963 = vld [vmem:[#allocation8 + $0x50] sm:$0xff]
    %v3964 = vld [vmem:[#allocation8 + $0x58] sm:$0xff]
    %v3965 = vmul.f32 %v3961, %v3472
    %v3966 = vmul.f32 %v3962, %v3472
    %v3967 = vmul.f32 %v3963, %v3472
    %v3968 = vmul.f32 %v3964, %v3472
    %v3969 = vmul.f32 %v3961, %v3476
    %v3970 = vmul.f32 %v3962, %v3476
    %v3971 = vmul.f32 %v3963, %v3476
    %v3972 = vmul.f32 %v3964, %v3476
    %v3973 = vmul.f32 %v3961, %v3480
    %v3974 = vmul.f32 %v3962, %v3480
    %v3975 = vmul.f32 %v3963, %v3480
    %v3976 = vmul.f32 %v3964, %v3480
    %v3977 = vmul.f32 %v3961, %v3484
    %v3978 = vmul.f32 %v3962, %v3484
    %v3979 = vmul.f32 %v3963, %v3484
    %v3980 = vmul.f32 %v3964, %v3484
    %v3981 = vmul.f32 %v3961, %v3488
    %v3982 = vmul.f32 %v3962, %v3488
    %v3983 = vmul.f32 %v3963, %v3488
    %v3984 = vmul.f32 %v3964, %v3488
    %v3985 = vmul.f32 %v3961, %v3492
    %v3986 = vmul.f32 %v3962, %v3492
    %v3987 = vmul.f32 %v3963, %v3492
    %v3988 = vmul.f32 %v3964, %v3492
    %v3989 = vmul.f32 %v3961, %v3496
    %v3990 = vmul.f32 %v3962, %v3496
    %v3991 = vmul.f32 %v3963, %v3496
    %v3992 = vmul.f32 %v3964, %v3496
    %v3993 = vmul.f32 %v3961, %v3500
    %v3994 = vmul.f32 %v3962, %v3500
    %v3995 = vmul.f32 %v3963, %v3500
    %v3996 = vmul.f32 %v3964, %v3500
    %v3997 = vmul.f32 %v3965, 1.442695
    %v3998 = vpow.pop %v3997
    %v3999 = vmul.f32 %v3966, 1.442695
    %v4000 = vpow.pop %v3999
    %v4001 = vmul.f32 %v3967, 1.442695
    %v4002 = vpow.pop %v4001
    %v4003 = vmul.f32 %v3968, 1.442695
    %v4004 = vpow.pop %v4003
    %v4005 = vmul.f32 %v3969, 1.442695
    %v4006 = vpow.pop %v4005
    %v4007 = vmul.f32 %v3970, 1.442695
    %v4008 = vpow.pop %v4007
    %v4009 = vmul.f32 %v3971, 1.442695
    %v4010 = vpow.pop %v4009
    %v4011 = vmul.f32 %v3972, 1.442695
    %v4012 = vpow.pop %v4011
    %v4013 = vmul.f32 %v3973, 1.442695
    %v4014 = vpow.pop %v4013
    %v4015 = vmul.f32 %v3974, 1.442695
    %v4016 = vpow.pop %v4015
    %v4017 = vmul.f32 %v3975, 1.442695
    %v4018 = vpow.pop %v4017
    %v4019 = vmul.f32 %v3976, 1.442695
    %v4020 = vpow.pop %v4019
    %v4021 = vmul.f32 %v3977, 1.442695
    %v4022 = vpow.pop %v4021
    %v4023 = vmul.f32 %v3978, 1.442695
    %v4024 = vpow.pop %v4023
    %v4025 = vmul.f32 %v3979, 1.442695
    %v4026 = vpow.pop %v4025
    %v4027 = vmul.f32 %v3980, 1.442695
    %v4028 = vpow.pop %v4027
    %v4029 = vmul.f32 %v3981, 1.442695
    %v4030 = vpow.pop %v4029
    %v4031 = vmul.f32 %v3982, 1.442695
    %v4032 = vpow.pop %v4031
    %v4033 = vmul.f32 %v3983, 1.442695
    %v4034 = vpow.pop %v4033
    %v4035 = vmul.f32 %v3984, 1.442695
    %v4036 = vpow.pop %v4035
    %v4037 = vmul.f32 %v3985, 1.442695
    %v4038 = vpow.pop %v4037
    %v4039 = vmul.f32 %v3986, 1.442695
    %v4040 = vpow.pop %v4039
    %v4041 = vmul.f32 %v3987, 1.442695
    %v4042 = vpow.pop %v4041
    %v4043 = vmul.f32 %v3988, 1.442695
    %v4044 = vpow.pop %v4043
    %v4045 = vmul.f32 %v3989, 1.442695
    %v4046 = vpow.pop %v4045
    %v4047 = vmul.f32 %v3990, 1.442695
    %v4048 = vpow.pop %v4047
    %v4049 = vmul.f32 %v3991, 1.442695
    %v4050 = vpow.pop %v4049
    %v4051 = vmul.f32 %v3992, 1.442695
    %v4052 = vpow.pop %v4051
    %v4053 = vmul.f32 %v3993, 1.442695
    %v4054 = vpow.pop %v4053
    %v4055 = vmul.f32 %v3994, 1.442695
    %v4056 = vpow.pop %v4055
    %v4057 = vmul.f32 %v3995, 1.442695
    %v4058 = vpow.pop %v4057
    %v4059 = vmul.f32 %v3996, 1.442695
    %v4060 = vpow.pop %v4059
    %v4061 = vsel %vm3464, %v3998, 0.0
    %v4062 = vsel %vm3464, %v4000, 0.0
    %v4063 = vsel %vm3464, %v4002, 0.0
    %v4064 = vsel %vm3464, %v4004, 0.0
    %v4065 = vsel %vm3464, %v4006, 0.0
    %v4066 = vsel %vm3464, %v4008, 0.0
    %v4067 = vsel %vm3464, %v4010, 0.0
    %v4068 = vsel %vm3464, %v4012, 0.0
    %v4069 = vsel %vm3464, %v4014, 0.0
    %v4070 = vsel %vm3464, %v4016, 0.0
    %v4071 = vsel %vm3464, %v4018, 0.0
    %v4072 = vsel %vm3464, %v4020, 0.0
    %v4073 = vsel %vm3464, %v4022, 0.0
    %v4074 = vsel %vm3464, %v4024, 0.0
    %v4075 = vsel %vm3464, %v4026, 0.0
    %v4076 = vsel %vm3464, %v4028, 0.0
    %v4077 = vsel %vm3464, %v4030, 0.0
    %v4078 = vsel %vm3464, %v4032, 0.0
    %v4079 = vsel %vm3464, %v4034, 0.0
    %v4080 = vsel %vm3464, %v4036, 0.0
    %v4081 = vsel %vm3464, %v4038, 0.0
    %v4082 = vsel %vm3464, %v4040, 0.0
    %v4083 = vsel %vm3464, %v4042, 0.0
    %v4084 = vsel %vm3464, %v4044, 0.0
    %v4085 = vsel %vm3464, %v4046, 0.0
    %v4086 = vsel %vm3464, %v4048, 0.0
    %v4087 = vsel %vm3464, %v4050, 0.0
    %v4088 = vsel %vm3464, %v4052, 0.0
    %v4089 = vsel %vm3464, %v4054, 0.0
    %v4090 = vsel %vm3464, %v4056, 0.0
    %v4091 = vsel %vm3464, %v4058, 0.0
    %v4092 = vsel %vm3464, %v4060, 0.0
    %4093 = vadd.xlane.f32.xlu0 %v4061
    %v4094 = vpop.xlane.xlu0 %4093
    %4095 = vadd.xlane.f32.xlu0 %v4062
    %v4096 = vpop.xlane.xlu0 %4095
    %4097 = vadd.xlane.f32.xlu0 %v4063
    %v4098 = vpop.xlane.xlu0 %4097
    %4099 = vadd.xlane.f32.xlu0 %v4064
    %v4100 = vpop.xlane.xlu0 %4099
    %4101 = vadd.xlane.f32.xlu0 %v4065
    %v4102 = vpop.xlane.xlu0 %4101
    %4103 = vadd.xlane.f32.xlu0 %v4066
    %v4104 = vpop.xlane.xlu0 %4103
    %4105 = vadd.xlane.f32.xlu0 %v4067
    %v4106 = vpop.xlane.xlu0 %4105
    %4107 = vadd.xlane.f32.xlu0 %v4068
    %v4108 = vpop.xlane.xlu0 %4107
    %4109 = vadd.xlane.f32.xlu0 %v4069
    %v4110 = vpop.xlane.xlu0 %4109
    %4111 = vadd.xlane.f32.xlu0 %v4070
    %v4112 = vpop.xlane.xlu0 %4111
    %4113 = vadd.xlane.f32.xlu0 %v4071
    %v4114 = vpop.xlane.xlu0 %4113
    %4115 = vadd.xlane.f32.xlu0 %v4072
    %v4116 = vpop.xlane.xlu0 %4115
    %4117 = vadd.xlane.f32.xlu0 %v4073
    %v4118 = vpop.xlane.xlu0 %4117
    %4119 = vadd.xlane.f32.xlu0 %v4074
    %v4120 = vpop.xlane.xlu0 %4119
    %4121 = vadd.xlane.f32.xlu0 %v4075
    %v4122 = vpop.xlane.xlu0 %4121
    %4123 = vadd.xlane.f32.xlu0 %v4076
    %v4124 = vpop.xlane.xlu0 %4123
    %4125 = vadd.xlane.f32.xlu0 %v4077
    %v4126 = vpop.xlane.xlu0 %4125
    %4127 = vadd.xlane.f32.xlu0 %v4078
    %v4128 = vpop.xlane.xlu0 %4127
    %4129 = vadd.xlane.f32.xlu0 %v4079
    %v4130 = vpop.xlane.xlu0 %4129
    %4131 = vadd.xlane.f32.xlu0 %v4080
    %v4132 = vpop.xlane.xlu0 %4131
    %4133 = vadd.xlane.f32.xlu0 %v4081
    %v4134 = vpop.xlane.xlu0 %4133
    %4135 = vadd.xlane.f32.xlu0 %v4082
    %v4136 = vpop.xlane.xlu0 %4135
    %4137 = vadd.xlane.f32.xlu0 %v4083
    %v4138 = vpop.xlane.xlu0 %4137
    %4139 = vadd.xlane.f32.xlu0 %v4084
    %v4140 = vpop.xlane.xlu0 %4139
    %4141 = vadd.xlane.f32.xlu0 %v4085
    %v4142 = vpop.xlane.xlu0 %4141
    %4143 = vadd.xlane.f32.xlu0 %v4086
    %v4144 = vpop.xlane.xlu0 %4143
    %4145 = vadd.xlane.f32.xlu0 %v4087
    %v4146 = vpop.xlane.xlu0 %4145
    %4147 = vadd.xlane.f32.xlu0 %v4088
    %v4148 = vpop.xlane.xlu0 %4147
    %4149 = vadd.xlane.f32.xlu0 %v4089
    %v4150 = vpop.xlane.xlu0 %4149
    %4151 = vadd.xlane.f32.xlu0 %v4090
    %v4152 = vpop.xlane.xlu0 %4151
    %4153 = vadd.xlane.f32.xlu0 %v4091
    %v4154 = vpop.xlane.xlu0 %4153
    %4155 = vadd.xlane.f32.xlu0 %v4092
    %v4156 = vpop.xlane.xlu0 %4155
    %v4157 = vmul.f32 %v4094, 0.125
    %v4158 = vmul.f32 %v4096, 0.125
    %v4159 = vmul.f32 %v4098, 0.125
    %v4160 = vmul.f32 %v4100, 0.125
    %v4161 = vmul.f32 %v4102, 0.125
    %v4162 = vmul.f32 %v4104, 0.125
    %v4163 = vmul.f32 %v4106, 0.125
    %v4164 = vmul.f32 %v4108, 0.125
    %v4165 = vmul.f32 %v4110, 0.125
    %v4166 = vmul.f32 %v4112, 0.125
    %v4167 = vmul.f32 %v4114, 0.125
    %v4168 = vmul.f32 %v4116, 0.125
    %v4169 = vmul.f32 %v4118, 0.125
    %v4170 = vmul.f32 %v4120, 0.125
    %v4171 = vmul.f32 %v4122, 0.125
    %v4172 = vmul.f32 %v4124, 0.125
    %v4173 = vmul.f32 %v4126, 0.125
    %v4174 = vmul.f32 %v4128, 0.125
    %v4175 = vmul.f32 %v4130, 0.125
    %v4176 = vmul.f32 %v4132, 0.125
    %v4177 = vmul.f32 %v4134, 0.125
    %v4178 = vmul.f32 %v4136, 0.125
    %v4179 = vmul.f32 %v4138, 0.125
    %v4180 = vmul.f32 %v4140, 0.125
    %v4181 = vmul.f32 %v4142, 0.125
    %v4182 = vmul.f32 %v4144, 0.125
    %v4183 = vmul.f32 %v4146, 0.125
    %v4184 = vmul.f32 %v4148, 0.125
    %v4185 = vmul.f32 %v4150, 0.125
    %v4186 = vmul.f32 %v4152, 0.125
    %v4187 = vmul.f32 %v4154, 0.125
    %v4188 = vmul.f32 %v4156, 0.125
    %v4189 = vld [vmem:[#allocation8 + $0x60] sm:$0xff]
    %v4190 = vld [vmem:[#allocation8 + $0x68] sm:$0xff]
    %v4191 = vld [vmem:[#allocation8 + $0x70] sm:$0xff]
    %v4192 = vld [vmem:[#allocation8 + $0x78] sm:$0xff]
    %v4193 = vmul.f32 %v4189, %v3472
    %v4194 = vmul.f32 %v4190, %v3472
    %v4195 = vmul.f32 %v4191, %v3472
    %v4196 = vmul.f32 %v4192, %v3472
    %v4197 = vmul.f32 %v4189, %v3476
    %v4198 = vmul.f32 %v4190, %v3476
    %v4199 = vmul.f32 %v4191, %v3476
    %v4200 = vmul.f32 %v4192, %v3476
    %v4201 = vmul.f32 %v4189, %v3480
    %v4202 = vmul.f32 %v4190, %v3480
    %v4203 = vmul.f32 %v4191, %v3480
    %v4204 = vmul.f32 %v4192, %v3480
    %v4205 = vmul.f32 %v4189, %v3484
    %v4206 = vmul.f32 %v4190, %v3484
    %v4207 = vmul.f32 %v4191, %v3484
    %v4208 = vmul.f32 %v4192, %v3484
    %v4209 = vmul.f32 %v4189, %v3488
    %v4210 = vmul.f32 %v4190, %v3488
    %v4211 = vmul.f32 %v4191, %v3488
    %v4212 = vmul.f32 %v4192, %v3488
    %v4213 = vmul.f32 %v4189, %v3492
    %v4214 = vmul.f32 %v4190, %v3492
    %v4215 = vmul.f32 %v4191, %v3492
    %v4216 = vmul.f32 %v4192, %v3492
    %v4217 = vmul.f32 %v4189, %v3496
    %v4218 = vmul.f32 %v4190, %v3496
    %v4219 = vmul.f32 %v4191, %v3496
    %v4220 = vmul.f32 %v4192, %v3496
    %v4221 = vmul.f32 %v4189, %v3500
    %v4222 = vmul.f32 %v4190, %v3500
    %v4223 = vmul.f32 %v4191, %v3500
    %v4224 = vmul.f32 %v4192, %v3500
    %v4225 = vmul.f32 %v4193, 1.442695
    %v4226 = vpow.pop %v4225
    %v4227 = vmul.f32 %v4194, 1.442695
    %v4228 = vpow.pop %v4227
    %v4229 = vmul.f32 %v4195, 1.442695
    %v4230 = vpow.pop %v4229
    %v4231 = vmul.f32 %v4196, 1.442695
    %v4232 = vpow.pop %v4231
    %v4233 = vmul.f32 %v4197, 1.442695
    %v4234 = vpow.pop %v4233
    %v4235 = vmul.f32 %v4198, 1.442695
    %v4236 = vpow.pop %v4235
    %v4237 = vmul.f32 %v4199, 1.442695
    %v4238 = vpow.pop %v4237
    %v4239 = vmul.f32 %v4200, 1.442695
    %v4240 = vpow.pop %v4239
    %v4241 = vmul.f32 %v4201, 1.442695
    %v4242 = vpow.pop %v4241
    %v4243 = vmul.f32 %v4202, 1.442695
    %v4244 = vpow.pop %v4243
    %v4245 = vmul.f32 %v4203, 1.442695
    %v4246 = vpow.pop %v4245
    %v4247 = vmul.f32 %v4204, 1.442695
    %v4248 = vpow.pop %v4247
    %v4249 = vmul.f32 %v4205, 1.442695
    %v4250 = vpow.pop %v4249
    %v4251 = vmul.f32 %v4206, 1.442695
    %v4252 = vpow.pop %v4251
    %v4253 = vmul.f32 %v4207, 1.442695
    %v4254 = vpow.pop %v4253
    %v4255 = vmul.f32 %v4208, 1.442695
    %v4256 = vpow.pop %v4255
    %v4257 = vmul.f32 %v4209, 1.442695
    %v4258 = vpow.pop %v4257
    %v4259 = vmul.f32 %v4210, 1.442695
    %v4260 = vpow.pop %v4259
    %v4261 = vmul.f32 %v4211, 1.442695
    %v4262 = vpow.pop %v4261
    %v4263 = vmul.f32 %v4212, 1.442695
    %v4264 = vpow.pop %v4263
    %v4265 = vmul.f32 %v4213, 1.442695
    %v4266 = vpow.pop %v4265
    %v4267 = vmul.f32 %v4214, 1.442695
    %v4268 = vpow.pop %v4267
    %v4269 = vmul.f32 %v4215, 1.442695
    %v4270 = vpow.pop %v4269
    %v4271 = vmul.f32 %v4216, 1.442695
    %v4272 = vpow.pop %v4271
    %v4273 = vmul.f32 %v4217, 1.442695
    %v4274 = vpow.pop %v4273
    %v4275 = vmul.f32 %v4218, 1.442695
    %v4276 = vpow.pop %v4275
    %v4277 = vmul.f32 %v4219, 1.442695
    %v4278 = vpow.pop %v4277
    %v4279 = vmul.f32 %v4220, 1.442695
    %v4280 = vpow.pop %v4279
    %v4281 = vmul.f32 %v4221, 1.442695
    %v4282 = vpow.pop %v4281
    %v4283 = vmul.f32 %v4222, 1.442695
    %v4284 = vpow.pop %v4283
    %v4285 = vmul.f32 %v4223, 1.442695
    %v4286 = vpow.pop %v4285
    %v4287 = vmul.f32 %v4224, 1.442695
    %v4288 = vpow.pop %v4287
    %v4289 = vsel %vm3464, %v4226, 0.0
    %v4290 = vsel %vm3464, %v4228, 0.0
    %v4291 = vsel %vm3464, %v4230, 0.0
    %v4292 = vsel %vm3464, %v4232, 0.0
    %v4293 = vsel %vm3464, %v4234, 0.0
    %v4294 = vsel %vm3464, %v4236, 0.0
    %v4295 = vsel %vm3464, %v4238, 0.0
    %v4296 = vsel %vm3464, %v4240, 0.0
    %v4297 = vsel %vm3464, %v4242, 0.0
    %v4298 = vsel %vm3464, %v4244, 0.0
    %v4299 = vsel %vm3464, %v4246, 0.0
    %v4300 = vsel %vm3464, %v4248, 0.0
    %v4301 = vsel %vm3464, %v4250, 0.0
    %v4302 = vsel %vm3464, %v4252, 0.0
    %v4303 = vsel %vm3464, %v4254, 0.0
    %v4304 = vsel %vm3464, %v4256, 0.0
    %v4305 = vsel %vm3464, %v4258, 0.0
    %v4306 = vsel %vm3464, %v4260, 0.0
    %v4307 = vsel %vm3464, %v4262, 0.0
    %v4308 = vsel %vm3464, %v4264, 0.0
    %v4309 = vsel %vm3464, %v4266, 0.0
    %v4310 = vsel %vm3464, %v4268, 0.0
    %v4311 = vsel %vm3464, %v4270, 0.0
    %v4312 = vsel %vm3464, %v4272, 0.0
    %v4313 = vsel %vm3464, %v4274, 0.0
    %v4314 = vsel %vm3464, %v4276, 0.0
    %v4315 = vsel %vm3464, %v4278, 0.0
    %v4316 = vsel %vm3464, %v4280, 0.0
    %v4317 = vsel %vm3464, %v4282, 0.0
    %v4318 = vsel %vm3464, %v4284, 0.0
    %v4319 = vsel %vm3464, %v4286, 0.0
    %v4320 = vsel %vm3464, %v4288, 0.0
    %4321 = vadd.xlane.f32.xlu0 %v4289
    %v4322 = vpop.xlane.xlu0 %4321
    %4323 = vadd.xlane.f32.xlu0 %v4290
    %v4324 = vpop.xlane.xlu0 %4323
    %4325 = vadd.xlane.f32.xlu0 %v4291
    %v4326 = vpop.xlane.xlu0 %4325
    %4327 = vadd.xlane.f32.xlu0 %v4292
    %v4328 = vpop.xlane.xlu0 %4327
    %4329 = vadd.xlane.f32.xlu0 %v4293
    %v4330 = vpop.xlane.xlu0 %4329
    %4331 = vadd.xlane.f32.xlu0 %v4294
    %v4332 = vpop.xlane.xlu0 %4331
    %4333 = vadd.xlane.f32.xlu0 %v4295
    %v4334 = vpop.xlane.xlu0 %4333
    %4335 = vadd.xlane.f32.xlu0 %v4296
    %v4336 = vpop.xlane.xlu0 %4335
    %4337 = vadd.xlane.f32.xlu0 %v4297
    %v4338 = vpop.xlane.xlu0 %4337
    %4339 = vadd.xlane.f32.xlu0 %v4298
    %v4340 = vpop.xlane.xlu0 %4339
    %4341 = vadd.xlane.f32.xlu0 %v4299
    %v4342 = vpop.xlane.xlu0 %4341
    %4343 = vadd.xlane.f32.xlu0 %v4300
    %v4344 = vpop.xlane.xlu0 %4343
    %4345 = vadd.xlane.f32.xlu0 %v4301
    %v4346 = vpop.xlane.xlu0 %4345
    %4347 = vadd.xlane.f32.xlu0 %v4302
    %v4348 = vpop.xlane.xlu0 %4347
    %4349 = vadd.xlane.f32.xlu0 %v4303
    %v4350 = vpop.xlane.xlu0 %4349
    %4351 = vadd.xlane.f32.xlu0 %v4304
    %v4352 = vpop.xlane.xlu0 %4351
    %4353 = vadd.xlane.f32.xlu0 %v4305
    %v4354 = vpop.xlane.xlu0 %4353
    %4355 = vadd.xlane.f32.xlu0 %v4306
    %v4356 = vpop.xlane.xlu0 %4355
    %4357 = vadd.xlane.f32.xlu0 %v4307
    %v4358 = vpop.xlane.xlu0 %4357
    %4359 = vadd.xlane.f32.xlu0 %v4308
    %v4360 = vpop.xlane.xlu0 %4359
    %4361 = vadd.xlane.f32.xlu0 %v4309
    %v4362 = vpop.xlane.xlu0 %4361
    %4363 = vadd.xlane.f32.xlu0 %v4310
    %v4364 = vpop.xlane.xlu0 %4363
    %4365 = vadd.xlane.f32.xlu0 %v4311
    %v4366 = vpop.xlane.xlu0 %4365
    %4367 = vadd.xlane.f32.xlu0 %v4312
    %v4368 = vpop.xlane.xlu0 %4367
    %4369 = vadd.xlane.f32.xlu0 %v4313
    %v4370 = vpop.xlane.xlu0 %4369
    %4371 = vadd.xlane.f32.xlu0 %v4314
    %v4372 = vpop.xlane.xlu0 %4371
    %4373 = vadd.xlane.f32.xlu0 %v4315
    %v4374 = vpop.xlane.xlu0 %4373
    %4375 = vadd.xlane.f32.xlu0 %v4316
    %v4376 = vpop.xlane.xlu0 %4375
    %4377 = vadd.xlane.f32.xlu0 %v4317
    %v4378 = vpop.xlane.xlu0 %4377
    %4379 = vadd.xlane.f32.xlu0 %v4318
    %v4380 = vpop.xlane.xlu0 %4379
    %4381 = vadd.xlane.f32.xlu0 %v4319
    %v4382 = vpop.xlane.xlu0 %4381
    %4383 = vadd.xlane.f32.xlu0 %v4320
    %v4384 = vpop.xlane.xlu0 %4383
    %v4385 = vmul.f32 %v4322, 0.125
    %v4386 = vmul.f32 %v4324, 0.125
    %v4387 = vmul.f32 %v4326, 0.125
    %v4388 = vmul.f32 %v4328, 0.125
    %v4389 = vmul.f32 %v4330, 0.125
    %v4390 = vmul.f32 %v4332, 0.125
    %v4391 = vmul.f32 %v4334, 0.125
    %v4392 = vmul.f32 %v4336, 0.125
    %v4393 = vmul.f32 %v4338, 0.125
    %v4394 = vmul.f32 %v4340, 0.125
    %v4395 = vmul.f32 %v4342, 0.125
    %v4396 = vmul.f32 %v4344, 0.125
    %v4397 = vmul.f32 %v4346, 0.125
    %v4398 = vmul.f32 %v4348, 0.125
    %v4399 = vmul.f32 %v4350, 0.125
    %v4400 = vmul.f32 %v4352, 0.125
    %v4401 = vmul.f32 %v4354, 0.125
    %v4402 = vmul.f32 %v4356, 0.125
    %v4403 = vmul.f32 %v4358, 0.125
    %v4404 = vmul.f32 %v4360, 0.125
    %v4405 = vmul.f32 %v4362, 0.125
    %v4406 = vmul.f32 %v4364, 0.125
    %v4407 = vmul.f32 %v4366, 0.125
    %v4408 = vmul.f32 %v4368, 0.125
    %v4409 = vmul.f32 %v4370, 0.125
    %v4410 = vmul.f32 %v4372, 0.125
    %v4411 = vmul.f32 %v4374, 0.125
    %v4412 = vmul.f32 %v4376, 0.125
    %v4413 = vmul.f32 %v4378, 0.125
    %v4414 = vmul.f32 %v4380, 0.125
    %v4415 = vmul.f32 %v4382, 0.125
    %v4416 = vmul.f32 %v4384, 0.125
    %v4449 = vlaneseq
    %v4450 = vshrl.u32 %v4449, 7
    %v4451 = vsub.s32 %v126, %v4450
    %v4452 = vrot.slane %v3701, %v4451
    %v4453 = vlaneseq
    %v4454 = vshrl.u32 %v4453, 7
    %v4455 = vsub.s32 %v988, %v4454
    %v4456 = vrot.slane %v3702, %v4455
    %v4457 = vsel %vm993, %v4456, %v4452
    %v4458 = vlaneseq
    %v4459 = vshrl.u32 %v4458, 7
    %v4460 = vsub.s32 %v995, %v4459
    %v4461 = vrot.slane %v3703, %v4460
    %v4462 = vsel %vm1000, %v4461, %v4457
    %v4463 = vlaneseq
    %v4464 = vshrl.u32 %v4463, 7
    %v4465 = vsub.s32 %v1002, %v4464
    %v4466 = vrot.slane %v3704, %v4465
    %v4467 = vsel %vm1007, %v4466, %v4462
    %v4468 = vlaneseq
    %v4469 = vshrl.u32 %v4468, 7
    %v4470 = vsub.s32 %v126, %v4469
    %v4471 = vrot.slane %v3705, %v4470
    %v4472 = vlaneseq
    %v4473 = vshrl.u32 %v4472, 7
    %v4474 = vsub.s32 %v988, %v4473
    %v4475 = vrot.slane %v3706, %v4474
    %v4476 = vsel %vm993, %v4475, %v4471
    %v4477 = vlaneseq
    %v4478 = vshrl.u32 %v4477, 7
    %v4479 = vsub.s32 %v995, %v4478
    %v4480 = vrot.slane %v3707, %v4479
    %v4481 = vsel %vm1000, %v4480, %v4476
    %v4482 = vlaneseq
    %v4483 = vshrl.u32 %v4482, 7
    %v4484 = vsub.s32 %v1002, %v4483
    %v4485 = vrot.slane %v3708, %v4484
    %v4486 = vsel %vm1007, %v4485, %v4481
    %v4487 = vlaneseq
    %v4488 = vshrl.u32 %v4487, 7
    %v4489 = vsub.s32 %v126, %v4488
    %v4490 = vrot.slane %v3709, %v4489
    %v4491 = vlaneseq
    %v4492 = vshrl.u32 %v4491, 7
    %v4493 = vsub.s32 %v988, %v4492
    %v4494 = vrot.slane %v3710, %v4493
    %v4495 = vsel %vm993, %v4494, %v4490
    %v4496 = vlaneseq
    %v4497 = vshrl.u32 %v4496, 7
    %v4498 = vsub.s32 %v995, %v4497
    %v4499 = vrot.slane %v3711, %v4498
    %v4500 = vsel %vm1000, %v4499, %v4495
    %v4501 = vlaneseq
    %v4502 = vshrl.u32 %v4501, 7
    %v4503 = vsub.s32 %v1002, %v4502
    %v4504 = vrot.slane %v3712, %v4503
    %v4505 = vsel %vm1007, %v4504, %v4500
    %v4506 = vlaneseq
    %v4507 = vshrl.u32 %v4506, 7
    %v4508 = vsub.s32 %v126, %v4507
    %v4509 = vrot.slane %v3713, %v4508
    %v4510 = vlaneseq
    %v4511 = vshrl.u32 %v4510, 7
    %v4512 = vsub.s32 %v988, %v4511
    %v4513 = vrot.slane %v3714, %v4512
    %v4514 = vsel %vm993, %v4513, %v4509
    %v4515 = vlaneseq
    %v4516 = vshrl.u32 %v4515, 7
    %v4517 = vsub.s32 %v995, %v4516
    %v4518 = vrot.slane %v3715, %v4517
    %v4519 = vsel %vm1000, %v4518, %v4514
    %v4520 = vlaneseq
    %v4521 = vshrl.u32 %v4520, 7
    %v4522 = vsub.s32 %v1002, %v4521
    %v4523 = vrot.slane %v3716, %v4522
    %v4524 = vsel %vm1007, %v4523, %v4519
    %v4525 = vlaneseq
    %v4526 = vshrl.u32 %v4525, 7
    %v4527 = vsub.s32 %v126, %v4526
    %v4528 = vrot.slane %v3717, %v4527
    %v4529 = vlaneseq
    %v4530 = vshrl.u32 %v4529, 7
    %v4531 = vsub.s32 %v988, %v4530
    %v4532 = vrot.slane %v3718, %v4531
    %v4533 = vsel %vm993, %v4532, %v4528
    %v4534 = vlaneseq
    %v4535 = vshrl.u32 %v4534, 7
    %v4536 = vsub.s32 %v995, %v4535
    %v4537 = vrot.slane %v3719, %v4536
    %v4538 = vsel %vm1000, %v4537, %v4533
    %v4539 = vlaneseq
    %v4540 = vshrl.u32 %v4539, 7
    %v4541 = vsub.s32 %v1002, %v4540
    %v4542 = vrot.slane %v3720, %v4541
    %v4543 = vsel %vm1007, %v4542, %v4538
    %v4544 = vlaneseq
    %v4545 = vshrl.u32 %v4544, 7
    %v4546 = vsub.s32 %v126, %v4545
    %v4547 = vrot.slane %v3721, %v4546
    %v4548 = vlaneseq
    %v4549 = vshrl.u32 %v4548, 7
    %v4550 = vsub.s32 %v988, %v4549
    %v4551 = vrot.slane %v3722, %v4550
    %v4552 = vsel %vm993, %v4551, %v4547
    %v4553 = vlaneseq
    %v4554 = vshrl.u32 %v4553, 7
    %v4555 = vsub.s32 %v995, %v4554
    %v4556 = vrot.slane %v3723, %v4555
    %v4557 = vsel %vm1000, %v4556, %v4552
    %v4558 = vlaneseq
    %v4559 = vshrl.u32 %v4558, 7
    %v4560 = vsub.s32 %v1002, %v4559
    %v4561 = vrot.slane %v3724, %v4560
    %v4562 = vsel %vm1007, %v4561, %v4557
    %v4563 = vlaneseq
    %v4564 = vshrl.u32 %v4563, 7
    %v4565 = vsub.s32 %v126, %v4564
    %v4566 = vrot.slane %v3725, %v4565
    %v4567 = vlaneseq
    %v4568 = vshrl.u32 %v4567, 7
    %v4569 = vsub.s32 %v988, %v4568
    %v4570 = vrot.slane %v3726, %v4569
    %v4571 = vsel %vm993, %v4570, %v4566
    %v4572 = vlaneseq
    %v4573 = vshrl.u32 %v4572, 7
    %v4574 = vsub.s32 %v995, %v4573
    %v4575 = vrot.slane %v3727, %v4574
    %v4576 = vsel %vm1000, %v4575, %v4571
    %v4577 = vlaneseq
    %v4578 = vshrl.u32 %v4577, 7
    %v4579 = vsub.s32 %v1002, %v4578
    %v4580 = vrot.slane %v3728, %v4579
    %v4581 = vsel %vm1007, %v4580, %v4576
    %v4582 = vlaneseq
    %v4583 = vshrl.u32 %v4582, 7
    %v4584 = vsub.s32 %v126, %v4583
    %v4585 = vrot.slane %v3729, %v4584
    %v4586 = vlaneseq
    %v4587 = vshrl.u32 %v4586, 7
    %v4588 = vsub.s32 %v988, %v4587
    %v4589 = vrot.slane %v3730, %v4588
    %v4590 = vsel %vm993, %v4589, %v4585
    %v4591 = vlaneseq
    %v4592 = vshrl.u32 %v4591, 7
    %v4593 = vsub.s32 %v995, %v4592
    %v4594 = vrot.slane %v3731, %v4593
    %v4595 = vsel %vm1000, %v4594, %v4590
    %v4596 = vlaneseq
    %v4597 = vshrl.u32 %v4596, 7
    %v4598 = vsub.s32 %v1002, %v4597
    %v4599 = vrot.slane %v3732, %v4598
    %v4600 = vsel %vm1007, %v4599, %v4595
    %v4601 = vsel %vm1142, %v4486, %v4467
    %v4602 = vsel %vm1144, %v4505, %v4601
    %v4603 = vsel %vm1146, %v4524, %v4602
    %v4604 = vsel %vm1148, %v4543, %v4603
    %v4605 = vsel %vm1150, %v4562, %v4604
    %v4606 = vsel %vm1152, %v4581, %v4605
    %v4607 = vsel %vm1154, %v4600, %v4606
    %v4641 = vlaneseq
    %v4642 = vshrl.u32 %v4641, 7
    %v4643 = vsub.s32 %v1189, %v4642
    %v4644 = vrot.slane %v3929, %v4643
    %v4645 = vlaneseq
    %v4646 = vshrl.u32 %v4645, 7
    %v4647 = vsub.s32 %v1194, %v4646
    %v4648 = vrot.slane %v3930, %v4647
    %v4649 = vsel %vm1199, %v4648, %v4644
    %v4650 = vlaneseq
    %v4651 = vshrl.u32 %v4650, 7
    %v4652 = vsub.s32 %v1201, %v4651
    %v4653 = vrot.slane %v3931, %v4652
    %v4654 = vsel %vm1206, %v4653, %v4649
    %v4655 = vlaneseq
    %v4656 = vshrl.u32 %v4655, 7
    %v4657 = vsub.s32 %v1208, %v4656
    %v4658 = vrot.slane %v3932, %v4657
    %v4659 = vsel %vm1213, %v4658, %v4654
    %v4660 = vlaneseq
    %v4661 = vshrl.u32 %v4660, 7
    %v4662 = vsub.s32 %v1189, %v4661
    %v4663 = vrot.slane %v3933, %v4662
    %v4664 = vlaneseq
    %v4665 = vshrl.u32 %v4664, 7
    %v4666 = vsub.s32 %v1194, %v4665
    %v4667 = vrot.slane %v3934, %v4666
    %v4668 = vsel %vm1199, %v4667, %v4663
    %v4669 = vlaneseq
    %v4670 = vshrl.u32 %v4669, 7
    %v4671 = vsub.s32 %v1201, %v4670
    %v4672 = vrot.slane %v3935, %v4671
    %v4673 = vsel %vm1206, %v4672, %v4668
    %v4674 = vlaneseq
    %v4675 = vshrl.u32 %v4674, 7
    %v4676 = vsub.s32 %v1208, %v4675
    %v4677 = vrot.slane %v3936, %v4676
    %v4678 = vsel %vm1213, %v4677, %v4673
    %v4679 = vlaneseq
    %v4680 = vshrl.u32 %v4679, 7
    %v4681 = vsub.s32 %v1189, %v4680
    %v4682 = vrot.slane %v3937, %v4681
    %v4683 = vlaneseq
    %v4684 = vshrl.u32 %v4683, 7
    %v4685 = vsub.s32 %v1194, %v4684
    %v4686 = vrot.slane %v3938, %v4685
    %v4687 = vsel %vm1199, %v4686, %v4682
    %v4688 = vlaneseq
    %v4689 = vshrl.u32 %v4688, 7
    %v4690 = vsub.s32 %v1201, %v4689
    %v4691 = vrot.slane %v3939, %v4690
    %v4692 = vsel %vm1206, %v4691, %v4687
    %v4693 = vlaneseq
    %v4694 = vshrl.u32 %v4693, 7
    %v4695 = vsub.s32 %v1208, %v4694
    %v4696 = vrot.slane %v3940, %v4695
    %v4697 = vsel %vm1213, %v4696, %v4692
    %v4698 = vlaneseq
    %v4699 = vshrl.u32 %v4698, 7
    %v4700 = vsub.s32 %v1189, %v4699
    %v4701 = vrot.slane %v3941, %v4700
    %v4702 = vlaneseq
    %v4703 = vshrl.u32 %v4702, 7
    %v4704 = vsub.s32 %v1194, %v4703
    %v4705 = vrot.slane %v3942, %v4704
    %v4706 = vsel %vm1199, %v4705, %v4701
    %v4707 = vlaneseq
    %v4708 = vshrl.u32 %v4707, 7
    %v4709 = vsub.s32 %v1201, %v4708
    %v4710 = vrot.slane %v3943, %v4709
    %v4711 = vsel %vm1206, %v4710, %v4706
    %v4712 = vlaneseq
    %v4713 = vshrl.u32 %v4712, 7
    %v4714 = vsub.s32 %v1208, %v4713
    %v4715 = vrot.slane %v3944, %v4714
    %v4716 = vsel %vm1213, %v4715, %v4711
    %v4717 = vlaneseq
    %v4718 = vshrl.u32 %v4717, 7
    %v4719 = vsub.s32 %v1189, %v4718
    %v4720 = vrot.slane %v3945, %v4719
    %v4721 = vlaneseq
    %v4722 = vshrl.u32 %v4721, 7
    %v4723 = vsub.s32 %v1194, %v4722
    %v4724 = vrot.slane %v3946, %v4723
    %v4725 = vsel %vm1199, %v4724, %v4720
    %v4726 = vlaneseq
    %v4727 = vshrl.u32 %v4726, 7
    %v4728 = vsub.s32 %v1201, %v4727
    %v4729 = vrot.slane %v3947, %v4728
    %v4730 = vsel %vm1206, %v4729, %v4725
    %v4731 = vlaneseq
    %v4732 = vshrl.u32 %v4731, 7
    %v4733 = vsub.s32 %v1208, %v4732
    %v4734 = vrot.slane %v3948, %v4733
    %v4735 = vsel %vm1213, %v4734, %v4730
    %v4736 = vlaneseq
    %v4737 = vshrl.u32 %v4736, 7
    %v4738 = vsub.s32 %v1189, %v4737
    %v4739 = vrot.slane %v3949, %v4738
    %v4740 = vlaneseq
    %v4741 = vshrl.u32 %v4740, 7
    %v4742 = vsub.s32 %v1194, %v4741
    %v4743 = vrot.slane %v3950, %v4742
    %v4744 = vsel %vm1199, %v4743, %v4739
    %v4745 = vlaneseq
    %v4746 = vshrl.u32 %v4745, 7
    %v4747 = vsub.s32 %v1201, %v4746
    %v4748 = vrot.slane %v3951, %v4747
    %v4749 = vsel %vm1206, %v4748, %v4744
    %v4750 = vlaneseq
    %v4751 = vshrl.u32 %v4750, 7
    %v4752 = vsub.s32 %v1208, %v4751
    %v4753 = vrot.slane %v3952, %v4752
    %v4754 = vsel %vm1213, %v4753, %v4749
    %v4755 = vlaneseq
    %v4756 = vshrl.u32 %v4755, 7
    %v4757 = vsub.s32 %v1189, %v4756
    %v4758 = vrot.slane %v3953, %v4757
    %v4759 = vlaneseq
    %v4760 = vshrl.u32 %v4759, 7
    %v4761 = vsub.s32 %v1194, %v4760
    %v4762 = vrot.slane %v3954, %v4761
    %v4763 = vsel %vm1199, %v4762, %v4758
    %v4764 = vlaneseq
    %v4765 = vshrl.u32 %v4764, 7
    %v4766 = vsub.s32 %v1201, %v4765
    %v4767 = vrot.slane %v3955, %v4766
    %v4768 = vsel %vm1206, %v4767, %v4763
    %v4769 = vlaneseq
    %v4770 = vshrl.u32 %v4769, 7
    %v4771 = vsub.s32 %v1208, %v4770
    %v4772 = vrot.slane %v3956, %v4771
    %v4773 = vsel %vm1213, %v4772, %v4768
    %v4774 = vlaneseq
    %v4775 = vshrl.u32 %v4774, 7
    %v4776 = vsub.s32 %v1189, %v4775
    %v4777 = vrot.slane %v3957, %v4776
    %v4778 = vlaneseq
    %v4779 = vshrl.u32 %v4778, 7
    %v4780 = vsub.s32 %v1194, %v4779
    %v4781 = vrot.slane %v3958, %v4780
    %v4782 = vsel %vm1199, %v4781, %v4777
    %v4783 = vlaneseq
    %v4784 = vshrl.u32 %v4783, 7
    %v4785 = vsub.s32 %v1201, %v4784
    %v4786 = vrot.slane %v3959, %v4785
    %v4787 = vsel %vm1206, %v4786, %v4782
    %v4788 = vlaneseq
    %v4789 = vshrl.u32 %v4788, 7
    %v4790 = vsub.s32 %v1208, %v4789
    %v4791 = vrot.slane %v3960, %v4790
    %v4792 = vsel %vm1213, %v4791, %v4787
    %v4793 = vsel %vm1142, %v4678, %v4659
    %v4794 = vsel %vm1144, %v4697, %v4793
    %v4795 = vsel %vm1146, %v4716, %v4794
    %v4796 = vsel %vm1148, %v4735, %v4795
    %v4797 = vsel %vm1150, %v4754, %v4796
    %v4798 = vsel %vm1152, %v4773, %v4797
    %v4799 = vsel %vm1154, %v4792, %v4798
    %v4833 = vlaneseq
    %v4834 = vshrl.u32 %v4833, 7
    %v4835 = vsub.s32 %v1388, %v4834
    %v4836 = vrot.slane %v4157, %v4835
    %v4837 = vlaneseq
    %v4838 = vshrl.u32 %v4837, 7
    %v4839 = vsub.s32 %v1393, %v4838
    %v4840 = vrot.slane %v4158, %v4839
    %v4841 = vsel %vm1398, %v4840, %v4836
    %v4842 = vlaneseq
    %v4843 = vshrl.u32 %v4842, 7
    %v4844 = vsub.s32 %v1400, %v4843
    %v4845 = vrot.slane %v4159, %v4844
    %v4846 = vsel %vm1405, %v4845, %v4841
    %v4847 = vlaneseq
    %v4848 = vshrl.u32 %v4847, 7
    %v4849 = vsub.s32 %v1407, %v4848
    %v4850 = vrot.slane %v4160, %v4849
    %v4851 = vsel %vm1412, %v4850, %v4846
    %v4852 = vlaneseq
    %v4853 = vshrl.u32 %v4852, 7
    %v4854 = vsub.s32 %v1388, %v4853
    %v4855 = vrot.slane %v4161, %v4854
    %v4856 = vlaneseq
    %v4857 = vshrl.u32 %v4856, 7
    %v4858 = vsub.s32 %v1393, %v4857
    %v4859 = vrot.slane %v4162, %v4858
    %v4860 = vsel %vm1398, %v4859, %v4855
    %v4861 = vlaneseq
    %v4862 = vshrl.u32 %v4861, 7
    %v4863 = vsub.s32 %v1400, %v4862
    %v4864 = vrot.slane %v4163, %v4863
    %v4865 = vsel %vm1405, %v4864, %v4860
    %v4866 = vlaneseq
    %v4867 = vshrl.u32 %v4866, 7
    %v4868 = vsub.s32 %v1407, %v4867
    %v4869 = vrot.slane %v4164, %v4868
    %v4870 = vsel %vm1412, %v4869, %v4865
    %v4871 = vlaneseq
    %v4872 = vshrl.u32 %v4871, 7
    %v4873 = vsub.s32 %v1388, %v4872
    %v4874 = vrot.slane %v4165, %v4873
    %v4875 = vlaneseq
    %v4876 = vshrl.u32 %v4875, 7
    %v4877 = vsub.s32 %v1393, %v4876
    %v4878 = vrot.slane %v4166, %v4877
    %v4879 = vsel %vm1398, %v4878, %v4874
    %v4880 = vlaneseq
    %v4881 = vshrl.u32 %v4880, 7
    %v4882 = vsub.s32 %v1400, %v4881
    %v4883 = vrot.slane %v4167, %v4882
    %v4884 = vsel %vm1405, %v4883, %v4879
    %v4885 = vlaneseq
    %v4886 = vshrl.u32 %v4885, 7
    %v4887 = vsub.s32 %v1407, %v4886
    %v4888 = vrot.slane %v4168, %v4887
    %v4889 = vsel %vm1412, %v4888, %v4884
    %v4890 = vlaneseq
    %v4891 = vshrl.u32 %v4890, 7
    %v4892 = vsub.s32 %v1388, %v4891
    %v4893 = vrot.slane %v4169, %v4892
    %v4894 = vlaneseq
    %v4895 = vshrl.u32 %v4894, 7
    %v4896 = vsub.s32 %v1393, %v4895
    %v4897 = vrot.slane %v4170, %v4896
    %v4898 = vsel %vm1398, %v4897, %v4893
    %v4899 = vlaneseq
    %v4900 = vshrl.u32 %v4899, 7
    %v4901 = vsub.s32 %v1400, %v4900
    %v4902 = vrot.slane %v4171, %v4901
    %v4903 = vsel %vm1405, %v4902, %v4898
    %v4904 = vlaneseq
    %v4905 = vshrl.u32 %v4904, 7
    %v4906 = vsub.s32 %v1407, %v4905
    %v4907 = vrot.slane %v4172, %v4906
    %v4908 = vsel %vm1412, %v4907, %v4903
    %v4909 = vlaneseq
    %v4910 = vshrl.u32 %v4909, 7
    %v4911 = vsub.s32 %v1388, %v4910
    %v4912 = vrot.slane %v4173, %v4911
    %v4913 = vlaneseq
    %v4914 = vshrl.u32 %v4913, 7
    %v4915 = vsub.s32 %v1393, %v4914
    %v4916 = vrot.slane %v4174, %v4915
    %v4917 = vsel %vm1398, %v4916, %v4912
    %v4918 = vlaneseq
    %v4919 = vshrl.u32 %v4918, 7
    %v4920 = vsub.s32 %v1400, %v4919
    %v4921 = vrot.slane %v4175, %v4920
    %v4922 = vsel %vm1405, %v4921, %v4917
    %v4923 = vlaneseq
    %v4924 = vshrl.u32 %v4923, 7
    %v4925 = vsub.s32 %v1407, %v4924
    %v4926 = vrot.slane %v4176, %v4925
    %v4927 = vsel %vm1412, %v4926, %v4922
    %v4928 = vlaneseq
    %v4929 = vshrl.u32 %v4928, 7
    %v4930 = vsub.s32 %v1388, %v4929
    %v4931 = vrot.slane %v4177, %v4930
    %v4932 = vlaneseq
    %v4933 = vshrl.u32 %v4932, 7
    %v4934 = vsub.s32 %v1393, %v4933
    %v4935 = vrot.slane %v4178, %v4934
    %v4936 = vsel %vm1398, %v4935, %v4931
    %v4937 = vlaneseq
    %v4938 = vshrl.u32 %v4937, 7
    %v4939 = vsub.s32 %v1400, %v4938
    %v4940 = vrot.slane %v4179, %v4939
    %v4941 = vsel %vm1405, %v4940, %v4936
    %v4942 = vlaneseq
    %v4943 = vshrl.u32 %v4942, 7
    %v4944 = vsub.s32 %v1407, %v4943
    %v4945 = vrot.slane %v4180, %v4944
    %v4946 = vsel %vm1412, %v4945, %v4941
    %v4947 = vlaneseq
    %v4948 = vshrl.u32 %v4947, 7
    %v4949 = vsub.s32 %v1388, %v4948
    %v4950 = vrot.slane %v4181, %v4949
    %v4951 = vlaneseq
    %v4952 = vshrl.u32 %v4951, 7
    %v4953 = vsub.s32 %v1393, %v4952
    %v4954 = vrot.slane %v4182, %v4953
    %v4955 = vsel %vm1398, %v4954, %v4950
    %v4956 = vlaneseq
    %v4957 = vshrl.u32 %v4956, 7
    %v4958 = vsub.s32 %v1400, %v4957
    %v4959 = vrot.slane %v4183, %v4958
    %v4960 = vsel %vm1405, %v4959, %v4955
    %v4961 = vlaneseq
    %v4962 = vshrl.u32 %v4961, 7
    %v4963 = vsub.s32 %v1407, %v4962
    %v4964 = vrot.slane %v4184, %v4963
    %v4965 = vsel %vm1412, %v4964, %v4960
    %v4966 = vlaneseq
    %v4967 = vshrl.u32 %v4966, 7
    %v4968 = vsub.s32 %v1388, %v4967
    %v4969 = vrot.slane %v4185, %v4968
    %v4970 = vlaneseq
    %v4971 = vshrl.u32 %v4970, 7
    %v4972 = vsub.s32 %v1393, %v4971
    %v4973 = vrot.slane %v4186, %v4972
    %v4974 = vsel %vm1398, %v4973, %v4969
    %v4975 = vlaneseq
    %v4976 = vshrl.u32 %v4975, 7
    %v4977 = vsub.s32 %v1400, %v4976
    %v4978 = vrot.slane %v4187, %v4977
    %v4979 = vsel %vm1405, %v4978, %v4974
    %v4980 = vlaneseq
    %v4981 = vshrl.u32 %v4980, 7
    %v4982 = vsub.s32 %v1407, %v4981
    %v4983 = vrot.slane %v4188, %v4982
    %v4984 = vsel %vm1412, %v4983, %v4979
    %v4985 = vsel %vm1142, %v4870, %v4851
    %v4986 = vsel %vm1144, %v4889, %v4985
    %v4987 = vsel %vm1146, %v4908, %v4986
    %v4988 = vsel %vm1148, %v4927, %v4987
    %v4989 = vsel %vm1150, %v4946, %v4988
    %v4990 = vsel %vm1152, %v4965, %v4989
    %v4991 = vsel %vm1154, %v4984, %v4990
    %v5025 = vlaneseq
    %v5026 = vshrl.u32 %v5025, 7
    %v5027 = vsub.s32 %v1587, %v5026
    %v5028 = vrot.slane %v4385, %v5027
    %v5029 = vlaneseq
    %v5030 = vshrl.u32 %v5029, 7
    %v5031 = vsub.s32 %v1592, %v5030
    %v5032 = vrot.slane %v4386, %v5031
    %v5033 = vsel %vm1597, %v5032, %v5028
    %v5034 = vlaneseq
    %v5035 = vshrl.u32 %v5034, 7
    %v5036 = vsub.s32 %v1599, %v5035
    %v5037 = vrot.slane %v4387, %v5036
    %v5038 = vsel %vm1604, %v5037, %v5033
    %v5039 = vlaneseq
    %v5040 = vshrl.u32 %v5039, 7
    %v5041 = vsub.s32 %v1606, %v5040
    %v5042 = vrot.slane %v4388, %v5041
    %v5043 = vsel %vm1611, %v5042, %v5038
    %v5044 = vlaneseq
    %v5045 = vshrl.u32 %v5044, 7
    %v5046 = vsub.s32 %v1587, %v5045
    %v5047 = vrot.slane %v4389, %v5046
    %v5048 = vlaneseq
    %v5049 = vshrl.u32 %v5048, 7
    %v5050 = vsub.s32 %v1592, %v5049
    %v5051 = vrot.slane %v4390, %v5050
    %v5052 = vsel %vm1597, %v5051, %v5047
    %v5053 = vlaneseq
    %v5054 = vshrl.u32 %v5053, 7
    %v5055 = vsub.s32 %v1599, %v5054
    %v5056 = vrot.slane %v4391, %v5055
    %v5057 = vsel %vm1604, %v5056, %v5052
    %v5058 = vlaneseq
    %v5059 = vshrl.u32 %v5058, 7
    %v5060 = vsub.s32 %v1606, %v5059
    %v5061 = vrot.slane %v4392, %v5060
    %v5062 = vsel %vm1611, %v5061, %v5057
    %v5063 = vlaneseq
    %v5064 = vshrl.u32 %v5063, 7
    %v5065 = vsub.s32 %v1587, %v5064
    %v5066 = vrot.slane %v4393, %v5065
    %v5067 = vlaneseq
    %v5068 = vshrl.u32 %v5067, 7
    %v5069 = vsub.s32 %v1592, %v5068
    %v5070 = vrot.slane %v4394, %v5069
    %v5071 = vsel %vm1597, %v5070, %v5066
    %v5072 = vlaneseq
    %v5073 = vshrl.u32 %v5072, 7
    %v5074 = vsub.s32 %v1599, %v5073
    %v5075 = vrot.slane %v4395, %v5074
    %v5076 = vsel %vm1604, %v5075, %v5071
    %v5077 = vlaneseq
    %v5078 = vshrl.u32 %v5077, 7
    %v5079 = vsub.s32 %v1606, %v5078
    %v5080 = vrot.slane %v4396, %v5079
    %v5081 = vsel %vm1611, %v5080, %v5076
    %v5082 = vlaneseq
    %v5083 = vshrl.u32 %v5082, 7
    %v5084 = vsub.s32 %v1587, %v5083
    %v5085 = vrot.slane %v4397, %v5084
    %v5086 = vlaneseq
    %v5087 = vshrl.u32 %v5086, 7
    %v5088 = vsub.s32 %v1592, %v5087
    %v5089 = vrot.slane %v4398, %v5088
    %v5090 = vsel %vm1597, %v5089, %v5085
    %v5091 = vlaneseq
    %v5092 = vshrl.u32 %v5091, 7
    %v5093 = vsub.s32 %v1599, %v5092
    %v5094 = vrot.slane %v4399, %v5093
    %v5095 = vsel %vm1604, %v5094, %v5090
    %v5096 = vlaneseq
    %v5097 = vshrl.u32 %v5096, 7
    %v5098 = vsub.s32 %v1606, %v5097
    %v5099 = vrot.slane %v4400, %v5098
    %v5100 = vsel %vm1611, %v5099, %v5095
    %v5101 = vlaneseq
    %v5102 = vshrl.u32 %v5101, 7
    %v5103 = vsub.s32 %v1587, %v5102
    %v5104 = vrot.slane %v4401, %v5103
    %v5105 = vlaneseq
    %v5106 = vshrl.u32 %v5105, 7
    %v5107 = vsub.s32 %v1592, %v5106
    %v5108 = vrot.slane %v4402, %v5107
    %v5109 = vsel %vm1597, %v5108, %v5104
    %v5110 = vlaneseq
    %v5111 = vshrl.u32 %v5110, 7
    %v5112 = vsub.s32 %v1599, %v5111
    %v5113 = vrot.slane %v4403, %v5112
    %v5114 = vsel %vm1604, %v5113, %v5109
    %v5115 = vlaneseq
    %v5116 = vshrl.u32 %v5115, 7
    %v5117 = vsub.s32 %v1606, %v5116
    %v5118 = vrot.slane %v4404, %v5117
    %v5119 = vsel %vm1611, %v5118, %v5114
    %v5120 = vlaneseq
    %v5121 = vshrl.u32 %v5120, 7
    %v5122 = vsub.s32 %v1587, %v5121
    %v5123 = vrot.slane %v4405, %v5122
    %v5124 = vlaneseq
    %v5125 = vshrl.u32 %v5124, 7
    %v5126 = vsub.s32 %v1592, %v5125
    %v5127 = vrot.slane %v4406, %v5126
    %v5128 = vsel %vm1597, %v5127, %v5123
    %v5129 = vlaneseq
    %v5130 = vshrl.u32 %v5129, 7
    %v5131 = vsub.s32 %v1599, %v5130
    %v5132 = vrot.slane %v4407, %v5131
    %v5133 = vsel %vm1604, %v5132, %v5128
    %v5134 = vlaneseq
    %v5135 = vshrl.u32 %v5134, 7
    %v5136 = vsub.s32 %v1606, %v5135
    %v5137 = vrot.slane %v4408, %v5136
    %v5138 = vsel %vm1611, %v5137, %v5133
    %v5139 = vlaneseq
    %v5140 = vshrl.u32 %v5139, 7
    %v5141 = vsub.s32 %v1587, %v5140
    %v5142 = vrot.slane %v4409, %v5141
    %v5143 = vlaneseq
    %v5144 = vshrl.u32 %v5143, 7
    %v5145 = vsub.s32 %v1592, %v5144
    %v5146 = vrot.slane %v4410, %v5145
    %v5147 = vsel %vm1597, %v5146, %v5142
    %v5148 = vlaneseq
    %v5149 = vshrl.u32 %v5148, 7
    %v5150 = vsub.s32 %v1599, %v5149
    %v5151 = vrot.slane %v4411, %v5150
    %v5152 = vsel %vm1604, %v5151, %v5147
    %v5153 = vlaneseq
    %v5154 = vshrl.u32 %v5153, 7
    %v5155 = vsub.s32 %v1606, %v5154
    %v5156 = vrot.slane %v4412, %v5155
    %v5157 = vsel %vm1611, %v5156, %v5152
    %v5158 = vlaneseq
    %v5159 = vshrl.u32 %v5158, 7
    %v5160 = vsub.s32 %v1587, %v5159
    %v5161 = vrot.slane %v4413, %v5160
    %v5162 = vlaneseq
    %v5163 = vshrl.u32 %v5162, 7
    %v5164 = vsub.s32 %v1592, %v5163
    %v5165 = vrot.slane %v4414, %v5164
    %v5166 = vsel %vm1597, %v5165, %v5161
    %v5167 = vlaneseq
    %v5168 = vshrl.u32 %v5167, 7
    %v5169 = vsub.s32 %v1599, %v5168
    %v5170 = vrot.slane %v4415, %v5169
    %v5171 = vsel %vm1604, %v5170, %v5166
    %v5172 = vlaneseq
    %v5173 = vshrl.u32 %v5172, 7
    %v5174 = vsub.s32 %v1606, %v5173
    %v5175 = vrot.slane %v4416, %v5174
    %v5176 = vsel %vm1611, %v5175, %v5171
    %v5177 = vsel %vm1142, %v5062, %v5043
    %v5178 = vsel %vm1144, %v5081, %v5177
    %v5179 = vsel %vm1146, %v5100, %v5178
    %v5180 = vsel %vm1148, %v5119, %v5179
    %v5181 = vsel %vm1150, %v5138, %v5180
    %v5182 = vsel %vm1152, %v5157, %v5181
    %v5183 = vsel %vm1154, %v5176, %v5182
    %v5185 = vsel %vm1754, %v4607, %v4799
    %v5186 = vsel %vm1756, %v5185, %v4991
    %v5187 = vsel %vm1758, %v5186, %v5183
    %5188 = vst [vmem:[#allocation10] sm:$0xff] %v5187
    // Predicated region
    $region34: #{tpu_custom_call.1} parent=1 // pred_check
      _
    $region35: #{tpu_custom_call.1} parent=1 // pred_check_branch
      %5190 = sbr.rel (0) target = $region37
    $region36: #{tpu_custom_call.1} parent=1 // pred_region
      %s5192 = ssub.s32 128, 128
      %5193 = vsyncadd [#allocation4], %s5192
      %s5195 = sshll.u32 [#allocation10], 4
      %s5196 = int_to_ptr.vmem [resolvable:$true] %s5195
      %5198 = dma.vmem_to_hbm [thread:$0]  %s5196, 128, %s4, [#allocation4]
    $region37: #{tpu_custom_call.1} parent=1 // pred_fallthru
      _
    // Predicated region
    $region38: #{tpu_custom_call.1} parent=1 // pred_check
      _
    $region39: #{tpu_custom_call.1} parent=1 // pred_check_branch
      %5200 = sbr.rel (0) target = $region41
    $region40: #{tpu_custom_call.1} parent=1 // pred_region
      %5201 = dma.done [#allocation4], 128
    $region41: #{tpu_custom_call.1} parent=1 // pred_fallthru
      _
    %5202 = vsyncpa [#allocation3], 1
    %5203 = vsyncpa [#allocation6], 1
    %5204 = vsyncpa [#allocation9], 1
    %5205 = vsyncpa [#allocation4], 1

</llo_original>
